<compile_context>
chip_gen: v7x
topology: tpu7x:2x2x1
jax: 0.10.0
libtpu: 0.0.40
codegen_flags: <defaults>
</compile_context>

<pallas_src>
import math
from functools import partial

import jax
import jax.numpy as jnp
from jax.experimental import pallas as pl
from jax.experimental.pallas import tpu as pltpu


# Weight matrices that feed the MXU (stored / fed as bf16).
_MATMUL_WEIGHTS = frozenset({"wq", "wk", "wv", "wc", "w1", "w2"})


def _layer_norm(v, gamma, beta, eps=1e-5):
    mu = jnp.mean(v, axis=-1, keepdims=True)
    var = jnp.mean((v - mu) ** 2, axis=-1, keepdims=True)  # biased, like nn.LayerNorm
    return (v - mu) * jax.lax.rsqrt(var + eps) * gamma + beta


def transformer_encoder_kernel(
    x_ref,
    ln1_g_ref, ln1_b_ref,
    wqkv_ref, bqkv_ref,
    wc_ref, bc_ref,
    ln2_g_ref, ln2_b_ref,
    w1_ref, b1_ref, w2_ref, b2_ref,
    out_ref,
    attn_ref,                       # VMEM scratch (Bt, T, D) f32: packed head outputs
    *, n_heads: int, query_size: int,
):
    Bt, T, D = x_ref.shape
    x = x_ref[...].astype(jnp.float32).reshape(Bt * T, D)      # (Bt*T, D)

    # --- LayerNorm 1 (f32 elementwise) ---
    n1 = _layer_norm(x, ln1_g_ref[...], ln1_b_ref[...])
    n1_lp = n1.astype(jnp.bfloat16)                             # bf16 matmul operand

    # --- Fused QKV projection (heads packed along output columns == hstack) ---
    qkv = (jnp.dot(n1_lp, wqkv_ref[...], preferred_element_type=jnp.float32)
           + bqkv_ref[...])                                     # (Bt*T, 3D) f32
    q = qkv[:, 0 * D:1 * D].reshape(Bt, T, D)
    k = qkv[:, 1 * D:2 * D].reshape(Bt, T, D)
    v = qkv[:, 2 * D:3 * D].reshape(Bt, T, D)

    inv_scale = 1.0 / math.sqrt(query_size)
    for h in range(n_heads):                  # static unroll; batched over Bt sequences
        lo = h * query_size
        qh = q[:, :, lo:lo + query_size].astype(jnp.bfloat16)   # (Bt, T, qs)
        kh = k[:, :, lo:lo + query_size].astype(jnp.bfloat16)
        vh = v[:, :, lo:lo + query_size].astype(jnp.bfloat16)
        s = jnp.einsum("btd,bsd->bts", qh, kh,
                       preferred_element_type=jnp.float32) * inv_scale
        s = s - jnp.max(s, axis=-1, keepdims=True)
        e = jnp.exp(s)
        attn = e * pl.reciprocal(jnp.sum(e, axis=-1, keepdims=True), approx=True)
        ctx = jnp.einsum("bts,bsd->btd", attn.astype(jnp.bfloat16), vh,
                         preferred_element_type=jnp.float32)    # (Bt, T, qs)
        # Write this head's output into its column slice (no concat chain).
        attn_ref[:, :, lo:lo + query_size] = ctx

    concat = attn_ref[...].astype(jnp.bfloat16).reshape(Bt * T, D)   # hstack layout
    mha = jnp.dot(concat, wc_ref[...], preferred_element_type=jnp.float32) + bc_ref[...]

    r1 = x + mha                                                # residual 1 (f32)

    # --- LayerNorm 2 + MLP (Linear -> GELU(exact) -> Linear) ---
    n2 = _layer_norm(r1, ln2_g_ref[...], ln2_b_ref[...])
    h1 = jnp.dot(n2.astype(jnp.bfloat16), w1_ref[...],
                 preferred_element_type=jnp.float32) + b1_ref[...]
    g = 0.5 * h1 * (1.0 + jax.lax.erf(h1 * (1.0 / math.sqrt(2.0))))   # nn.GELU() exact
    h2 = jnp.dot(g.astype(jnp.bfloat16), w2_ref[...],
                 preferred_element_type=jnp.float32) + b2_ref[...]

    out_ref[...] = (r1 + h2).reshape(Bt, T, D).astype(out_ref.dtype)  # residual 2


def transformer_encoder(x, params, *, n_heads, block_b=2):
    B, T, D = x.shape
    query_size = D // n_heads

    # Batch tile: amortize grid-step overhead / fill the MXU M dimension.
    bb = max(1, min(int(block_b), B))
    while B % bb:
        bb -= 1

    f32 = jnp.float32
    # Fused QKV: heads packed column-wise per projection, then Q|K|V side by side.
    wqkv = jnp.concatenate(
        [params["wq"], params["wk"], params["wv"]], axis=1).astype(jnp.bfloat16)
    bqkv = jnp.concatenate(
        [params["bq"], params["bk"], params["bv"]], axis=1).astype(f32)

    weights = [
        params["ln1_g"].astype(f32), params["ln1_b"].astype(f32),
        wqkv, bqkv,
        params["wc"].astype(jnp.bfloat16), params["bc"].astype(f32),
        params["ln2_g"].astype(f32), params["ln2_b"].astype(f32),
        params["w1"].astype(jnp.bfloat16), params["b1"].astype(f32),
        params["w2"].astype(jnp.bfloat16), params["b2"].astype(f32),
    ]

    # Advisory cost estimate for the XLA scheduler.
    Hd = params["w1"].shape[1]
    weight_bytes = sum(int(w.size) * w.dtype.itemsize for w in weights)
    flops = 8 * B * T * D * D + 4 * B * T * T * D + 4 * B * T * D * Hd
    transcendentals = B * n_heads * T * T + B * T * Hd + 2 * B * T
    bytes_accessed = 2 * B * T * D * 4 + weight_bytes
    cost = pl.CostEstimate(flops=int(flops), transcendentals=int(transcendentals),
                           bytes_accessed=int(bytes_accessed))

    def make_call(single_buffer_weights: bool):
        def wspec(a):
            # Grid-invariant weights: constant index map (fetched once); request
            # single buffering so they are not needlessly double-buffered.
            if single_buffer_weights:
                return pl.BlockSpec(a.shape, lambda b: (0, 0),
                                    pipeline_mode=pl.Buffered(1))
            return pl.BlockSpec(a.shape, lambda b: (0, 0))

        in_specs = ([pl.BlockSpec((bb, T, D), lambda b: (b, 0, 0))]
                    + [wspec(w) for w in weights])

        return pl.pallas_call(
            partial(transformer_encoder_kernel, n_heads=n_heads, query_size=query_size),
            out_shape=jax.ShapeDtypeStruct((B, T, D), x.dtype),
            grid=(B // bb,),
            in_specs=in_specs,
            out_specs=pl.BlockSpec((bb, T, D), lambda b: (b, 0, 0)),
            scratch_shapes=[pltpu.VMEM((bb, T, D), jnp.float32)],
            compiler_params=pltpu.CompilerParams(
                # Batch blocks are independent -> shard across TensorCores (v7x).
                dimension_semantics=("parallel",),
                # Explicit scoped-VMEM budget (> defaults, < v7x physical 64 MiB).
                vmem_limit_bytes=48 * 1024 * 1024,
            ),
            cost_estimate=cost,
        )

    def run(single_buffer_weights: bool):
        fn = make_call(single_buffer_weights)
        return jax.block_until_ready(fn(x, *weights))

    try:
        return run(True)
    except Exception:
        # Fallback: some Pallas versions do not plumb BlockSpec.pipeline_mode
        # through top-level pallas_call; default (double-buffered) specs.
        return run(False)


def init_params(key, hidden_d, n_heads, mlp_ratio=4):
    """Deterministic synthetic init mirroring the PyTorch module's shapes."""
    D = hidden_d
    H = mlp_ratio * D

    def linear(k, fan_in, fan_out):
        kw, kb = jax.random.split(k)
        bound = 1.0 / math.sqrt(fan_in)
        w = jax.random.uniform(kw, (fan_in, fan_out), jnp.float32, -bound, bound)
        b = jax.random.uniform(kb, (1, fan_out), jnp.float32, -bound, bound)
        return w, b

    ks = jax.random.split(key, 6)
    wq, bq = linear(ks[0], D, D)   # H per-head (D -> D/H) layers packed column-wise
    wk, bk = linear(ks[1], D, D)
    wv, bv = linear(ks[2], D, D)
    wc, bc = linear(ks[3], D, D)   # c_proj
    w1, b1 = linear(ks[4], D, H)   # mlp[0]
    w2, b2 = linear(ks[5], H, D)   # mlp[2]

    return {
        "ln1_g": jnp.ones((1, D), jnp.float32), "ln1_b": jnp.zeros((1, D), jnp.float32),
        "wq": wq, "bq": bq, "wk": wk, "bk": bk, "wv": wv, "bv": bv,
        "wc": wc, "bc": bc,
        "ln2_g": jnp.ones((1, D), jnp.float32), "ln2_b": jnp.zeros((1, D), jnp.float32),
        "w1": w1, "b1": b1, "w2": w2, "b2": b2,
    }


def reference(x, p, n_heads):
    """Pure-JAX reference mirroring the PyTorch forward (f32)."""
    B, T, D = x.shape
    qs = D // n_heads

    def ln(v, g, b, eps=1e-5):
        mu = jnp.mean(v, axis=-1, keepdims=True)
        var = jnp.mean((v - mu) ** 2, axis=-1, keepdims=True)
        return (v - mu) / jnp.sqrt(var + eps) * g + b

    n1 = ln(x, p["ln1_g"], p["ln1_b"])
    q = n1 @ p["wq"] + p["bq"]
    k = n1 @ p["wk"] + p["bk"]
    v = n1 @ p["wv"] + p["bv"]
    qh = q.reshape(B, T, n_heads, qs).transpose(0, 2, 1, 3)
    kh = k.reshape(B, T, n_heads, qs).transpose(0, 2, 1, 3)
    vh = v.reshape(B, T, n_heads, qs).transpose(0, 2, 1, 3)
    scores = jnp.einsum("bhqd,bhkd->bhqk", qh, kh) / math.sqrt(qs)
    attn = jax.nn.softmax(scores, axis=-1)
    o = jnp.einsum("bhqk,bhkd->bhqd", attn, vh).transpose(0, 2, 1, 3).reshape(B, T, D)
    mha = o @ p["wc"] + p["bc"]
    r1 = x + mha
    n2 = ln(r1, p["ln2_g"], p["ln2_b"])
    h1 = n2 @ p["w1"] + p["b1"]
    g = 0.5 * h1 * (1.0 + jax.lax.erf(h1 / math.sqrt(2.0)))
    h2 = g @ p["w2"] + p["b2"]
    return r1 + h2


if __name__ == "__main__":
    B, T, D = 4, 8, 32          # batch, num_tokens, hidden_d
    n_heads = 4                 # hidden_d divisible by n_heads
    mlp_ratio = 4

    key = jax.random.PRNGKey(0)
    kx, kp = jax.random.split(key)
    x = jax.random.normal(kx, (B, T, D), jnp.float32)
    params = init_params(kp, D, n_heads, mlp_ratio)

    out = transformer_encoder(x, params, n_heads=n_heads, block_b=2)
    out = jax.block_until_ready(out)

    # Reference with the exact bf16-rounded weights the kernel consumes
    # (isolates activation rounding / approx-reciprocal error) ...
    params_lp = {
        k: (v.astype(jnp.bfloat16).astype(jnp.float32) if k in _MATMUL_WEIGHTS else v)
        for k, v in params.items()
    }
    ref_lp = reference(x, params_lp, n_heads)
    # ... and the full-f32 reference mirroring the PyTorch module.
    ref_f32 = reference(x, params, n_heads)

    assert out.shape == (B, T, D)
    assert bool(jnp.all(jnp.isfinite(out)))
    assert bool(jnp.allclose(out, ref_lp, atol=5e-2, rtol=5e-2)), \
        f"max abs err vs bf16-weight ref: {float(jnp.max(jnp.abs(out - ref_lp)))}"
    assert bool(jnp.allclose(out, ref_f32, atol=1.5e-1, rtol=1.5e-1)), \
        f"max abs err vs f32 ref: {float(jnp.max(jnp.abs(out - ref_f32)))}"

    print("KERNEL_OK")
</pallas_src>

<mosaic_0001>
module attributes {stable_mosaic.version = 11 : i64} {
  func.func @transformer_encoder_kernel(%arg0: i32, %arg1: memref<2x8x32xf32, #tpu.memory_space<vmem>>, %arg2: memref<1x32xf32, #tpu.memory_space<vmem>>, %arg3: memref<1x32xf32, #tpu.memory_space<vmem>>, %arg4: memref<32x96xbf16, #tpu.memory_space<vmem>>, %arg5: memref<1x96xf32, #tpu.memory_space<vmem>>, %arg6: memref<32x32xbf16, #tpu.memory_space<vmem>>, %arg7: memref<1x32xf32, #tpu.memory_space<vmem>>, %arg8: memref<1x32xf32, #tpu.memory_space<vmem>>, %arg9: memref<1x32xf32, #tpu.memory_space<vmem>>, %arg10: memref<32x128xbf16, #tpu.memory_space<vmem>>, %arg11: memref<1x128xf32, #tpu.memory_space<vmem>>, %arg12: memref<128x32xbf16, #tpu.memory_space<vmem>>, %arg13: memref<1x32xf32, #tpu.memory_space<vmem>>, %arg14: memref<2x8x32xf32, #tpu.memory_space<vmem>>, %arg15: memref<2x8x32xf32, #tpu.memory_space<vmem>>) attributes {dimension_semantics = [#tpu.dimension_semantics<parallel>], iteration_bounds = array<i64: 2>, scalar_prefetch = 0 : i64, scratch_operands = 1 : i64, tpu.core_type = #tpu.core_type<tc>, window_params = [{transform_indices = @transform_0, window_bounds = array<i64: 2, 8, 32>}, {pipeline_mode = #tpu.pipeline_mode<synchronous>, transform_indices = @transform_1, window_bounds = array<i64: 1, 32>}, {pipeline_mode = #tpu.pipeline_mode<synchronous>, transform_indices = @transform_2, window_bounds = array<i64: 1, 32>}, {pipeline_mode = #tpu.pipeline_mode<synchronous>, transform_indices = @transform_3, window_bounds = array<i64: 32, 96>}, {pipeline_mode = #tpu.pipeline_mode<synchronous>, transform_indices = @transform_4, window_bounds = array<i64: 1, 96>}, {pipeline_mode = #tpu.pipeline_mode<synchronous>, transform_indices = @transform_5, window_bounds = array<i64: 32, 32>}, {pipeline_mode = #tpu.pipeline_mode<synchronous>, transform_indices = @transform_6, window_bounds = array<i64: 1, 32>}, {pipeline_mode = #tpu.pipeline_mode<synchronous>, transform_indices = @transform_7, window_bounds = array<i64: 1, 32>}, {pipeline_mode = #tpu.pipeline_mode<synchronous>, transform_indices = @transform_8, window_bounds = array<i64: 1, 32>}, {pipeline_mode = #tpu.pipeline_mode<synchronous>, transform_indices = @transform_9, window_bounds = array<i64: 32, 128>}, {pipeline_mode = #tpu.pipeline_mode<synchronous>, transform_indices = @transform_10, window_bounds = array<i64: 1, 128>}, {pipeline_mode = #tpu.pipeline_mode<synchronous>, transform_indices = @transform_11, window_bounds = array<i64: 128, 32>}, {pipeline_mode = #tpu.pipeline_mode<synchronous>, transform_indices = @transform_12, window_bounds = array<i64: 1, 32>}, {transform_indices = @transform_13, window_bounds = array<i64: 2, 8, 32>}]} {
    %c0 = arith.constant 0 : index
    %c0_0 = arith.constant 0 : index
    %c0_1 = arith.constant 0 : index
    %0 = vector.load %arg1[%c0, %c0_0, %c0_1] : memref<2x8x32xf32, #tpu.memory_space<vmem>>, vector<2x8x32xf32>
    %1 = vector.shape_cast %0 : vector<2x8x32xf32> to vector<16x32xf32>
    %c0_2 = arith.constant 0 : index
    %c0_3 = arith.constant 0 : index
    %2 = vector.load %arg2[%c0_2, %c0_3] : memref<1x32xf32, #tpu.memory_space<vmem>>, vector<1x32xf32>
    %c0_4 = arith.constant 0 : index
    %c0_5 = arith.constant 0 : index
    %3 = vector.load %arg3[%c0_4, %c0_5] : memref<1x32xf32, #tpu.memory_space<vmem>>, vector<1x32xf32>
    %cst = arith.constant dense<0.000000e+00> : vector<16xf32>
    %4 = vector.multi_reduction <add>, %1, %cst [1] : vector<16x32xf32> to vector<16xf32>
    %5 = vector.shape_cast %4 : vector<16xf32> to vector<16x1xf32>
    %cst_6 = arith.constant 3.200000e+01 : f32
    %6 = vector.broadcast %cst_6 : f32 to vector<16x1xf32>
    %7 = arith.divf %5, %6 : vector<16x1xf32>
    %8 = vector.broadcast %7 : vector<16x1xf32> to vector<16x32xf32>
    %9 = arith.subf %1, %8 : vector<16x32xf32>
    %10 = arith.mulf %9, %9 : vector<16x32xf32>
    %cst_7 = arith.constant dense<0.000000e+00> : vector<16xf32>
    %11 = vector.multi_reduction <add>, %10, %cst_7 [1] : vector<16x32xf32> to vector<16xf32>
    %12 = vector.shape_cast %11 : vector<16xf32> to vector<16x1xf32>
    %cst_8 = arith.constant 3.200000e+01 : f32
    %13 = vector.broadcast %cst_8 : f32 to vector<16x1xf32>
    %14 = arith.divf %12, %13 : vector<16x1xf32>
    %15 = vector.broadcast %7 : vector<16x1xf32> to vector<16x32xf32>
    %16 = arith.subf %1, %15 : vector<16x32xf32>
    %cst_9 = arith.constant 9.99999974E-6 : f32
    %17 = vector.broadcast %cst_9 : f32 to vector<16x1xf32>
    %18 = arith.addf %14, %17 : vector<16x1xf32>
    %19 = math.rsqrt %18 : vector<16x1xf32>
    %20 = vector.broadcast %19 : vector<16x1xf32> to vector<16x32xf32>
    %21 = arith.mulf %16, %20 : vector<16x32xf32>
    %22 = vector.broadcast %2 : vector<1x32xf32> to vector<16x32xf32>
    %23 = arith.mulf %21, %22 : vector<16x32xf32>
    %24 = vector.broadcast %3 : vector<1x32xf32> to vector<16x32xf32>
    %25 = arith.addf %23, %24 : vector<16x32xf32>
    %26 = arith.truncf %25 : vector<16x32xf32> to vector<16x32xbf16>
    %c0_10 = arith.constant 0 : index
    %c0_11 = arith.constant 0 : index
    %27 = vector.load %arg4[%c0_10, %c0_11] : memref<32x96xbf16, #tpu.memory_space<vmem>>, vector<32x96xbf16>
    %cst_12 = arith.constant dense<0.000000e+00> : vector<16x96xf32>
    %28 = tpu.matmul %26, %27, %cst_12 {dimension_numbers = #tpu.dot_dimension_numbers<[1], [0], [0], [1], [0, 0, 1, 1], [], []>} : vector<16x32xbf16>, vector<32x96xbf16>, vector<16x96xf32> -> vector<16x96xf32>
    %c0_13 = arith.constant 0 : index
    %c0_14 = arith.constant 0 : index
    %29 = vector.load %arg5[%c0_13, %c0_14] : memref<1x96xf32, #tpu.memory_space<vmem>>, vector<1x96xf32>
    %30 = vector.broadcast %29 : vector<1x96xf32> to vector<16x96xf32>
    %31 = arith.addf %28, %30 : vector<16x96xf32>
    %32 = vector.extract_strided_slice %31 {offsets = [0, 0], sizes = [16, 32], strides = [1, 1]} : vector<16x96xf32> to vector<16x32xf32>
    %33 = vector.shape_cast %32 : vector<16x32xf32> to vector<2x8x32xf32>
    %34 = vector.extract_strided_slice %31 {offsets = [0, 32], sizes = [16, 32], strides = [1, 1]} : vector<16x96xf32> to vector<16x32xf32>
    %35 = vector.shape_cast %34 : vector<16x32xf32> to vector<2x8x32xf32>
    %36 = vector.extract_strided_slice %31 {offsets = [0, 64], sizes = [16, 32], strides = [1, 1]} : vector<16x96xf32> to vector<16x32xf32>
    %37 = vector.shape_cast %36 : vector<16x32xf32> to vector<2x8x32xf32>
    %38 = vector.extract_strided_slice %33 {offsets = [0, 0, 0], sizes = [2, 8, 8], strides = [1, 1, 1]} : vector<2x8x32xf32> to vector<2x8x8xf32>
    %39 = arith.truncf %38 : vector<2x8x8xf32> to vector<2x8x8xbf16>
    %40 = vector.extract_strided_slice %35 {offsets = [0, 0, 0], sizes = [2, 8, 8], strides = [1, 1, 1]} : vector<2x8x32xf32> to vector<2x8x8xf32>
    %41 = arith.truncf %40 : vector<2x8x8xf32> to vector<2x8x8xbf16>
    %42 = vector.extract_strided_slice %37 {offsets = [0, 0, 0], sizes = [2, 8, 8], strides = [1, 1, 1]} : vector<2x8x32xf32> to vector<2x8x8xf32>
    %43 = arith.truncf %42 : vector<2x8x8xf32> to vector<2x8x8xbf16>
    "tpu.trace_start"() <{level = 10 : i32, message = "btd,bsd->bts"}> : () -> ()
    %cst_15 = arith.constant dense<0.000000e+00> : vector<2x8x8xf32>
    %44 = tpu.matmul %39, %41, %cst_15 {dimension_numbers = #tpu.dot_dimension_numbers<[2], [2], [1], [1], [0, 0, 0, 1, 1, 1], [0], [0]>} : vector<2x8x8xbf16>, vector<2x8x8xbf16>, vector<2x8x8xf32> -> vector<2x8x8xf32>
    "tpu.trace_stop"() : () -> ()
    %cst_16 = arith.constant 0.353553385 : f32
    %45 = vector.broadcast %cst_16 : f32 to vector<2x8x8xf32>
    %46 = arith.mulf %44, %45 : vector<2x8x8xf32>
    %cst_17 = arith.constant dense<0xFF800000> : vector<2x8xf32>
    %47 = vector.multi_reduction <maximumf>, %46, %cst_17 [2] : vector<2x8x8xf32> to vector<2x8xf32>
    %48 = vector.shape_cast %47 : vector<2x8xf32> to vector<2x8x1xf32>
    %49 = vector.broadcast %48 : vector<2x8x1xf32> to vector<2x8x8xf32>
    %50 = arith.subf %46, %49 : vector<2x8x8xf32>
    %51 = math.exp %50 : vector<2x8x8xf32>
    %cst_18 = arith.constant dense<0.000000e+00> : vector<2x8xf32>
    %52 = vector.multi_reduction <add>, %51, %cst_18 [2] : vector<2x8x8xf32> to vector<2x8xf32>
    %53 = vector.shape_cast %52 : vector<2x8xf32> to vector<2x8x1xf32>
    %54 = tpu.reciprocal %53 {approx = true} : vector<2x8x1xf32> -> vector<2x8x1xf32>
    %55 = vector.broadcast %54 : vector<2x8x1xf32> to vector<2x8x8xf32>
    %56 = arith.mulf %51, %55 : vector<2x8x8xf32>
    %57 = arith.truncf %56 : vector<2x8x8xf32> to vector<2x8x8xbf16>
    "tpu.trace_start"() <{level = 10 : i32, message = "bts,bsd->btd"}> : () -> ()
    %cst_19 = arith.constant dense<0.000000e+00> : vector<2x8x8xf32>
    %58 = tpu.matmul %57, %43, %cst_19 {dimension_numbers = #tpu.dot_dimension_numbers<[2], [1], [1], [2], [0, 0, 0, 1, 1, 2], [0], [0]>} : vector<2x8x8xbf16>, vector<2x8x8xbf16>, vector<2x8x8xf32> -> vector<2x8x8xf32>
    "tpu.trace_stop"() : () -> ()
    %c0_20 = arith.constant 0 : index
    %c0_21 = arith.constant 0 : index
    %c0_22 = arith.constant 0 : index
    %59 = vector.load %arg15[%c0_20, %c0_21, %c0_22] : memref<2x8x32xf32, #tpu.memory_space<vmem>>, vector<2x8x8xf32>
    tpu.vector_store %arg15[%c0_20, %c0_21, %c0_22], %58 {strides = array<i32>} : memref<2x8x32xf32, #tpu.memory_space<vmem>>, vector<2x8x8xf32>,
    %60 = vector.extract_strided_slice %33 {offsets = [0, 0, 8], sizes = [2, 8, 8], strides = [1, 1, 1]} : vector<2x8x32xf32> to vector<2x8x8xf32>
    %61 = arith.truncf %60 : vector<2x8x8xf32> to vector<2x8x8xbf16>
    %62 = vector.extract_strided_slice %35 {offsets = [0, 0, 8], sizes = [2, 8, 8], strides = [1, 1, 1]} : vector<2x8x32xf32> to vector<2x8x8xf32>
    %63 = arith.truncf %62 : vector<2x8x8xf32> to vector<2x8x8xbf16>
    %64 = vector.extract_strided_slice %37 {offsets = [0, 0, 8], sizes = [2, 8, 8], strides = [1, 1, 1]} : vector<2x8x32xf32> to vector<2x8x8xf32>
    %65 = arith.truncf %64 : vector<2x8x8xf32> to vector<2x8x8xbf16>
    "tpu.trace_start"() <{level = 10 : i32, message = "btd,bsd->bts"}> : () -> ()
    %cst_23 = arith.constant dense<0.000000e+00> : vector<2x8x8xf32>
    %66 = tpu.matmul %61, %63, %cst_23 {dimension_numbers = #tpu.dot_dimension_numbers<[2], [2], [1], [1], [0, 0, 0, 1, 1, 1], [0], [0]>} : vector<2x8x8xbf16>, vector<2x8x8xbf16>, vector<2x8x8xf32> -> vector<2x8x8xf32>
    "tpu.trace_stop"() : () -> ()
    %cst_24 = arith.constant 0.353553385 : f32
    %67 = vector.broadcast %cst_24 : f32 to vector<2x8x8xf32>
    %68 = arith.mulf %66, %67 : vector<2x8x8xf32>
    %cst_25 = arith.constant dense<0xFF800000> : vector<2x8xf32>
    %69 = vector.multi_reduction <maximumf>, %68, %cst_25 [2] : vector<2x8x8xf32> to vector<2x8xf32>
    %70 = vector.shape_cast %69 : vector<2x8xf32> to vector<2x8x1xf32>
    %71 = vector.broadcast %70 : vector<2x8x1xf32> to vector<2x8x8xf32>
    %72 = arith.subf %68, %71 : vector<2x8x8xf32>
    %73 = math.exp %72 : vector<2x8x8xf32>
    %cst_26 = arith.constant dense<0.000000e+00> : vector<2x8xf32>
    %74 = vector.multi_reduction <add>, %73, %cst_26 [2] : vector<2x8x8xf32> to vector<2x8xf32>
    %75 = vector.shape_cast %74 : vector<2x8xf32> to vector<2x8x1xf32>
    %76 = tpu.reciprocal %75 {approx = true} : vector<2x8x1xf32> -> vector<2x8x1xf32>
    %77 = vector.broadcast %76 : vector<2x8x1xf32> to vector<2x8x8xf32>
    %78 = arith.mulf %73, %77 : vector<2x8x8xf32>
    %79 = arith.truncf %78 : vector<2x8x8xf32> to vector<2x8x8xbf16>
    "tpu.trace_start"() <{level = 10 : i32, message = "bts,bsd->btd"}> : () -> ()
    %cst_27 = arith.constant dense<0.000000e+00> : vector<2x8x8xf32>
    %80 = tpu.matmul %79, %65, %cst_27 {dimension_numbers = #tpu.dot_dimension_numbers<[2], [1], [1], [2], [0, 0, 0, 1, 1, 2], [0], [0]>} : vector<2x8x8xbf16>, vector<2x8x8xbf16>, vector<2x8x8xf32> -> vector<2x8x8xf32>
    "tpu.trace_stop"() : () -> ()
    %c0_28 = arith.constant 0 : index
    %c0_29 = arith.constant 0 : index
    %c8 = arith.constant 8 : index
    %81 = vector.load %arg15[%c0_28, %c0_29, %c8] : memref<2x8x32xf32, #tpu.memory_space<vmem>>, vector<2x8x8xf32>
    tpu.vector_store %arg15[%c0_28, %c0_29, %c8], %80 {strides = array<i32>} : memref<2x8x32xf32, #tpu.memory_space<vmem>>, vector<2x8x8xf32>,
    %82 = vector.extract_strided_slice %33 {offsets = [0, 0, 16], sizes = [2, 8, 8], strides = [1, 1, 1]} : vector<2x8x32xf32> to vector<2x8x8xf32>
    %83 = arith.truncf %82 : vector<2x8x8xf32> to vector<2x8x8xbf16>
    %84 = vector.extract_strided_slice %35 {offsets = [0, 0, 16], sizes = [2, 8, 8], strides = [1, 1, 1]} : vector<2x8x32xf32> to vector<2x8x8xf32>
    %85 = arith.truncf %84 : vector<2x8x8xf32> to vector<2x8x8xbf16>
    %86 = vector.extract_strided_slice %37 {offsets = [0, 0, 16], sizes = [2, 8, 8], strides = [1, 1, 1]} : vector<2x8x32xf32> to vector<2x8x8xf32>
    %87 = arith.truncf %86 : vector<2x8x8xf32> to vector<2x8x8xbf16>
    "tpu.trace_start"() <{level = 10 : i32, message = "btd,bsd->bts"}> : () -> ()
    %cst_30 = arith.constant dense<0.000000e+00> : vector<2x8x8xf32>
    %88 = tpu.matmul %83, %85, %cst_30 {dimension_numbers = #tpu.dot_dimension_numbers<[2], [2], [1], [1], [0, 0, 0, 1, 1, 1], [0], [0]>} : vector<2x8x8xbf16>, vector<2x8x8xbf16>, vector<2x8x8xf32> -> vector<2x8x8xf32>
    "tpu.trace_stop"() : () -> ()
    %cst_31 = arith.constant 0.353553385 : f32
    %89 = vector.broadcast %cst_31 : f32 to vector<2x8x8xf32>
    %90 = arith.mulf %88, %89 : vector<2x8x8xf32>
    %cst_32 = arith.constant dense<0xFF800000> : vector<2x8xf32>
    %91 = vector.multi_reduction <maximumf>, %90, %cst_32 [2] : vector<2x8x8xf32> to vector<2x8xf32>
    %92 = vector.shape_cast %91 : vector<2x8xf32> to vector<2x8x1xf32>
    %93 = vector.broadcast %92 : vector<2x8x1xf32> to vector<2x8x8xf32>
    %94 = arith.subf %90, %93 : vector<2x8x8xf32>
    %95 = math.exp %94 : vector<2x8x8xf32>
    %cst_33 = arith.constant dense<0.000000e+00> : vector<2x8xf32>
    %96 = vector.multi_reduction <add>, %95, %cst_33 [2] : vector<2x8x8xf32> to vector<2x8xf32>
    %97 = vector.shape_cast %96 : vector<2x8xf32> to vector<2x8x1xf32>
    %98 = tpu.reciprocal %97 {approx = true} : vector<2x8x1xf32> -> vector<2x8x1xf32>
    %99 = vector.broadcast %98 : vector<2x8x1xf32> to vector<2x8x8xf32>
    %100 = arith.mulf %95, %99 : vector<2x8x8xf32>
    %101 = arith.truncf %100 : vector<2x8x8xf32> to vector<2x8x8xbf16>
    "tpu.trace_start"() <{level = 10 : i32, message = "bts,bsd->btd"}> : () -> ()
    %cst_34 = arith.constant dense<0.000000e+00> : vector<2x8x8xf32>
    %102 = tpu.matmul %101, %87, %cst_34 {dimension_numbers = #tpu.dot_dimension_numbers<[2], [1], [1], [2], [0, 0, 0, 1, 1, 2], [0], [0]>} : vector<2x8x8xbf16>, vector<2x8x8xbf16>, vector<2x8x8xf32> -> vector<2x8x8xf32>
    "tpu.trace_stop"() : () -> ()
    %c0_35 = arith.constant 0 : index
    %c0_36 = arith.constant 0 : index
    %c16 = arith.constant 16 : index
    %103 = vector.load %arg15[%c0_35, %c0_36, %c16] : memref<2x8x32xf32, #tpu.memory_space<vmem>>, vector<2x8x8xf32>
    tpu.vector_store %arg15[%c0_35, %c0_36, %c16], %102 {strides = array<i32>} : memref<2x8x32xf32, #tpu.memory_space<vmem>>, vector<2x8x8xf32>,
    %104 = vector.extract_strided_slice %33 {offsets = [0, 0, 24], sizes = [2, 8, 8], strides = [1, 1, 1]} : vector<2x8x32xf32> to vector<2x8x8xf32>
    %105 = arith.truncf %104 : vector<2x8x8xf32> to vector<2x8x8xbf16>
    %106 = vector.extract_strided_slice %35 {offsets = [0, 0, 24], sizes = [2, 8, 8], strides = [1, 1, 1]} : vector<2x8x32xf32> to vector<2x8x8xf32>
    %107 = arith.truncf %106 : vector<2x8x8xf32> to vector<2x8x8xbf16>
    %108 = vector.extract_strided_slice %37 {offsets = [0, 0, 24], sizes = [2, 8, 8], strides = [1, 1, 1]} : vector<2x8x32xf32> to vector<2x8x8xf32>
    %109 = arith.truncf %108 : vector<2x8x8xf32> to vector<2x8x8xbf16>
    "tpu.trace_start"() <{level = 10 : i32, message = "btd,bsd->bts"}> : () -> ()
    %cst_37 = arith.constant dense<0.000000e+00> : vector<2x8x8xf32>
    %110 = tpu.matmul %105, %107, %cst_37 {dimension_numbers = #tpu.dot_dimension_numbers<[2], [2], [1], [1], [0, 0, 0, 1, 1, 1], [0], [0]>} : vector<2x8x8xbf16>, vector<2x8x8xbf16>, vector<2x8x8xf32> -> vector<2x8x8xf32>
    "tpu.trace_stop"() : () -> ()
    %cst_38 = arith.constant 0.353553385 : f32
    %111 = vector.broadcast %cst_38 : f32 to vector<2x8x8xf32>
    %112 = arith.mulf %110, %111 : vector<2x8x8xf32>
    %cst_39 = arith.constant dense<0xFF800000> : vector<2x8xf32>
    %113 = vector.multi_reduction <maximumf>, %112, %cst_39 [2] : vector<2x8x8xf32> to vector<2x8xf32>
    %114 = vector.shape_cast %113 : vector<2x8xf32> to vector<2x8x1xf32>
    %115 = vector.broadcast %114 : vector<2x8x1xf32> to vector<2x8x8xf32>
    %116 = arith.subf %112, %115 : vector<2x8x8xf32>
    %117 = math.exp %116 : vector<2x8x8xf32>
    %cst_40 = arith.constant dense<0.000000e+00> : vector<2x8xf32>
    %118 = vector.multi_reduction <add>, %117, %cst_40 [2] : vector<2x8x8xf32> to vector<2x8xf32>
    %119 = vector.shape_cast %118 : vector<2x8xf32> to vector<2x8x1xf32>
    %120 = tpu.reciprocal %119 {approx = true} : vector<2x8x1xf32> -> vector<2x8x1xf32>
    %121 = vector.broadcast %120 : vector<2x8x1xf32> to vector<2x8x8xf32>
    %122 = arith.mulf %117, %121 : vector<2x8x8xf32>
    %123 = arith.truncf %122 : vector<2x8x8xf32> to vector<2x8x8xbf16>
    "tpu.trace_start"() <{level = 10 : i32, message = "bts,bsd->btd"}> : () -> ()
    %cst_41 = arith.constant dense<0.000000e+00> : vector<2x8x8xf32>
    %124 = tpu.matmul %123, %109, %cst_41 {dimension_numbers = #tpu.dot_dimension_numbers<[2], [1], [1], [2], [0, 0, 0, 1, 1, 2], [0], [0]>} : vector<2x8x8xbf16>, vector<2x8x8xbf16>, vector<2x8x8xf32> -> vector<2x8x8xf32>
    "tpu.trace_stop"() : () -> ()
    %c0_42 = arith.constant 0 : index
    %c0_43 = arith.constant 0 : index
    %c24 = arith.constant 24 : index
    %125 = vector.load %arg15[%c0_42, %c0_43, %c24] : memref<2x8x32xf32, #tpu.memory_space<vmem>>, vector<2x8x8xf32>
    tpu.vector_store %arg15[%c0_42, %c0_43, %c24], %124 {strides = array<i32>} : memref<2x8x32xf32, #tpu.memory_space<vmem>>, vector<2x8x8xf32>,
    %c0_44 = arith.constant 0 : index
    %c0_45 = arith.constant 0 : index
    %c0_46 = arith.constant 0 : index
    %126 = vector.load %arg15[%c0_44, %c0_45, %c0_46] : memref<2x8x32xf32, #tpu.memory_space<vmem>>, vector<2x8x32xf32>
    %127 = arith.truncf %126 : vector<2x8x32xf32> to vector<2x8x32xbf16>
    %128 = vector.shape_cast %127 : vector<2x8x32xbf16> to vector<16x32xbf16>
    %c0_47 = arith.constant 0 : index
    %c0_48 = arith.constant 0 : index
    %129 = vector.load %arg6[%c0_47, %c0_48] : memref<32x32xbf16, #tpu.memory_space<vmem>>, vector<32x32xbf16>
    %cst_49 = arith.constant dense<0.000000e+00> : vector<16x32xf32>
    %130 = tpu.matmul %128, %129, %cst_49 {dimension_numbers = #tpu.dot_dimension_numbers<[1], [0], [0], [1], [0, 0, 1, 1], [], []>} : vector<16x32xbf16>, vector<32x32xbf16>, vector<16x32xf32> -> vector<16x32xf32>
    %c0_50 = arith.constant 0 : index
    %c0_51 = arith.constant 0 : index
    %131 = vector.load %arg7[%c0_50, %c0_51] : memref<1x32xf32, #tpu.memory_space<vmem>>, vector<1x32xf32>
    %132 = vector.broadcast %131 : vector<1x32xf32> to vector<16x32xf32>
    %133 = arith.addf %130, %132 : vector<16x32xf32>
    %134 = arith.addf %1, %133 : vector<16x32xf32>
    %c0_52 = arith.constant 0 : index
    %c0_53 = arith.constant 0 : index
    %135 = vector.load %arg8[%c0_52, %c0_53] : memref<1x32xf32, #tpu.memory_space<vmem>>, vector<1x32xf32>
    %c0_54 = arith.constant 0 : index
    %c0_55 = arith.constant 0 : index
    %136 = vector.load %arg9[%c0_54, %c0_55] : memref<1x32xf32, #tpu.memory_space<vmem>>, vector<1x32xf32>
    %cst_56 = arith.constant dense<0.000000e+00> : vector<16xf32>
    %137 = vector.multi_reduction <add>, %134, %cst_56 [1] : vector<16x32xf32> to vector<16xf32>
    %138 = vector.shape_cast %137 : vector<16xf32> to vector<16x1xf32>
    %cst_57 = arith.constant 3.200000e+01 : f32
    %139 = vector.broadcast %cst_57 : f32 to vector<16x1xf32>
    %140 = arith.divf %138, %139 : vector<16x1xf32>
    %141 = vector.broadcast %140 : vector<16x1xf32> to vector<16x32xf32>
    %142 = arith.subf %134, %141 : vector<16x32xf32>
    %143 = arith.mulf %142, %142 : vector<16x32xf32>
    %cst_58 = arith.constant dense<0.000000e+00> : vector<16xf32>
    %144 = vector.multi_reduction <add>, %143, %cst_58 [1] : vector<16x32xf32> to vector<16xf32>
    %145 = vector.shape_cast %144 : vector<16xf32> to vector<16x1xf32>
    %cst_59 = arith.constant 3.200000e+01 : f32
    %146 = vector.broadcast %cst_59 : f32 to vector<16x1xf32>
    %147 = arith.divf %145, %146 : vector<16x1xf32>
    %148 = vector.broadcast %140 : vector<16x1xf32> to vector<16x32xf32>
    %149 = arith.subf %134, %148 : vector<16x32xf32>
    %cst_60 = arith.constant 9.99999974E-6 : f32
    %150 = vector.broadcast %cst_60 : f32 to vector<16x1xf32>
    %151 = arith.addf %147, %150 : vector<16x1xf32>
    %152 = math.rsqrt %151 : vector<16x1xf32>
    %153 = vector.broadcast %152 : vector<16x1xf32> to vector<16x32xf32>
    %154 = arith.mulf %149, %153 : vector<16x32xf32>
    %155 = vector.broadcast %135 : vector<1x32xf32> to vector<16x32xf32>
    %156 = arith.mulf %154, %155 : vector<16x32xf32>
    %157 = vector.broadcast %136 : vector<1x32xf32> to vector<16x32xf32>
    %158 = arith.addf %156, %157 : vector<16x32xf32>
    %159 = arith.truncf %158 : vector<16x32xf32> to vector<16x32xbf16>
    %c0_61 = arith.constant 0 : index
    %c0_62 = arith.constant 0 : index
    %160 = vector.load %arg10[%c0_61, %c0_62] : memref<32x128xbf16, #tpu.memory_space<vmem>>, vector<32x128xbf16>
    %cst_63 = arith.constant dense<0.000000e+00> : vector<16x128xf32>
    %161 = tpu.matmul %159, %160, %cst_63 {dimension_numbers = #tpu.dot_dimension_numbers<[1], [0], [0], [1], [0, 0, 1, 1], [], []>} : vector<16x32xbf16>, vector<32x128xbf16>, vector<16x128xf32> -> vector<16x128xf32>
    %c0_64 = arith.constant 0 : index
    %c0_65 = arith.constant 0 : index
    %162 = vector.load %arg11[%c0_64, %c0_65] : memref<1x128xf32, #tpu.memory_space<vmem>>, vector<1x128xf32>
    %163 = vector.broadcast %162 : vector<1x128xf32> to vector<16x128xf32>
    %164 = arith.addf %161, %163 : vector<16x128xf32>
    %cst_66 = arith.constant 5.000000e-01 : f32
    %165 = vector.broadcast %cst_66 : f32 to vector<16x128xf32>
    %166 = arith.mulf %165, %164 : vector<16x128xf32>
    %cst_67 = arith.constant 0.707106769 : f32
    %167 = vector.broadcast %cst_67 : f32 to vector<16x128xf32>
    %168 = arith.mulf %164, %167 : vector<16x128xf32>
    %169 = math.erf %168 : vector<16x128xf32>
    %cst_68 = arith.constant 1.000000e+00 : f32
    %170 = vector.broadcast %cst_68 : f32 to vector<16x128xf32>
    %171 = arith.addf %170, %169 : vector<16x128xf32>
    %172 = arith.mulf %166, %171 : vector<16x128xf32>
    %173 = arith.truncf %172 : vector<16x128xf32> to vector<16x128xbf16>
    %c0_69 = arith.constant 0 : index
    %c0_70 = arith.constant 0 : index
    %174 = vector.load %arg12[%c0_69, %c0_70] : memref<128x32xbf16, #tpu.memory_space<vmem>>, vector<128x32xbf16>
    %cst_71 = arith.constant dense<0.000000e+00> : vector<16x32xf32>
    %175 = tpu.matmul %173, %174, %cst_71 {dimension_numbers = #tpu.dot_dimension_numbers<[1], [0], [0], [1], [0, 0, 1, 1], [], []>} : vector<16x128xbf16>, vector<128x32xbf16>, vector<16x32xf32> -> vector<16x32xf32>
    %c0_72 = arith.constant 0 : index
    %c0_73 = arith.constant 0 : index
    %176 = vector.load %arg13[%c0_72, %c0_73] : memref<1x32xf32, #tpu.memory_space<vmem>>, vector<1x32xf32>
    %177 = vector.broadcast %176 : vector<1x32xf32> to vector<16x32xf32>
    %178 = arith.addf %175, %177 : vector<16x32xf32>
    %179 = arith.addf %134, %178 : vector<16x32xf32>
    %180 = vector.shape_cast %179 : vector<16x32xf32> to vector<2x8x32xf32>
    %c0_74 = arith.constant 0 : index
    %c0_75 = arith.constant 0 : index
    %c0_76 = arith.constant 0 : index
    %181 = vector.load %arg14[%c0_74, %c0_75, %c0_76] : memref<2x8x32xf32, #tpu.memory_space<vmem>>, vector<2x8x32xf32>
    tpu.vector_store %arg14[%c0_74, %c0_75, %c0_76], %180 {strides = array<i32>} : memref<2x8x32xf32, #tpu.memory_space<vmem>>, vector<2x8x32xf32>,
    return
  }
  func.func @transform_0(%arg0: i32) -> (i32, i32, i32) {
    %c0_i32 = arith.constant 0 : i32
    %c0_i32_0 = arith.constant 0 : i32
    %c0_i32_1 = arith.constant 0 : i32
    return %arg0, %c0_i32, %c0_i32_0 : i32, i32, i32
  }
  func.func @transform_1(%arg0: i32) -> (i32, i32) {
    %c0_i32 = arith.constant 0 : i32
    %c0_i32_0 = arith.constant 0 : i32
    %c0_i32_1 = arith.constant 0 : i32
    return %c0_i32, %c0_i32_0 : i32, i32
  }
  func.func @transform_2(%arg0: i32) -> (i32, i32) {
    %c0_i32 = arith.constant 0 : i32
    %c0_i32_0 = arith.constant 0 : i32
    %c0_i32_1 = arith.constant 0 : i32
    return %c0_i32, %c0_i32_0 : i32, i32
  }
  func.func @transform_3(%arg0: i32) -> (i32, i32) {
    %c0_i32 = arith.constant 0 : i32
    %c0_i32_0 = arith.constant 0 : i32
    %c0_i32_1 = arith.constant 0 : i32
    return %c0_i32, %c0_i32_0 : i32, i32
  }
  func.func @transform_4(%arg0: i32) -> (i32, i32) {
    %c0_i32 = arith.constant 0 : i32
    %c0_i32_0 = arith.constant 0 : i32
    %c0_i32_1 = arith.constant 0 : i32
    return %c0_i32, %c0_i32_0 : i32, i32
  }
  func.func @transform_5(%arg0: i32) -> (i32, i32) {
    %c0_i32 = arith.constant 0 : i32
    %c0_i32_0 = arith.constant 0 : i32
    %c0_i32_1 = arith.constant 0 : i32
    return %c0_i32, %c0_i32_0 : i32, i32
  }
  func.func @transform_6(%arg0: i32) -> (i32, i32) {
    %c0_i32 = arith.constant 0 : i32
    %c0_i32_0 = arith.constant 0 : i32
    %c0_i32_1 = arith.constant 0 : i32
    return %c0_i32, %c0_i32_0 : i32, i32
  }
  func.func @transform_7(%arg0: i32) -> (i32, i32) {
    %c0_i32 = arith.constant 0 : i32
    %c0_i32_0 = arith.constant 0 : i32
    %c0_i32_1 = arith.constant 0 : i32
    return %c0_i32, %c0_i32_0 : i32, i32
  }
  func.func @transform_8(%arg0: i32) -> (i32, i32) {
    %c0_i32 = arith.constant 0 : i32
    %c0_i32_0 = arith.constant 0 : i32
    %c0_i32_1 = arith.constant 0 : i32
    return %c0_i32, %c0_i32_0 : i32, i32
  }
  func.func @transform_9(%arg0: i32) -> (i32, i32) {
    %c0_i32 = arith.constant 0 : i32
    %c0_i32_0 = arith.constant 0 : i32
    %c0_i32_1 = arith.constant 0 : i32
    return %c0_i32, %c0_i32_0 : i32, i32
  }
  func.func @transform_10(%arg0: i32) -> (i32, i32) {
    %c0_i32 = arith.constant 0 : i32
    %c0_i32_0 = arith.constant 0 : i32
    %c0_i32_1 = arith.constant 0 : i32
    return %c0_i32, %c0_i32_0 : i32, i32
  }
  func.func @transform_11(%arg0: i32) -> (i32, i32) {
    %c0_i32 = arith.constant 0 : i32
    %c0_i32_0 = arith.constant 0 : i32
    %c0_i32_1 = arith.constant 0 : i32
    return %c0_i32, %c0_i32_0 : i32, i32
  }
  func.func @transform_12(%arg0: i32) -> (i32, i32) {
    %c0_i32 = arith.constant 0 : i32
    %c0_i32_0 = arith.constant 0 : i32
    %c0_i32_1 = arith.constant 0 : i32
    return %c0_i32, %c0_i32_0 : i32, i32
  }
  func.func @transform_13(%arg0: i32) -> (i32, i32, i32) {
    %c0_i32 = arith.constant 0 : i32
    %c0_i32_0 = arith.constant 0 : i32
    %c0_i32_1 = arith.constant 0 : i32
    return %arg0, %c0_i32, %c0_i32_0 : i32, i32, i32
  }
}

module attributes {stable_mosaic.version = 11 : i64} {
  func.func @transformer_encoder_kernel(%arg0: i32, %arg1: memref<2x8x32xf32, #tpu.memory_space<vmem>>, %arg2: memref<1x32xf32, #tpu.memory_space<vmem>>, %arg3: memref<1x32xf32, #tpu.memory_space<vmem>>, %arg4: memref<32x96xbf16, #tpu.memory_space<vmem>>, %arg5: memref<1x96xf32, #tpu.memory_space<vmem>>, %arg6: memref<32x32xbf16, #tpu.memory_space<vmem>>, %arg7: memref<1x32xf32, #tpu.memory_space<vmem>>, %arg8: memref<1x32xf32, #tpu.memory_space<vmem>>, %arg9: memref<1x32xf32, #tpu.memory_space<vmem>>, %arg10: memref<32x128xbf16, #tpu.memory_space<vmem>>, %arg11: memref<1x128xf32, #tpu.memory_space<vmem>>, %arg12: memref<128x32xbf16, #tpu.memory_space<vmem>>, %arg13: memref<1x32xf32, #tpu.memory_space<vmem>>, %arg14: memref<2x8x32xf32, #tpu.memory_space<vmem>>, %arg15: memref<2x8x32xf32, #tpu.memory_space<vmem>>) attributes {dimension_semantics = [#tpu.dimension_semantics<parallel>], iteration_bounds = array<i64: 2>, scalar_prefetch = 0 : i64, scratch_operands = 1 : i64, tpu.core_type = #tpu.core_type<tc>, window_params = [{transform_indices = @transform_0, window_bounds = array<i64: 2, 8, 32>}, {pipeline_mode = #tpu.pipeline_mode<synchronous>, transform_indices = @transform_1, window_bounds = array<i64: 1, 32>}, {pipeline_mode = #tpu.pipeline_mode<synchronous>, transform_indices = @transform_2, window_bounds = array<i64: 1, 32>}, {pipeline_mode = #tpu.pipeline_mode<synchronous>, transform_indices = @transform_3, window_bounds = array<i64: 32, 96>}, {pipeline_mode = #tpu.pipeline_mode<synchronous>, transform_indices = @transform_4, window_bounds = array<i64: 1, 96>}, {pipeline_mode = #tpu.pipeline_mode<synchronous>, transform_indices = @transform_5, window_bounds = array<i64: 32, 32>}, {pipeline_mode = #tpu.pipeline_mode<synchronous>, transform_indices = @transform_6, window_bounds = array<i64: 1, 32>}, {pipeline_mode = #tpu.pipeline_mode<synchronous>, transform_indices = @transform_7, window_bounds = array<i64: 1, 32>}, {pipeline_mode = #tpu.pipeline_mode<synchronous>, transform_indices = @transform_8, window_bounds = array<i64: 1, 32>}, {pipeline_mode = #tpu.pipeline_mode<synchronous>, transform_indices = @transform_9, window_bounds = array<i64: 32, 128>}, {pipeline_mode = #tpu.pipeline_mode<synchronous>, transform_indices = @transform_10, window_bounds = array<i64: 1, 128>}, {pipeline_mode = #tpu.pipeline_mode<synchronous>, transform_indices = @transform_11, window_bounds = array<i64: 128, 32>}, {pipeline_mode = #tpu.pipeline_mode<synchronous>, transform_indices = @transform_12, window_bounds = array<i64: 1, 32>}, {transform_indices = @transform_13, window_bounds = array<i64: 2, 8, 32>}]} {
    %c0 = arith.constant 0 : index
    %c0_0 = arith.constant 0 : index
    %c0_1 = arith.constant 0 : index
    %0 = vector.load %arg1[%c0, %c0_0, %c0_1] : memref<2x8x32xf32, #tpu.memory_space<vmem>>, vector<2x8x32xf32>
    %1 = vector.shape_cast %0 : vector<2x8x32xf32> to vector<16x32xf32>
    %c0_2 = arith.constant 0 : index
    %c0_3 = arith.constant 0 : index
    %2 = vector.load %arg2[%c0_2, %c0_3] : memref<1x32xf32, #tpu.memory_space<vmem>>, vector<1x32xf32>
    %c0_4 = arith.constant 0 : index
    %c0_5 = arith.constant 0 : index
    %3 = vector.load %arg3[%c0_4, %c0_5] : memref<1x32xf32, #tpu.memory_space<vmem>>, vector<1x32xf32>
    %cst = arith.constant dense<0.000000e+00> : vector<16xf32>
    %4 = vector.multi_reduction <add>, %1, %cst [1] : vector<16x32xf32> to vector<16xf32>
    %5 = vector.shape_cast %4 : vector<16xf32> to vector<16x1xf32>
    %cst_6 = arith.constant 3.200000e+01 : f32
    %6 = vector.broadcast %cst_6 : f32 to vector<16x1xf32>
    %7 = arith.divf %5, %6 : vector<16x1xf32>
    %8 = vector.broadcast %7 : vector<16x1xf32> to vector<16x32xf32>
    %9 = arith.subf %1, %8 : vector<16x32xf32>
    %10 = arith.mulf %9, %9 : vector<16x32xf32>
    %cst_7 = arith.constant dense<0.000000e+00> : vector<16xf32>
    %11 = vector.multi_reduction <add>, %10, %cst_7 [1] : vector<16x32xf32> to vector<16xf32>
    %12 = vector.shape_cast %11 : vector<16xf32> to vector<16x1xf32>
    %cst_8 = arith.constant 3.200000e+01 : f32
    %13 = vector.broadcast %cst_8 : f32 to vector<16x1xf32>
    %14 = arith.divf %12, %13 : vector<16x1xf32>
    %15 = vector.broadcast %7 : vector<16x1xf32> to vector<16x32xf32>
    %16 = arith.subf %1, %15 : vector<16x32xf32>
    %cst_9 = arith.constant 9.99999974E-6 : f32
    %17 = vector.broadcast %cst_9 : f32 to vector<16x1xf32>
    %18 = arith.addf %14, %17 : vector<16x1xf32>
    %19 = math.rsqrt %18 : vector<16x1xf32>
    %20 = vector.broadcast %19 : vector<16x1xf32> to vector<16x32xf32>
    %21 = arith.mulf %16, %20 : vector<16x32xf32>
    %22 = vector.broadcast %2 : vector<1x32xf32> to vector<16x32xf32>
    %23 = arith.mulf %21, %22 : vector<16x32xf32>
    %24 = vector.broadcast %3 : vector<1x32xf32> to vector<16x32xf32>
    %25 = arith.addf %23, %24 : vector<16x32xf32>
    %26 = arith.truncf %25 : vector<16x32xf32> to vector<16x32xbf16>
    %c0_10 = arith.constant 0 : index
    %c0_11 = arith.constant 0 : index
    %27 = vector.load %arg4[%c0_10, %c0_11] : memref<32x96xbf16, #tpu.memory_space<vmem>>, vector<32x96xbf16>
    %cst_12 = arith.constant dense<0.000000e+00> : vector<16x96xf32>
    %28 = tpu.matmul %26, %27, %cst_12 {dimension_numbers = #tpu.dot_dimension_numbers<[1], [0], [0], [1], [0, 0, 1, 1], [], []>} : vector<16x32xbf16>, vector<32x96xbf16>, vector<16x96xf32> -> vector<16x96xf32>
    %c0_13 = arith.constant 0 : index
    %c0_14 = arith.constant 0 : index
    %29 = vector.load %arg5[%c0_13, %c0_14] : memref<1x96xf32, #tpu.memory_space<vmem>>, vector<1x96xf32>
    %30 = vector.broadcast %29 : vector<1x96xf32> to vector<16x96xf32>
    %31 = arith.addf %28, %30 : vector<16x96xf32>
    %32 = vector.extract_strided_slice %31 {offsets = [0, 0], sizes = [16, 32], strides = [1, 1]} : vector<16x96xf32> to vector<16x32xf32>
    %33 = vector.shape_cast %32 : vector<16x32xf32> to vector<2x8x32xf32>
    %34 = vector.extract_strided_slice %31 {offsets = [0, 32], sizes = [16, 32], strides = [1, 1]} : vector<16x96xf32> to vector<16x32xf32>
    %35 = vector.shape_cast %34 : vector<16x32xf32> to vector<2x8x32xf32>
    %36 = vector.extract_strided_slice %31 {offsets = [0, 64], sizes = [16, 32], strides = [1, 1]} : vector<16x96xf32> to vector<16x32xf32>
    %37 = vector.shape_cast %36 : vector<16x32xf32> to vector<2x8x32xf32>
    %38 = vector.extract_strided_slice %33 {offsets = [0, 0, 0], sizes = [2, 8, 8], strides = [1, 1, 1]} : vector<2x8x32xf32> to vector<2x8x8xf32>
    %39 = arith.truncf %38 : vector<2x8x8xf32> to vector<2x8x8xbf16>
    %40 = vector.extract_strided_slice %35 {offsets = [0, 0, 0], sizes = [2, 8, 8], strides = [1, 1, 1]} : vector<2x8x32xf32> to vector<2x8x8xf32>
    %41 = arith.truncf %40 : vector<2x8x8xf32> to vector<2x8x8xbf16>
    %42 = vector.extract_strided_slice %37 {offsets = [0, 0, 0], sizes = [2, 8, 8], strides = [1, 1, 1]} : vector<2x8x32xf32> to vector<2x8x8xf32>
    %43 = arith.truncf %42 : vector<2x8x8xf32> to vector<2x8x8xbf16>
    "tpu.trace_start"() <{level = 10 : i32, message = "btd,bsd->bts"}> : () -> ()
    %cst_15 = arith.constant dense<0.000000e+00> : vector<2x8x8xf32>
    %44 = tpu.matmul %39, %41, %cst_15 {dimension_numbers = #tpu.dot_dimension_numbers<[2], [2], [1], [1], [0, 0, 0, 1, 1, 1], [0], [0]>} : vector<2x8x8xbf16>, vector<2x8x8xbf16>, vector<2x8x8xf32> -> vector<2x8x8xf32>
    "tpu.trace_stop"() : () -> ()
    %cst_16 = arith.constant 0.353553385 : f32
    %45 = vector.broadcast %cst_16 : f32 to vector<2x8x8xf32>
    %46 = arith.mulf %44, %45 : vector<2x8x8xf32>
    %cst_17 = arith.constant dense<0xFF800000> : vector<2x8xf32>
    %47 = vector.multi_reduction <maximumf>, %46, %cst_17 [2] : vector<2x8x8xf32> to vector<2x8xf32>
    %48 = vector.shape_cast %47 : vector<2x8xf32> to vector<2x8x1xf32>
    %49 = vector.broadcast %48 : vector<2x8x1xf32> to vector<2x8x8xf32>
    %50 = arith.subf %46, %49 : vector<2x8x8xf32>
    %51 = math.exp %50 : vector<2x8x8xf32>
    %cst_18 = arith.constant dense<0.000000e+00> : vector<2x8xf32>
    %52 = vector.multi_reduction <add>, %51, %cst_18 [2] : vector<2x8x8xf32> to vector<2x8xf32>
    %53 = vector.shape_cast %52 : vector<2x8xf32> to vector<2x8x1xf32>
    %54 = tpu.reciprocal %53 {approx = true} : vector<2x8x1xf32> -> vector<2x8x1xf32>
    %55 = vector.broadcast %54 : vector<2x8x1xf32> to vector<2x8x8xf32>
    %56 = arith.mulf %51, %55 : vector<2x8x8xf32>
    %57 = arith.truncf %56 : vector<2x8x8xf32> to vector<2x8x8xbf16>
    "tpu.trace_start"() <{level = 10 : i32, message = "bts,bsd->btd"}> : () -> ()
    %cst_19 = arith.constant dense<0.000000e+00> : vector<2x8x8xf32>
    %58 = tpu.matmul %57, %43, %cst_19 {dimension_numbers = #tpu.dot_dimension_numbers<[2], [1], [1], [2], [0, 0, 0, 1, 1, 2], [0], [0]>} : vector<2x8x8xbf16>, vector<2x8x8xbf16>, vector<2x8x8xf32> -> vector<2x8x8xf32>
    "tpu.trace_stop"() : () -> ()
    %c0_20 = arith.constant 0 : index
    %c0_21 = arith.constant 0 : index
    %c0_22 = arith.constant 0 : index
    %59 = vector.load %arg15[%c0_20, %c0_21, %c0_22] : memref<2x8x32xf32, #tpu.memory_space<vmem>>, vector<2x8x8xf32>
    tpu.vector_store %arg15[%c0_20, %c0_21, %c0_22], %58 {strides = array<i32>} : memref<2x8x32xf32, #tpu.memory_space<vmem>>, vector<2x8x8xf32>,
    %60 = vector.extract_strided_slice %33 {offsets = [0, 0, 8], sizes = [2, 8, 8], strides = [1, 1, 1]} : vector<2x8x32xf32> to vector<2x8x8xf32>
    %61 = arith.truncf %60 : vector<2x8x8xf32> to vector<2x8x8xbf16>
    %62 = vector.extract_strided_slice %35 {offsets = [0, 0, 8], sizes = [2, 8, 8], strides = [1, 1, 1]} : vector<2x8x32xf32> to vector<2x8x8xf32>
    %63 = arith.truncf %62 : vector<2x8x8xf32> to vector<2x8x8xbf16>
    %64 = vector.extract_strided_slice %37 {offsets = [0, 0, 8], sizes = [2, 8, 8], strides = [1, 1, 1]} : vector<2x8x32xf32> to vector<2x8x8xf32>
    %65 = arith.truncf %64 : vector<2x8x8xf32> to vector<2x8x8xbf16>
    "tpu.trace_start"() <{level = 10 : i32, message = "btd,bsd->bts"}> : () -> ()
    %cst_23 = arith.constant dense<0.000000e+00> : vector<2x8x8xf32>
    %66 = tpu.matmul %61, %63, %cst_23 {dimension_numbers = #tpu.dot_dimension_numbers<[2], [2], [1], [1], [0, 0, 0, 1, 1, 1], [0], [0]>} : vector<2x8x8xbf16>, vector<2x8x8xbf16>, vector<2x8x8xf32> -> vector<2x8x8xf32>
    "tpu.trace_stop"() : () -> ()
    %cst_24 = arith.constant 0.353553385 : f32
    %67 = vector.broadcast %cst_24 : f32 to vector<2x8x8xf32>
    %68 = arith.mulf %66, %67 : vector<2x8x8xf32>
    %cst_25 = arith.constant dense<0xFF800000> : vector<2x8xf32>
    %69 = vector.multi_reduction <maximumf>, %68, %cst_25 [2] : vector<2x8x8xf32> to vector<2x8xf32>
    %70 = vector.shape_cast %69 : vector<2x8xf32> to vector<2x8x1xf32>
    %71 = vector.broadcast %70 : vector<2x8x1xf32> to vector<2x8x8xf32>
    %72 = arith.subf %68, %71 : vector<2x8x8xf32>
    %73 = math.exp %72 : vector<2x8x8xf32>
    %cst_26 = arith.constant dense<0.000000e+00> : vector<2x8xf32>
    %74 = vector.multi_reduction <add>, %73, %cst_26 [2] : vector<2x8x8xf32> to vector<2x8xf32>
    %75 = vector.shape_cast %74 : vector<2x8xf32> to vector<2x8x1xf32>
    %76 = tpu.reciprocal %75 {approx = true} : vector<2x8x1xf32> -> vector<2x8x1xf32>
    %77 = vector.broadcast %76 : vector<2x8x1xf32> to vector<2x8x8xf32>
    %78 = arith.mulf %73, %77 : vector<2x8x8xf32>
    %79 = arith.truncf %78 : vector<2x8x8xf32> to vector<2x8x8xbf16>
    "tpu.trace_start"() <{level = 10 : i32, message = "bts,bsd->btd"}> : () -> ()
    %cst_27 = arith.constant dense<0.000000e+00> : vector<2x8x8xf32>
    %80 = tpu.matmul %79, %65, %cst_27 {dimension_numbers = #tpu.dot_dimension_numbers<[2], [1], [1], [2], [0, 0, 0, 1, 1, 2], [0], [0]>} : vector<2x8x8xbf16>, vector<2x8x8xbf16>, vector<2x8x8xf32> -> vector<2x8x8xf32>
    "tpu.trace_stop"() : () -> ()
    %c0_28 = arith.constant 0 : index
    %c0_29 = arith.constant 0 : index
    %c8 = arith.constant 8 : index
    %81 = vector.load %arg15[%c0_28, %c0_29, %c8] : memref<2x8x32xf32, #tpu.memory_space<vmem>>, vector<2x8x8xf32>
    tpu.vector_store %arg15[%c0_28, %c0_29, %c8], %80 {strides = array<i32>} : memref<2x8x32xf32, #tpu.memory_space<vmem>>, vector<2x8x8xf32>,
    %82 = vector.extract_strided_slice %33 {offsets = [0, 0, 16], sizes = [2, 8, 8], strides = [1, 1, 1]} : vector<2x8x32xf32> to vector<2x8x8xf32>
    %83 = arith.truncf %82 : vector<2x8x8xf32> to vector<2x8x8xbf16>
    %84 = vector.extract_strided_slice %35 {offsets = [0, 0, 16], sizes = [2, 8, 8], strides = [1, 1, 1]} : vector<2x8x32xf32> to vector<2x8x8xf32>
    %85 = arith.truncf %84 : vector<2x8x8xf32> to vector<2x8x8xbf16>
    %86 = vector.extract_strided_slice %37 {offsets = [0, 0, 16], sizes = [2, 8, 8], strides = [1, 1, 1]} : vector<2x8x32xf32> to vector<2x8x8xf32>
    %87 = arith.truncf %86 : vector<2x8x8xf32> to vector<2x8x8xbf16>
    "tpu.trace_start"() <{level = 10 : i32, message = "btd,bsd->bts"}> : () -> ()
    %cst_30 = arith.constant dense<0.000000e+00> : vector<2x8x8xf32>
    %88 = tpu.matmul %83, %85, %cst_30 {dimension_numbers = #tpu.dot_dimension_numbers<[2], [2], [1], [1], [0, 0, 0, 1, 1, 1], [0], [0]>} : vector<2x8x8xbf16>, vector<2x8x8xbf16>, vector<2x8x8xf32> -> vector<2x8x8xf32>
    "tpu.trace_stop"() : () -> ()
    %cst_31 = arith.constant 0.353553385 : f32
    %89 = vector.broadcast %cst_31 : f32 to vector<2x8x8xf32>
    %90 = arith.mulf %88, %89 : vector<2x8x8xf32>
    %cst_32 = arith.constant dense<0xFF800000> : vector<2x8xf32>
    %91 = vector.multi_reduction <maximumf>, %90, %cst_32 [2] : vector<2x8x8xf32> to vector<2x8xf32>
    %92 = vector.shape_cast %91 : vector<2x8xf32> to vector<2x8x1xf32>
    %93 = vector.broadcast %92 : vector<2x8x1xf32> to vector<2x8x8xf32>
    %94 = arith.subf %90, %93 : vector<2x8x8xf32>
    %95 = math.exp %94 : vector<2x8x8xf32>
    %cst_33 = arith.constant dense<0.000000e+00> : vector<2x8xf32>
    %96 = vector.multi_reduction <add>, %95, %cst_33 [2] : vector<2x8x8xf32> to vector<2x8xf32>
    %97 = vector.shape_cast %96 : vector<2x8xf32> to vector<2x8x1xf32>
    %98 = tpu.reciprocal %97 {approx = true} : vector<2x8x1xf32> -> vector<2x8x1xf32>
    %99 = vector.broadcast %98 : vector<2x8x1xf32> to vector<2x8x8xf32>
    %100 = arith.mulf %95, %99 : vector<2x8x8xf32>
    %101 = arith.truncf %100 : vector<2x8x8xf32> to vector<2x8x8xbf16>
    "tpu.trace_start"() <{level = 10 : i32, message = "bts,bsd->btd"}> : () -> ()
    %cst_34 = arith.constant dense<0.000000e+00> : vector<2x8x8xf32>
    %102 = tpu.matmul %101, %87, %cst_34 {dimension_numbers = #tpu.dot_dimension_numbers<[2], [1], [1], [2], [0, 0, 0, 1, 1, 2], [0], [0]>} : vector<2x8x8xbf16>, vector<2x8x8xbf16>, vector<2x8x8xf32> -> vector<2x8x8xf32>
    "tpu.trace_stop"() : () -> ()
    %c0_35 = arith.constant 0 : index
    %c0_36 = arith.constant 0 : index
    %c16 = arith.constant 16 : index
    %103 = vector.load %arg15[%c0_35, %c0_36, %c16] : memref<2x8x32xf32, #tpu.memory_space<vmem>>, vector<2x8x8xf32>
    tpu.vector_store %arg15[%c0_35, %c0_36, %c16], %102 {strides = array<i32>} : memref<2x8x32xf32, #tpu.memory_space<vmem>>, vector<2x8x8xf32>,
    %104 = vector.extract_strided_slice %33 {offsets = [0, 0, 24], sizes = [2, 8, 8], strides = [1, 1, 1]} : vector<2x8x32xf32> to vector<2x8x8xf32>
    %105 = arith.truncf %104 : vector<2x8x8xf32> to vector<2x8x8xbf16>
    %106 = vector.extract_strided_slice %35 {offsets = [0, 0, 24], sizes = [2, 8, 8], strides = [1, 1, 1]} : vector<2x8x32xf32> to vector<2x8x8xf32>
    %107 = arith.truncf %106 : vector<2x8x8xf32> to vector<2x8x8xbf16>
    %108 = vector.extract_strided_slice %37 {offsets = [0, 0, 24], sizes = [2, 8, 8], strides = [1, 1, 1]} : vector<2x8x32xf32> to vector<2x8x8xf32>
    %109 = arith.truncf %108 : vector<2x8x8xf32> to vector<2x8x8xbf16>
    "tpu.trace_start"() <{level = 10 : i32, message = "btd,bsd->bts"}> : () -> ()
    %cst_37 = arith.constant dense<0.000000e+00> : vector<2x8x8xf32>
    %110 = tpu.matmul %105, %107, %cst_37 {dimension_numbers = #tpu.dot_dimension_numbers<[2], [2], [1], [1], [0, 0, 0, 1, 1, 1], [0], [0]>} : vector<2x8x8xbf16>, vector<2x8x8xbf16>, vector<2x8x8xf32> -> vector<2x8x8xf32>
    "tpu.trace_stop"() : () -> ()
    %cst_38 = arith.constant 0.353553385 : f32
    %111 = vector.broadcast %cst_38 : f32 to vector<2x8x8xf32>
    %112 = arith.mulf %110, %111 : vector<2x8x8xf32>
    %cst_39 = arith.constant dense<0xFF800000> : vector<2x8xf32>
    %113 = vector.multi_reduction <maximumf>, %112, %cst_39 [2] : vector<2x8x8xf32> to vector<2x8xf32>
    %114 = vector.shape_cast %113 : vector<2x8xf32> to vector<2x8x1xf32>
    %115 = vector.broadcast %114 : vector<2x8x1xf32> to vector<2x8x8xf32>
    %116 = arith.subf %112, %115 : vector<2x8x8xf32>
    %117 = math.exp %116 : vector<2x8x8xf32>
    %cst_40 = arith.constant dense<0.000000e+00> : vector<2x8xf32>
    %118 = vector.multi_reduction <add>, %117, %cst_40 [2] : vector<2x8x8xf32> to vector<2x8xf32>
    %119 = vector.shape_cast %118 : vector<2x8xf32> to vector<2x8x1xf32>
    %120 = tpu.reciprocal %119 {approx = true} : vector<2x8x1xf32> -> vector<2x8x1xf32>
    %121 = vector.broadcast %120 : vector<2x8x1xf32> to vector<2x8x8xf32>
    %122 = arith.mulf %117, %121 : vector<2x8x8xf32>
    %123 = arith.truncf %122 : vector<2x8x8xf32> to vector<2x8x8xbf16>
    "tpu.trace_start"() <{level = 10 : i32, message = "bts,bsd->btd"}> : () -> ()
    %cst_41 = arith.constant dense<0.000000e+00> : vector<2x8x8xf32>
    %124 = tpu.matmul %123, %109, %cst_41 {dimension_numbers = #tpu.dot_dimension_numbers<[2], [1], [1], [2], [0, 0, 0, 1, 1, 2], [0], [0]>} : vector<2x8x8xbf16>, vector<2x8x8xbf16>, vector<2x8x8xf32> -> vector<2x8x8xf32>
    "tpu.trace_stop"() : () -> ()
    %c0_42 = arith.constant 0 : index
    %c0_43 = arith.constant 0 : index
    %c24 = arith.constant 24 : index
    %125 = vector.load %arg15[%c0_42, %c0_43, %c24] : memref<2x8x32xf32, #tpu.memory_space<vmem>>, vector<2x8x8xf32>
    tpu.vector_store %arg15[%c0_42, %c0_43, %c24], %124 {strides = array<i32>} : memref<2x8x32xf32, #tpu.memory_space<vmem>>, vector<2x8x8xf32>,
    %c0_44 = arith.constant 0 : index
    %c0_45 = arith.constant 0 : index
    %c0_46 = arith.constant 0 : index
    %126 = vector.load %arg15[%c0_44, %c0_45, %c0_46] : memref<2x8x32xf32, #tpu.memory_space<vmem>>, vector<2x8x32xf32>
    %127 = arith.truncf %126 : vector<2x8x32xf32> to vector<2x8x32xbf16>
    %128 = vector.shape_cast %127 : vector<2x8x32xbf16> to vector<16x32xbf16>
    %c0_47 = arith.constant 0 : index
    %c0_48 = arith.constant 0 : index
    %129 = vector.load %arg6[%c0_47, %c0_48] : memref<32x32xbf16, #tpu.memory_space<vmem>>, vector<32x32xbf16>
    %cst_49 = arith.constant dense<0.000000e+00> : vector<16x32xf32>
    %130 = tpu.matmul %128, %129, %cst_49 {dimension_numbers = #tpu.dot_dimension_numbers<[1], [0], [0], [1], [0, 0, 1, 1], [], []>} : vector<16x32xbf16>, vector<32x32xbf16>, vector<16x32xf32> -> vector<16x32xf32>
    %c0_50 = arith.constant 0 : index
    %c0_51 = arith.constant 0 : index
    %131 = vector.load %arg7[%c0_50, %c0_51] : memref<1x32xf32, #tpu.memory_space<vmem>>, vector<1x32xf32>
    %132 = vector.broadcast %131 : vector<1x32xf32> to vector<16x32xf32>
    %133 = arith.addf %130, %132 : vector<16x32xf32>
    %134 = arith.addf %1, %133 : vector<16x32xf32>
    %c0_52 = arith.constant 0 : index
    %c0_53 = arith.constant 0 : index
    %135 = vector.load %arg8[%c0_52, %c0_53] : memref<1x32xf32, #tpu.memory_space<vmem>>, vector<1x32xf32>
    %c0_54 = arith.constant 0 : index
    %c0_55 = arith.constant 0 : index
    %136 = vector.load %arg9[%c0_54, %c0_55] : memref<1x32xf32, #tpu.memory_space<vmem>>, vector<1x32xf32>
    %cst_56 = arith.constant dense<0.000000e+00> : vector<16xf32>
    %137 = vector.multi_reduction <add>, %134, %cst_56 [1] : vector<16x32xf32> to vector<16xf32>
    %138 = vector.shape_cast %137 : vector<16xf32> to vector<16x1xf32>
    %cst_57 = arith.constant 3.200000e+01 : f32
    %139 = vector.broadcast %cst_57 : f32 to vector<16x1xf32>
    %140 = arith.divf %138, %139 : vector<16x1xf32>
    %141 = vector.broadcast %140 : vector<16x1xf32> to vector<16x32xf32>
    %142 = arith.subf %134, %141 : vector<16x32xf32>
    %143 = arith.mulf %142, %142 : vector<16x32xf32>
    %cst_58 = arith.constant dense<0.000000e+00> : vector<16xf32>
    %144 = vector.multi_reduction <add>, %143, %cst_58 [1] : vector<16x32xf32> to vector<16xf32>
    %145 = vector.shape_cast %144 : vector<16xf32> to vector<16x1xf32>
    %cst_59 = arith.constant 3.200000e+01 : f32
    %146 = vector.broadcast %cst_59 : f32 to vector<16x1xf32>
    %147 = arith.divf %145, %146 : vector<16x1xf32>
    %148 = vector.broadcast %140 : vector<16x1xf32> to vector<16x32xf32>
    %149 = arith.subf %134, %148 : vector<16x32xf32>
    %cst_60 = arith.constant 9.99999974E-6 : f32
    %150 = vector.broadcast %cst_60 : f32 to vector<16x1xf32>
    %151 = arith.addf %147, %150 : vector<16x1xf32>
    %152 = math.rsqrt %151 : vector<16x1xf32>
    %153 = vector.broadcast %152 : vector<16x1xf32> to vector<16x32xf32>
    %154 = arith.mulf %149, %153 : vector<16x32xf32>
    %155 = vector.broadcast %135 : vector<1x32xf32> to vector<16x32xf32>
    %156 = arith.mulf %154, %155 : vector<16x32xf32>
    %157 = vector.broadcast %136 : vector<1x32xf32> to vector<16x32xf32>
    %158 = arith.addf %156, %157 : vector<16x32xf32>
    %159 = arith.truncf %158 : vector<16x32xf32> to vector<16x32xbf16>
    %c0_61 = arith.constant 0 : index
    %c0_62 = arith.constant 0 : index
    %160 = vector.load %arg10[%c0_61, %c0_62] : memref<32x128xbf16, #tpu.memory_space<vmem>>, vector<32x128xbf16>
    %cst_63 = arith.constant dense<0.000000e+00> : vector<16x128xf32>
    %161 = tpu.matmul %159, %160, %cst_63 {dimension_numbers = #tpu.dot_dimension_numbers<[1], [0], [0], [1], [0, 0, 1, 1], [], []>} : vector<16x32xbf16>, vector<32x128xbf16>, vector<16x128xf32> -> vector<16x128xf32>
    %c0_64 = arith.constant 0 : index
    %c0_65 = arith.constant 0 : index
    %162 = vector.load %arg11[%c0_64, %c0_65] : memref<1x128xf32, #tpu.memory_space<vmem>>, vector<1x128xf32>
    %163 = vector.broadcast %162 : vector<1x128xf32> to vector<16x128xf32>
    %164 = arith.addf %161, %163 : vector<16x128xf32>
    %cst_66 = arith.constant 5.000000e-01 : f32
    %165 = vector.broadcast %cst_66 : f32 to vector<16x128xf32>
    %166 = arith.mulf %165, %164 : vector<16x128xf32>
    %cst_67 = arith.constant 0.707106769 : f32
    %167 = vector.broadcast %cst_67 : f32 to vector<16x128xf32>
    %168 = arith.mulf %164, %167 : vector<16x128xf32>
    %169 = math.erf %168 : vector<16x128xf32>
    %cst_68 = arith.constant 1.000000e+00 : f32
    %170 = vector.broadcast %cst_68 : f32 to vector<16x128xf32>
    %171 = arith.addf %170, %169 : vector<16x128xf32>
    %172 = arith.mulf %166, %171 : vector<16x128xf32>
    %173 = arith.truncf %172 : vector<16x128xf32> to vector<16x128xbf16>
    %c0_69 = arith.constant 0 : index
    %c0_70 = arith.constant 0 : index
    %174 = vector.load %arg12[%c0_69, %c0_70] : memref<128x32xbf16, #tpu.memory_space<vmem>>, vector<128x32xbf16>
    %cst_71 = arith.constant dense<0.000000e+00> : vector<16x32xf32>
    %175 = tpu.matmul %173, %174, %cst_71 {dimension_numbers = #tpu.dot_dimension_numbers<[1], [0], [0], [1], [0, 0, 1, 1], [], []>} : vector<16x128xbf16>, vector<128x32xbf16>, vector<16x32xf32> -> vector<16x32xf32>
    %c0_72 = arith.constant 0 : index
    %c0_73 = arith.constant 0 : index
    %176 = vector.load %arg13[%c0_72, %c0_73] : memref<1x32xf32, #tpu.memory_space<vmem>>, vector<1x32xf32>
    %177 = vector.broadcast %176 : vector<1x32xf32> to vector<16x32xf32>
    %178 = arith.addf %175, %177 : vector<16x32xf32>
    %179 = arith.addf %134, %178 : vector<16x32xf32>
    %180 = vector.shape_cast %179 : vector<16x32xf32> to vector<2x8x32xf32>
    %c0_74 = arith.constant 0 : index
    %c0_75 = arith.constant 0 : index
    %c0_76 = arith.constant 0 : index
    %181 = vector.load %arg14[%c0_74, %c0_75, %c0_76] : memref<2x8x32xf32, #tpu.memory_space<vmem>>, vector<2x8x32xf32>
    tpu.vector_store %arg14[%c0_74, %c0_75, %c0_76], %180 {strides = array<i32>} : memref<2x8x32xf32, #tpu.memory_space<vmem>>, vector<2x8x32xf32>,
    return
  }
  func.func @transform_0(%arg0: i32) -> (i32, i32, i32) {
    %c0_i32 = arith.constant 0 : i32
    %c0_i32_0 = arith.constant 0 : i32
    %c0_i32_1 = arith.constant 0 : i32
    return %arg0, %c0_i32, %c0_i32_0 : i32, i32, i32
  }
  func.func @transform_1(%arg0: i32) -> (i32, i32) {
    %c0_i32 = arith.constant 0 : i32
    %c0_i32_0 = arith.constant 0 : i32
    %c0_i32_1 = arith.constant 0 : i32
    return %c0_i32, %c0_i32_0 : i32, i32
  }
  func.func @transform_2(%arg0: i32) -> (i32, i32) {
    %c0_i32 = arith.constant 0 : i32
    %c0_i32_0 = arith.constant 0 : i32
    %c0_i32_1 = arith.constant 0 : i32
    return %c0_i32, %c0_i32_0 : i32, i32
  }
  func.func @transform_3(%arg0: i32) -> (i32, i32) {
    %c0_i32 = arith.constant 0 : i32
    %c0_i32_0 = arith.constant 0 : i32
    %c0_i32_1 = arith.constant 0 : i32
    return %c0_i32, %c0_i32_0 : i32, i32
  }
  func.func @transform_4(%arg0: i32) -> (i32, i32) {
    %c0_i32 = arith.constant 0 : i32
    %c0_i32_0 = arith.constant 0 : i32
    %c0_i32_1 = arith.constant 0 : i32
    return %c0_i32, %c0_i32_0 : i32, i32
  }
  func.func @transform_5(%arg0: i32) -> (i32, i32) {
    %c0_i32 = arith.constant 0 : i32
    %c0_i32_0 = arith.constant 0 : i32
    %c0_i32_1 = arith.constant 0 : i32
    return %c0_i32, %c0_i32_0 : i32, i32
  }
  func.func @transform_6(%arg0: i32) -> (i32, i32) {
    %c0_i32 = arith.constant 0 : i32
    %c0_i32_0 = arith.constant 0 : i32
    %c0_i32_1 = arith.constant 0 : i32
    return %c0_i32, %c0_i32_0 : i32, i32
  }
  func.func @transform_7(%arg0: i32) -> (i32, i32) {
    %c0_i32 = arith.constant 0 : i32
    %c0_i32_0 = arith.constant 0 : i32
    %c0_i32_1 = arith.constant 0 : i32
    return %c0_i32, %c0_i32_0 : i32, i32
  }
  func.func @transform_8(%arg0: i32) -> (i32, i32) {
    %c0_i32 = arith.constant 0 : i32
    %c0_i32_0 = arith.constant 0 : i32
    %c0_i32_1 = arith.constant 0 : i32
    return %c0_i32, %c0_i32_0 : i32, i32
  }
  func.func @transform_9(%arg0: i32) -> (i32, i32) {
    %c0_i32 = arith.constant 0 : i32
    %c0_i32_0 = arith.constant 0 : i32
    %c0_i32_1 = arith.constant 0 : i32
    return %c0_i32, %c0_i32_0 : i32, i32
  }
  func.func @transform_10(%arg0: i32) -> (i32, i32) {
    %c0_i32 = arith.constant 0 : i32
    %c0_i32_0 = arith.constant 0 : i32
    %c0_i32_1 = arith.constant 0 : i32
    return %c0_i32, %c0_i32_0 : i32, i32
  }
  func.func @transform_11(%arg0: i32) -> (i32, i32) {
    %c0_i32 = arith.constant 0 : i32
    %c0_i32_0 = arith.constant 0 : i32
    %c0_i32_1 = arith.constant 0 : i32
    return %c0_i32, %c0_i32_0 : i32, i32
  }
  func.func @transform_12(%arg0: i32) -> (i32, i32) {
    %c0_i32 = arith.constant 0 : i32
    %c0_i32_0 = arith.constant 0 : i32
    %c0_i32_1 = arith.constant 0 : i32
    return %c0_i32, %c0_i32_0 : i32, i32
  }
  func.func @transform_13(%arg0: i32) -> (i32, i32, i32) {
    %c0_i32 = arith.constant 0 : i32
    %c0_i32_0 = arith.constant 0 : i32
    %c0_i32_1 = arith.constant 0 : i32
    return %arg0, %c0_i32, %c0_i32_0 : i32, i32, i32
  }
}

</mosaic_0001>

<llo_original>
// kernel: tpu_custom_call.1
$region0: #{tpu_custom_call.1}
  #allocation0 [shape = 'u32[]', space=smem, size = 0x4, offset = 0x4, fixed_abs, tag = 'smem constant byte address 0x4 - core index']
  #allocation1 [shape = 'u32[144,128]{1,0:T(1,128)}', space=vmem, size = 0x12000, scoped, tag = 'internal scratch']
  #allocation2 [shape = 'f32[2,8,32]{2,1,0:T(8,128)}', space=vmem, size = 0x2000, scoped, tag = 'scratch operand']
  %s0 = inlined_call_operand.vmem [shape: f32[4,8,32], index: 0, kind: input, shape index: {}]
  %s1 = inlined_call_operand.vmem [shape: f32[1,32], index: 1, kind: input, shape index: {}]
  %s2 = inlined_call_operand.vmem [shape: f32[1,32], index: 2, kind: input, shape index: {}]
  %s3 = inlined_call_operand.vmem [shape: bf16[32,96], index: 3, kind: input, shape index: {}]
  %s4 = inlined_call_operand.vmem [shape: f32[1,96], index: 4, kind: input, shape index: {}]
  %s5 = inlined_call_operand.vmem [shape: bf16[32,32], index: 5, kind: input, shape index: {}]
  %s6 = inlined_call_operand.vmem [shape: f32[1,32], index: 6, kind: input, shape index: {}]
  %s7 = inlined_call_operand.vmem [shape: f32[1,32], index: 7, kind: input, shape index: {}]
  %s8 = inlined_call_operand.vmem [shape: f32[1,32], index: 8, kind: input, shape index: {}]
  %s9 = inlined_call_operand.vmem [shape: bf16[32,128], index: 9, kind: input, shape index: {}]
  %s10 = inlined_call_operand.vmem [shape: f32[1,128], index: 10, kind: input, shape index: {}]
  %s11 = inlined_call_operand.vmem [shape: bf16[128,32], index: 11, kind: input, shape index: {}]
  %s12 = inlined_call_operand.vmem [shape: f32[1,32], index: 12, kind: input, shape index: {}]
  %s13 = inlined_call_operand.hbm [shape: f32[4,8,32], index: 13, kind: output, shape index: {}]
  %s14 = sld [smem:[#allocation0]]
  $region85: #{tpu_custom_call.1} parent=0
    _
  %s16 = ssub.s32 1, %s14
  %s17 = scalar_select 0, %s16, %s14
  $region1: #{tpu_custom_call.1} parent=0
    #allocation3 [shape = 'u8[16384]{0}', space=vmem, size = 0x4000, scoped, tag = 'output window, operand 0']
    #allocation4 [shape = 's32[2]{0}', space=sflag, size = 0x8, scoped, tag = 'scoped memory for tpu_custom_call.1']
    %18 = vsyncpa [#allocation4], 0
    %s19 = scalar_lea.sflag [#allocation4], 1
    %20 = vsyncpa %s19, 0
    loop: start=0, step=1, limit=4
    $region2: #{tpu_custom_call.1} parent=1 // loop_pre_header
      _
    $region3: #{tpu_custom_call.1} parent=1 // loop_header
      %s22 = sphi 0, %s26
      %p23 = scmp.ge.s32.totalorder %s22, 4
      %s32 = sphi 0, %s34
      %s35 = sphi 0, %s32
      %s36 = sphi 0, %s35
      %s52 = sphi 0, %s36
      %s56 = sphi 0, %s56
      %s58 = sphi 0, %s56
      %s59 = sphi 0, %s58
      %s73 = sphi 0, %s59
      %s77 = sphi 0, %s77
      %s79 = sphi 0, %s77
      %s80 = sphi 0, %s79
      %s94 = sphi 0, %s80
      %s98 = sphi 0, %s98
      %s100 = sphi 0, %s98
      %s101 = sphi 0, %s100
      %s115 = sphi 0, %s101
      %s119 = sphi 0, %s119
      %s121 = sphi 0, %s119
      %s122 = sphi 0, %s121
      %s136 = sphi 0, %s122
      %s140 = sphi 0, %s140
      %s142 = sphi 0, %s140
      %s143 = sphi 0, %s142
      %s157 = sphi 0, %s143
      %s161 = sphi 0, %s161
      %s163 = sphi 0, %s161
      %s164 = sphi 0, %s163
      %s178 = sphi 0, %s164
      %s182 = sphi 0, %s182
      %s184 = sphi 0, %s182
      %s185 = sphi 0, %s184
      %s199 = sphi 0, %s185
      %s203 = sphi 0, %s203
      %s205 = sphi 0, %s203
      %s206 = sphi 0, %s205
      %s220 = sphi 0, %s206
      %s224 = sphi 0, %s224
      %s226 = sphi 0, %s224
      %s227 = sphi 0, %s226
      %s241 = sphi 0, %s227
      %s245 = sphi 0, %s245
      %s247 = sphi 0, %s245
      %s248 = sphi 0, %s247
      %s262 = sphi 0, %s248
      %s266 = sphi 0, %s266
      %s268 = sphi 0, %s266
      %s269 = sphi 0, %s268
      %s283 = sphi 0, %s269
      %s287 = sphi 0, %s287
      %s289 = sphi 0, %s287
      %s290 = sphi 0, %s289
      %s304 = sphi 0, %s290
      %s310 = sphi 0, %s312
      %s313 = sphi 0, %s310
      %s314 = sphi 0, %s313
      %s330 = sphi 0, %s314
    $region4: #{tpu_custom_call.1} parent=1 // loop_header_branch
      %25 = sbr.rel (%p23) target = $region8
    $region5: #{tpu_custom_call.1} parent=1 // loop_body
      %s27 = ssub.s32 %s22, 1
      %s28 = ssub.s32 %s22, 2
      %s29 = sadd.s32 %s22, 1
      %s30 = ssub.s32 %s22, %s29
      %p31 = scmp.eq.s32.totalorder %s30, 0
      %s33 = sadd.s32 %s32, 1
      %s34 = scalar_select %p31, %s32, %s33
      %p37 = pneg %p31
      %p38 = scmp.eq.s32.totalorder %s22, 1
      %p39 = por %p37, %p38
      %p40 = scmp.ne.s32.totalorder %s32, %s35
      %p41 = scmp.eq.s32.totalorder %s22, 0
      %p42 = por %p40, %p41
      %p43 = scmp.ne.s32.totalorder %s32, %s35
      %p44 = scmp.eq.s32.totalorder %s27, 1
      %p45 = por %p43, %p44
      %p46 = scmp.ne.s32.totalorder %s35, %s36
      %p47 = scmp.eq.s32.totalorder %s27, 0
      %p48 = por %p46, %p47
      %p49 = scmp.ne.s32.totalorder %s35, %s36
      %p50 = scmp.eq.s32.totalorder %s28, 1
      %p51 = por %p49, %p50
      %p53 = scmp.ne.s32.totalorder %s36, %s52
      %p54 = scmp.eq.s32.totalorder %s28, 0
      %p55 = por %p53, %p54
      %s57 = sadd.s32 %s56, 1
      %p60 = scmp.eq.s32.totalorder %s22, 1
      %p61 = scmp.ne.s32.totalorder %s56, %s58
      %p62 = scmp.eq.s32.totalorder %s22, 0
      %p63 = por %p61, %p62
      %p64 = scmp.ne.s32.totalorder %s56, %s58
      %p65 = scmp.eq.s32.totalorder %s27, 1
      %p66 = por %p64, %p65
      %p67 = scmp.ne.s32.totalorder %s58, %s59
      %p68 = scmp.eq.s32.totalorder %s27, 0
      %p69 = por %p67, %p68
      %p70 = scmp.ne.s32.totalorder %s58, %s59
      %p71 = scmp.eq.s32.totalorder %s28, 1
      %p72 = por %p70, %p71
      %p74 = scmp.ne.s32.totalorder %s59, %s73
      %p75 = scmp.eq.s32.totalorder %s28, 0
      %p76 = por %p74, %p75
      %s78 = sadd.s32 %s77, 1
      %p81 = scmp.eq.s32.totalorder %s22, 1
      %p82 = scmp.ne.s32.totalorder %s77, %s79
      %p83 = scmp.eq.s32.totalorder %s22, 0
      %p84 = por %p82, %p83
      %p85 = scmp.ne.s32.totalorder %s77, %s79
      %p86 = scmp.eq.s32.totalorder %s27, 1
      %p87 = por %p85, %p86
      %p88 = scmp.ne.s32.totalorder %s79, %s80
      %p89 = scmp.eq.s32.totalorder %s27, 0
      %p90 = por %p88, %p89
      %p91 = scmp.ne.s32.totalorder %s79, %s80
      %p92 = scmp.eq.s32.totalorder %s28, 1
      %p93 = por %p91, %p92
      %p95 = scmp.ne.s32.totalorder %s80, %s94
      %p96 = scmp.eq.s32.totalorder %s28, 0
      %p97 = por %p95, %p96
      %s99 = sadd.s32 %s98, 1
      %p102 = scmp.eq.s32.totalorder %s22, 1
      %p103 = scmp.ne.s32.totalorder %s98, %s100
      %p104 = scmp.eq.s32.totalorder %s22, 0
      %p105 = por %p103, %p104
      %p106 = scmp.ne.s32.totalorder %s98, %s100
      %p107 = scmp.eq.s32.totalorder %s27, 1
      %p108 = por %p106, %p107
      %p109 = scmp.ne.s32.totalorder %s100, %s101
      %p110 = scmp.eq.s32.totalorder %s27, 0
      %p111 = por %p109, %p110
      %p112 = scmp.ne.s32.totalorder %s100, %s101
      %p113 = scmp.eq.s32.totalorder %s28, 1
      %p114 = por %p112, %p113
      %p116 = scmp.ne.s32.totalorder %s101, %s115
      %p117 = scmp.eq.s32.totalorder %s28, 0
      %p118 = por %p116, %p117
      %s120 = sadd.s32 %s119, 1
      %p123 = scmp.eq.s32.totalorder %s22, 1
      %p124 = scmp.ne.s32.totalorder %s119, %s121
      %p125 = scmp.eq.s32.totalorder %s22, 0
      %p126 = por %p124, %p125
      %p127 = scmp.ne.s32.totalorder %s119, %s121
      %p128 = scmp.eq.s32.totalorder %s27, 1
      %p129 = por %p127, %p128
      %p130 = scmp.ne.s32.totalorder %s121, %s122
      %p131 = scmp.eq.s32.totalorder %s27, 0
      %p132 = por %p130, %p131
      %p133 = scmp.ne.s32.totalorder %s121, %s122
      %p134 = scmp.eq.s32.totalorder %s28, 1
      %p135 = por %p133, %p134
      %p137 = scmp.ne.s32.totalorder %s122, %s136
      %p138 = scmp.eq.s32.totalorder %s28, 0
      %p139 = por %p137, %p138
      %s141 = sadd.s32 %s140, 1
      %p144 = scmp.eq.s32.totalorder %s22, 1
      %p145 = scmp.ne.s32.totalorder %s140, %s142
      %p146 = scmp.eq.s32.totalorder %s22, 0
      %p147 = por %p145, %p146
      %p148 = scmp.ne.s32.totalorder %s140, %s142
      %p149 = scmp.eq.s32.totalorder %s27, 1
      %p150 = por %p148, %p149
      %p151 = scmp.ne.s32.totalorder %s142, %s143
      %p152 = scmp.eq.s32.totalorder %s27, 0
      %p153 = por %p151, %p152
      %p154 = scmp.ne.s32.totalorder %s142, %s143
      %p155 = scmp.eq.s32.totalorder %s28, 1
      %p156 = por %p154, %p155
      %p158 = scmp.ne.s32.totalorder %s143, %s157
      %p159 = scmp.eq.s32.totalorder %s28, 0
      %p160 = por %p158, %p159
      %s162 = sadd.s32 %s161, 1
      %p165 = scmp.eq.s32.totalorder %s22, 1
      %p166 = scmp.ne.s32.totalorder %s161, %s163
      %p167 = scmp.eq.s32.totalorder %s22, 0
      %p168 = por %p166, %p167
      %p169 = scmp.ne.s32.totalorder %s161, %s163
      %p170 = scmp.eq.s32.totalorder %s27, 1
      %p171 = por %p169, %p170
      %p172 = scmp.ne.s32.totalorder %s163, %s164
      %p173 = scmp.eq.s32.totalorder %s27, 0
      %p174 = por %p172, %p173
      %p175 = scmp.ne.s32.totalorder %s163, %s164
      %p176 = scmp.eq.s32.totalorder %s28, 1
      %p177 = por %p175, %p176
      %p179 = scmp.ne.s32.totalorder %s164, %s178
      %p180 = scmp.eq.s32.totalorder %s28, 0
      %p181 = por %p179, %p180
      %s183 = sadd.s32 %s182, 1
      %p186 = scmp.eq.s32.totalorder %s22, 1
      %p187 = scmp.ne.s32.totalorder %s182, %s184
      %p188 = scmp.eq.s32.totalorder %s22, 0
      %p189 = por %p187, %p188
      %p190 = scmp.ne.s32.totalorder %s182, %s184
      %p191 = scmp.eq.s32.totalorder %s27, 1
      %p192 = por %p190, %p191
      %p193 = scmp.ne.s32.totalorder %s184, %s185
      %p194 = scmp.eq.s32.totalorder %s27, 0
      %p195 = por %p193, %p194
      %p196 = scmp.ne.s32.totalorder %s184, %s185
      %p197 = scmp.eq.s32.totalorder %s28, 1
      %p198 = por %p196, %p197
      %p200 = scmp.ne.s32.totalorder %s185, %s199
      %p201 = scmp.eq.s32.totalorder %s28, 0
      %p202 = por %p200, %p201
      %s204 = sadd.s32 %s203, 1
      %p207 = scmp.eq.s32.totalorder %s22, 1
      %p208 = scmp.ne.s32.totalorder %s203, %s205
      %p209 = scmp.eq.s32.totalorder %s22, 0
      %p210 = por %p208, %p209
      %p211 = scmp.ne.s32.totalorder %s203, %s205
      %p212 = scmp.eq.s32.totalorder %s27, 1
      %p213 = por %p211, %p212
      %p214 = scmp.ne.s32.totalorder %s205, %s206
      %p215 = scmp.eq.s32.totalorder %s27, 0
      %p216 = por %p214, %p215
      %p217 = scmp.ne.s32.totalorder %s205, %s206
      %p218 = scmp.eq.s32.totalorder %s28, 1
      %p219 = por %p217, %p218
      %p221 = scmp.ne.s32.totalorder %s206, %s220
      %p222 = scmp.eq.s32.totalorder %s28, 0
      %p223 = por %p221, %p222
      %s225 = sadd.s32 %s224, 1
      %p228 = scmp.eq.s32.totalorder %s22, 1
      %p229 = scmp.ne.s32.totalorder %s224, %s226
      %p230 = scmp.eq.s32.totalorder %s22, 0
      %p231 = por %p229, %p230
      %p232 = scmp.ne.s32.totalorder %s224, %s226
      %p233 = scmp.eq.s32.totalorder %s27, 1
      %p234 = por %p232, %p233
      %p235 = scmp.ne.s32.totalorder %s226, %s227
      %p236 = scmp.eq.s32.totalorder %s27, 0
      %p237 = por %p235, %p236
      %p238 = scmp.ne.s32.totalorder %s226, %s227
      %p239 = scmp.eq.s32.totalorder %s28, 1
      %p240 = por %p238, %p239
      %p242 = scmp.ne.s32.totalorder %s227, %s241
      %p243 = scmp.eq.s32.totalorder %s28, 0
      %p244 = por %p242, %p243
      %s246 = sadd.s32 %s245, 1
      %p249 = scmp.eq.s32.totalorder %s22, 1
      %p250 = scmp.ne.s32.totalorder %s245, %s247
      %p251 = scmp.eq.s32.totalorder %s22, 0
      %p252 = por %p250, %p251
      %p253 = scmp.ne.s32.totalorder %s245, %s247
      %p254 = scmp.eq.s32.totalorder %s27, 1
      %p255 = por %p253, %p254
      %p256 = scmp.ne.s32.totalorder %s247, %s248
      %p257 = scmp.eq.s32.totalorder %s27, 0
      %p258 = por %p256, %p257
      %p259 = scmp.ne.s32.totalorder %s247, %s248
      %p260 = scmp.eq.s32.totalorder %s28, 1
      %p261 = por %p259, %p260
      %p263 = scmp.ne.s32.totalorder %s248, %s262
      %p264 = scmp.eq.s32.totalorder %s28, 0
      %p265 = por %p263, %p264
      %s267 = sadd.s32 %s266, 1
      %p270 = scmp.eq.s32.totalorder %s22, 1
      %p271 = scmp.ne.s32.totalorder %s266, %s268
      %p272 = scmp.eq.s32.totalorder %s22, 0
      %p273 = por %p271, %p272
      %p274 = scmp.ne.s32.totalorder %s266, %s268
      %p275 = scmp.eq.s32.totalorder %s27, 1
      %p276 = por %p274, %p275
      %p277 = scmp.ne.s32.totalorder %s268, %s269
      %p278 = scmp.eq.s32.totalorder %s27, 0
      %p279 = por %p277, %p278
      %p280 = scmp.ne.s32.totalorder %s268, %s269
      %p281 = scmp.eq.s32.totalorder %s28, 1
      %p282 = por %p280, %p281
      %p284 = scmp.ne.s32.totalorder %s269, %s283
      %p285 = scmp.eq.s32.totalorder %s28, 0
      %p286 = por %p284, %p285
      %s288 = sadd.s32 %s287, 1
      %p291 = scmp.eq.s32.totalorder %s22, 1
      %p292 = scmp.ne.s32.totalorder %s287, %s289
      %p293 = scmp.eq.s32.totalorder %s22, 0
      %p294 = por %p292, %p293
      %p295 = scmp.ne.s32.totalorder %s287, %s289
      %p296 = scmp.eq.s32.totalorder %s27, 1
      %p297 = por %p295, %p296
      %p298 = scmp.ne.s32.totalorder %s289, %s290
      %p299 = scmp.eq.s32.totalorder %s27, 0
      %p300 = por %p298, %p299
      %p301 = scmp.ne.s32.totalorder %s289, %s290
      %p302 = scmp.eq.s32.totalorder %s28, 1
      %p303 = por %p301, %p302
      %p305 = scmp.ne.s32.totalorder %s290, %s304
      %p306 = scmp.eq.s32.totalorder %s28, 0
      %p307 = por %p305, %p306
      %s308 = ssub.s32 %s22, %s29
      %p309 = scmp.eq.s32.totalorder %s308, 0
      %s311 = sadd.s32 %s310, 1
      %s312 = scalar_select %p309, %s310, %s311
      %p315 = pneg %p309
      %p316 = scmp.eq.s32.totalorder %s22, 1
      %p317 = por %p315, %p316
      %p318 = scmp.ne.s32.totalorder %s310, %s313
      %p319 = scmp.eq.s32.totalorder %s22, 0
      %p320 = por %p318, %p319
      %p321 = scmp.ne.s32.totalorder %s310, %s313
      %p322 = scmp.eq.s32.totalorder %s27, 1
      %p323 = por %p321, %p322
      %p324 = scmp.ne.s32.totalorder %s313, %s314
      %p325 = scmp.eq.s32.totalorder %s27, 0
      %p326 = por %p324, %p325
      %p327 = scmp.ne.s32.totalorder %s313, %s314
      %p328 = scmp.eq.s32.totalorder %s28, 1
      %p329 = por %p327, %p328
      %p331 = scmp.ne.s32.totalorder %s314, %s330
      %p332 = scmp.eq.s32.totalorder %s28, 0
      %p333 = por %p331, %p332
      %p334 = scmp.le.s32.totalorder 1, %s22
      %p335 = scmp.lt.s32.totalorder %s22, 3
      %p336 = pnand %p334, %p335
      %p337 = pneg %p336
      // Predicated region
      $region9: #{tpu_custom_call.1} parent=5 // pred_check
        _
      $region10: #{tpu_custom_call.1} parent=5 // pred_check_branch
        %339 = sbr.rel (%p336) target = $region12
      $region11: #{tpu_custom_call.1} parent=5 // pred_region
        %s340 = ssub.s32 %s22, 1
        // Predicated region
        $region13: #{tpu_custom_call.1} parent=11 // pred_check
          %p341 = pneg %p69
        $region14: #{tpu_custom_call.1} parent=11 // pred_check_branch
          %343 = sbr.rel (%p341) target = $region16
        $region15: #{tpu_custom_call.1} parent=11 // pred_region
          _
        $region16: #{tpu_custom_call.1} parent=11 // pred_fallthru
          _
        // Predicated region
        $region17: #{tpu_custom_call.1} parent=11 // pred_check
          %p344 = pneg %p90
        $region18: #{tpu_custom_call.1} parent=11 // pred_check_branch
          %346 = sbr.rel (%p344) target = $region20
        $region19: #{tpu_custom_call.1} parent=11 // pred_region
          _
        $region20: #{tpu_custom_call.1} parent=11 // pred_fallthru
          _
        // Predicated region
        $region21: #{tpu_custom_call.1} parent=11 // pred_check
          %p347 = pneg %p111
        $region22: #{tpu_custom_call.1} parent=11 // pred_check_branch
          %349 = sbr.rel (%p347) target = $region24
        $region23: #{tpu_custom_call.1} parent=11 // pred_region
          _
        $region24: #{tpu_custom_call.1} parent=11 // pred_fallthru
          _
        // Predicated region
        $region25: #{tpu_custom_call.1} parent=11 // pred_check
          %p350 = pneg %p132
        $region26: #{tpu_custom_call.1} parent=11 // pred_check_branch
          %352 = sbr.rel (%p350) target = $region28
        $region27: #{tpu_custom_call.1} parent=11 // pred_region
          _
        $region28: #{tpu_custom_call.1} parent=11 // pred_fallthru
          _
        // Predicated region
        $region29: #{tpu_custom_call.1} parent=11 // pred_check
          %p353 = pneg %p153
        $region30: #{tpu_custom_call.1} parent=11 // pred_check_branch
          %355 = sbr.rel (%p353) target = $region32
        $region31: #{tpu_custom_call.1} parent=11 // pred_region
          _
        $region32: #{tpu_custom_call.1} parent=11 // pred_fallthru
          _
        // Predicated region
        $region33: #{tpu_custom_call.1} parent=11 // pred_check
          %p356 = pneg %p174
        $region34: #{tpu_custom_call.1} parent=11 // pred_check_branch
          %358 = sbr.rel (%p356) target = $region36
        $region35: #{tpu_custom_call.1} parent=11 // pred_region
          _
        $region36: #{tpu_custom_call.1} parent=11 // pred_fallthru
          _
        // Predicated region
        $region37: #{tpu_custom_call.1} parent=11 // pred_check
          %p359 = pneg %p195
        $region38: #{tpu_custom_call.1} parent=11 // pred_check_branch
          %361 = sbr.rel (%p359) target = $region40
        $region39: #{tpu_custom_call.1} parent=11 // pred_region
          _
        $region40: #{tpu_custom_call.1} parent=11 // pred_fallthru
          _
        // Predicated region
        $region41: #{tpu_custom_call.1} parent=11 // pred_check
          %p362 = pneg %p216
        $region42: #{tpu_custom_call.1} parent=11 // pred_check_branch
          %364 = sbr.rel (%p362) target = $region44
        $region43: #{tpu_custom_call.1} parent=11 // pred_region
          _
        $region44: #{tpu_custom_call.1} parent=11 // pred_fallthru
          _
        // Predicated region
        $region45: #{tpu_custom_call.1} parent=11 // pred_check
          %p365 = pneg %p237
        $region46: #{tpu_custom_call.1} parent=11 // pred_check_branch
          %367 = sbr.rel (%p365) target = $region48
        $region47: #{tpu_custom_call.1} parent=11 // pred_region
          _
        $region48: #{tpu_custom_call.1} parent=11 // pred_fallthru
          _
        // Predicated region
        $region49: #{tpu_custom_call.1} parent=11 // pred_check
          %p368 = pneg %p258
        $region50: #{tpu_custom_call.1} parent=11 // pred_check_branch
          %370 = sbr.rel (%p368) target = $region52
        $region51: #{tpu_custom_call.1} parent=11 // pred_region
          _
        $region52: #{tpu_custom_call.1} parent=11 // pred_fallthru
          _
        // Predicated region
        $region53: #{tpu_custom_call.1} parent=11 // pred_check
          %p371 = pneg %p279
        $region54: #{tpu_custom_call.1} parent=11 // pred_check_branch
          %373 = sbr.rel (%p371) target = $region56
        $region55: #{tpu_custom_call.1} parent=11 // pred_region
          _
        $region56: #{tpu_custom_call.1} parent=11 // pred_fallthru
          _
        // Predicated region
        $region57: #{tpu_custom_call.1} parent=11 // pred_check
          %p374 = pneg %p300
        $region58: #{tpu_custom_call.1} parent=11 // pred_check_branch
          %376 = sbr.rel (%p374) target = $region60
        $region59: #{tpu_custom_call.1} parent=11 // pred_region
          _
        $region60: #{tpu_custom_call.1} parent=11 // pred_fallthru
          _
      $region12: #{tpu_custom_call.1} parent=5 // pred_fallthru
        _
      %p377 = scmp.lt.s32.totalorder %s22, 2
      // Predicated region
      $region61: #{tpu_custom_call.1} parent=5 // pred_check
        %p378 = pneg %p377
      $region62: #{tpu_custom_call.1} parent=5 // pred_check_branch
        %380 = sbr.rel (%p378) target = $region64
      $region63: #{tpu_custom_call.1} parent=5 // pred_region
        // Predicated region
        $region65: #{tpu_custom_call.1} parent=63 // pred_check
          %p381 = pneg %p42
        $region66: #{tpu_custom_call.1} parent=63 // pred_check_branch
          %383 = sbr.rel (%p381) target = $region68
        $region67: #{tpu_custom_call.1} parent=63 // pred_region
          %s384 = smul.u32 2, %s22
          %p385 = scmp.lt.s32.totalorder %s384, 3
          %s386 = scalar_select %p385, %s384, 3
          %s387 = smul.addr %s386, 8
          %s388 = scalar_lea.vmem %s0, %s387
          %s389 = smul.u32 2, %s22
        $region68: #{tpu_custom_call.1} parent=63 // pred_fallthru
          _
      $region64: #{tpu_custom_call.1} parent=5 // pred_fallthru
        _
      %p390 = scmp.le.s32.totalorder 1, %s22
      %p391 = scmp.lt.s32.totalorder %s22, 3
      %p392 = pnand %p390, %p391
      %p393 = pneg %p392
      // Predicated region
      $region69: #{tpu_custom_call.1} parent=5 // pred_check
        _
      $region70: #{tpu_custom_call.1} parent=5 // pred_check_branch
        %395 = sbr.rel (%p392) target = $region72
      $region71: #{tpu_custom_call.1} parent=5 // pred_region
        %s396 = ssub.s32 %s22, 1
        %s397 = smul.u32 2, %s27
        %p398 = scmp.lt.s32.totalorder %s397, 3
        %s399 = scalar_select %p398, %s397, 3
        %s400 = smul.addr %s399, 8
        %s401 = scalar_lea.vmem %s0, %s400
        %p402 = pneg %p48
        %p403 = pneg %p45
        %p404 = pneg %p69
        %p405 = pneg %p66
        %p406 = pneg %p90
        %p407 = pneg %p87
        %p408 = pneg %p111
        %p409 = pneg %p108
        %p410 = pneg %p132
        %p411 = pneg %p129
        %p412 = pneg %p153
        %p413 = pneg %p150
        %p414 = pneg %p174
        %p415 = pneg %p171
        %p416 = pneg %p195
        %p417 = pneg %p192
        %p418 = pneg %p216
        %p419 = pneg %p213
        %p420 = pneg %p237
        %p421 = pneg %p234
        %p422 = pneg %p258
        %p423 = pneg %p255
        %p424 = pneg %p279
        %p425 = pneg %p276
        %p426 = pneg %p300
        %p427 = pneg %p297
        %p428 = pneg %p326
        %p429 = pneg %p323
        %s430 = sand.u32 %s313, 1
        %s431 = scalar_lea.sflag [#allocation4], %s430
        %s432 = sand.u32 %s313, 1
        %s433 = smul.addr %s432, 16
        %s434 = scalar_lea.vmem [#allocation3], %s433
        %s435 = smul.u32 2, %s27
        %p436 = scmp.lt.s32.totalorder %s435, 3
        %s437 = scalar_select %p436, %s435, 3
        %s438 = smul.addr %s437, 8
        %s439 = scalar_lea.vmem %s0, %s438
        %s440 = smul.u32 2, %s27
        %s441 = smul.u32 2, %s27
        %v443 = vld [vmem:[%s439] sm:$0xff]
        %v444 = vld [vmem:[%s439 + $0x8] sm:$0xff]
        %v445 = vld [vmem:[%s1] sm:$0x1]
        %v446 = vld [vmem:[%s2] sm:$0x1]
        %vm447 = vcmask 261120
        %v448 = vsel %vm447, %v443, 0.0
        %449 = vadd.xlane.f32.xlu0 %v448
        %v450 = vpop.xlane.xlu0 %449
        %v451 = vsel %vm447, %v444, 0.0
        %452 = vadd.xlane.f32.xlu0 %v451
        %v453 = vpop.xlane.xlu0 %452
        %v454 = vrcp.pop 32.0
        %v455 = vmul.f32 %v450, %v454
        %v456 = vmul.f32 %v453, %v454
        %v457 = vsub.f32 %v443, %v455
        %v458 = vsub.f32 %v444, %v456
        %v459 = vmul.f32 %v457, %v457
        %v460 = vmul.f32 %v458, %v458
        %v461 = vsel %vm447, %v459, 0.0
        %462 = vadd.xlane.f32.xlu0 %v461
        %v463 = vpop.xlane.xlu0 %462
        %v464 = vsel %vm447, %v460, 0.0
        %465 = vadd.xlane.f32.xlu0 %v464
        %v466 = vpop.xlane.xlu0 %465
        %v467 = vmul.f32 %v463, %v454
        %v468 = vmul.f32 %v466, %v454
        %v469 = vadd.f32 %v467, 1e-05
        %v470 = vadd.f32 %v468, 1e-05
        %v471 = vrsqrt.pop %v469
        %v472 = vrsqrt.pop %v470
        %v473 = vmul.f32 %v457, %v471
        %v474 = vmul.f32 %v458, %v472
        %v476 = vlaneseq
        %v477 = vshrl.u32 %v476, 7
        %v478 = vsub.s32 0, %v477
        %v479 = vrot.slane %v445, %v478
        %v481 = vmul.f32 %v473, %v479
        %v482 = vmul.f32 %v474, %v479
        %v484 = vlaneseq
        %v485 = vshrl.u32 %v484, 7
        %v486 = vsub.s32 0, %v485
        %v487 = vrot.slane %v446, %v486
        %v489 = vadd.f32 %v481, %v487
        %v490 = vadd.f32 %v482, %v487
        %v491 = vpack.c.bf16 %v490, %v489
        %v492 = vld [vmem:[%s3] sm:$0xf]
        %v493 = vld [vmem:[%s3 + $0x4] sm:$0xf]
        %v494 = vld [vmem:[%s3 + $0x8] sm:$0xf]
        %v495 = vld [vmem:[%s3 + $0xc] sm:$0xf]
        %v496 = vld [vmem:[%s4] sm:$0x1]
        %v498 = vlaneseq
        %v499 = vshrl.u32 %v498, 7
        %v500 = vsub.s32 0, %v499
        %v501 = vrot.slane %v496, %v500
        %v507 = vunpack.c.l.b16 %v492
        %v508 = vunpack.c.l.b16 %v493
        %v509 = vunpack.c.l.b16 %v494
        %v510 = vunpack.c.l.b16 %v495
        %v511 = vpack.c.b16 %v508, %v507
        %v512 = vpack.c.b16 %v510, %v509
        %v516 = vsel %vm447, %v491, 0
        %518 = vmatprep.subr.bf16.mxu0 0
        %519 = vmatpush1.bf16.msra.mxu0 %v511
        %520 = vmatprep.subr.bf16.mxu0 0
        %521 = vmatpush1.bf16.msra.mxu0 %v512
        %522 = vmatprep.subr.bf16.mxu0 0
        %523 = vmatpush1.bf16.msra.mxu0 0
        %524 = vmatprep.subr.bf16.mxu0 0
        %525 = vmatpush1.bf16.msra.mxu0 0
        %526 = vmatprep.subr.bf16.mxu0 0
        %527 = vmatpush1.bf16.msra.mxu0 0
        %528 = vmatprep.subr.bf16.mxu0 0
        %529 = vmatpush1.bf16.msra.mxu0 0
        %530 = vmatprep.subr.bf16.mxu0 0
        %531 = vmatpush1.bf16.msra.mxu0 0
        %532 = vmatprep.subr.bf16.mxu0 0
        %533 = vmatpush1.bf16.msra.mxu0 0
        %534 = vmatprep.subr.bf16.mxu0 0
        %535 = vmatpush1.bf16.msra.mxu0 0
        %536 = vmatprep.subr.bf16.mxu0 0
        %537 = vmatpush1.bf16.msra.mxu0 0
        %538 = vmatprep.subr.bf16.mxu0 0
        %539 = vmatpush1.bf16.msra.mxu0 0
        %540 = vmatprep.subr.bf16.mxu0 0
        %541 = vmatpush1.bf16.msra.mxu0 0
        %542 = vmatprep.subr.bf16.mxu0 0
        %543 = vmatpush1.bf16.msra.mxu0 0
        %544 = vmatprep.subr.bf16.mxu0 0
        %545 = vmatpush1.bf16.msra.mxu0 0
        %546 = vmatprep.subr.bf16.mxu0 0
        %547 = vmatpush1.bf16.msra.mxu0 0
        %548 = vmatprep.subr.bf16.mxu0 0
        %549 = vmatpush1.bf16.msra.mxu0 0
        %550 = vmatprep.mubr.bf16.mxu0 0
        %551 = vmatmul.mubr.bf16.gmra.mrb[0].mxu0 %v516
        %v552 = vpop.f32.mrb[0].mxu0
        %v553 = vadd.f32 %v501, %v552
        %v554 = vpop.f32.mrb[0].mxu0
        %v555 = vpop.f32.mrb[0].mxu0
        %v556 = vadd.f32 %v501, %v555
        %v557 = vpop.f32.mrb[0].mxu0
        %558 = vdwg.mxu0
        %v559 = vpack.c.bf16 %v553, %v553
        %v560 = vpack.c.bf16 %v556, %v556
        %562 = vrot.lane.b32.xlu0 %v559, 96
        %v563 = vpop.permute.xlu0 %562
        %vm564 = vcmask 64512
        %v566 = vsel %vm564, %v559, 0
        %v569 = vsel %vm564, %v563, 0
        %571 = vmatprep.subr.bf16.mxu0 0
        %572 = vmatpush1.bf16.xpose.msra.mxu0 %v569
        %573 = vmatprep.subr.bf16.mxu0 0
        %574 = vmatpush1.bf16.xpose.msra.mxu0 0
        %575 = vmatprep.subr.bf16.mxu0 0
        %576 = vmatpush1.bf16.xpose.msra.mxu0 0
        %577 = vmatprep.subr.bf16.mxu0 0
        %578 = vmatpush1.bf16.xpose.msra.mxu0 0
        %579 = vmatprep.subr.bf16.mxu0 0
        %580 = vmatpush1.bf16.xpose.msra.mxu0 0
        %581 = vmatprep.subr.bf16.mxu0 0
        %582 = vmatpush1.bf16.xpose.msra.mxu0 0
        %583 = vmatprep.subr.bf16.mxu0 0
        %584 = vmatpush1.bf16.xpose.msra.mxu0 0
        %585 = vmatprep.subr.bf16.mxu0 0
        %586 = vmatpush1.bf16.xpose.msra.mxu0 0
        %587 = vmatprep.subr.bf16.mxu0 0
        %588 = vmatpush1.bf16.xpose.msra.mxu0 0
        %589 = vmatprep.subr.bf16.mxu0 0
        %590 = vmatpush1.bf16.xpose.msra.mxu0 0
        %591 = vmatprep.subr.bf16.mxu0 0
        %592 = vmatpush1.bf16.xpose.msra.mxu0 0
        %593 = vmatprep.subr.bf16.mxu0 0
        %594 = vmatpush1.bf16.xpose.msra.mxu0 0
        %595 = vmatprep.subr.bf16.mxu0 0
        %596 = vmatpush1.bf16.xpose.msra.mxu0 0
        %597 = vmatprep.subr.bf16.mxu0 0
        %598 = vmatpush1.bf16.xpose.msra.mxu0 0
        %599 = vmatprep.subr.bf16.mxu0 0
        %600 = vmatpush1.bf16.xpose.msra.mxu0 0
        %601 = vmatprep.subr.bf16.mxu0 0
        %602 = vmatpush1.bf16.xpose.msra.mxu0 0
        %603 = vmatprep.mubr.bf16.mxu0 0
        %604 = vmatmul.mubr.bf16.gmra.mrb[0].mxu0 %v566
        %v605 = vpop.f32.mrb[0].mxu0
        %v606 = vadd.f32 0.0, %v605
        %v607 = vpop.f32.mrb[0].mxu0
        %v608 = vpop.f32.mrb[0].mxu0
        %v609 = vpop.f32.mrb[0].mxu0
        %610 = vdwg.mxu0
        %612 = vrot.lane.b32.xlu0 %v560, 96
        %v613 = vpop.permute.xlu0 %612
        %v615 = vsel %vm564, %v560, 0
        %v618 = vsel %vm564, %v613, 0
        %620 = vmatprep.subr.bf16.mxu0 0
        %621 = vmatpush1.bf16.xpose.msra.mxu0 %v618
        %622 = vmatprep.subr.bf16.mxu0 0
        %623 = vmatpush1.bf16.xpose.msra.mxu0 0
        %624 = vmatprep.subr.bf16.mxu0 0
        %625 = vmatpush1.bf16.xpose.msra.mxu0 0
        %626 = vmatprep.subr.bf16.mxu0 0
        %627 = vmatpush1.bf16.xpose.msra.mxu0 0
        %628 = vmatprep.subr.bf16.mxu0 0
        %629 = vmatpush1.bf16.xpose.msra.mxu0 0
        %630 = vmatprep.subr.bf16.mxu0 0
        %631 = vmatpush1.bf16.xpose.msra.mxu0 0
        %632 = vmatprep.subr.bf16.mxu0 0
        %633 = vmatpush1.bf16.xpose.msra.mxu0 0
        %634 = vmatprep.subr.bf16.mxu0 0
        %635 = vmatpush1.bf16.xpose.msra.mxu0 0
        %636 = vmatprep.subr.bf16.mxu0 0
        %637 = vmatpush1.bf16.xpose.msra.mxu0 0
        %638 = vmatprep.subr.bf16.mxu0 0
        %639 = vmatpush1.bf16.xpose.msra.mxu0 0
        %640 = vmatprep.subr.bf16.mxu0 0
        %641 = vmatpush1.bf16.xpose.msra.mxu0 0
        %642 = vmatprep.subr.bf16.mxu0 0
        %643 = vmatpush1.bf16.xpose.msra.mxu0 0
        %644 = vmatprep.subr.bf16.mxu0 0
        %645 = vmatpush1.bf16.xpose.msra.mxu0 0
        %646 = vmatprep.subr.bf16.mxu0 0
        %647 = vmatpush1.bf16.xpose.msra.mxu0 0
        %648 = vmatprep.subr.bf16.mxu0 0
        %649 = vmatpush1.bf16.xpose.msra.mxu0 0
        %650 = vmatprep.subr.bf16.mxu0 0
        %651 = vmatpush1.bf16.xpose.msra.mxu0 0
        %652 = vmatprep.mubr.bf16.mxu0 0
        %653 = vmatmul.mubr.bf16.gmra.mrb[0].mxu0 %v615
        %v654 = vpop.f32.mrb[0].mxu0
        %v655 = vadd.f32 0.0, %v654
        %v656 = vpop.f32.mrb[0].mxu0
        %v657 = vpop.f32.mrb[0].mxu0
        %v658 = vpop.f32.mrb[0].mxu0
        %659 = vdwg.mxu0
        %v660 = vmul.f32 %v606, 0.35355338
        %v661 = vmul.f32 %v655, 0.35355338
        %v662 = vsel %vm564, %v660, -inf
        %663 = vmax.xlane.f32.xlu0 %v662
        %v664 = vpop.xlane.xlu0 %663
        %v665 = vsel %vm564, %v661, -inf
        %666 = vmax.xlane.f32.xlu0 %v665
        %v667 = vpop.xlane.xlu0 %666
        %v668 = vsub.f32 %v660, %v664
        %v669 = vsub.f32 %v661, %v667
        %v670 = vmul.f32 %v668, 1.442695
        %v671 = vpow.pop %v670
        %v672 = vmul.f32 %v669, 1.442695
        %v673 = vpow.pop %v672
        %v674 = vsel %vm564, %v671, 0.0
        %675 = vadd.xlane.f32.xlu0 %v674
        %v676 = vpop.xlane.xlu0 %675
        %v677 = vsel %vm564, %v673, 0.0
        %678 = vadd.xlane.f32.xlu0 %v677
        %v679 = vpop.xlane.xlu0 %678
        %v680 = vrcp.pop %v676
        %v681 = vrcp.pop %v679
        %v682 = vmul.f32 %v671, %v680
        %v683 = vmul.f32 %v673, %v681
        %v684 = vpack.c.bf16 %v682, %v682
        %v685 = vpack.c.bf16 %v683, %v683
        %686 = vrot.lane.b32.xlu0 %v559, 64
        %v687 = vpop.permute.xlu0 %686
        %v689 = vsel %vm564, %v684, 0
        %vm691 = vcmask 1043456
        %v693 = vsel %vm691, %v687, 0
        %695 = vmatprep.subr.bf16.mxu0 0
        %696 = vmatpush1.bf16.msra.mxu0 %v693
        %697 = vmatprep.subr.bf16.mxu0 0
        %698 = vmatpush1.bf16.msra.mxu0 0
        %699 = vmatprep.subr.bf16.mxu0 0
        %700 = vmatpush1.bf16.msra.mxu0 0
        %701 = vmatprep.subr.bf16.mxu0 0
        %702 = vmatpush1.bf16.msra.mxu0 0
        %703 = vmatprep.subr.bf16.mxu0 0
        %704 = vmatpush1.bf16.msra.mxu0 0
        %705 = vmatprep.subr.bf16.mxu0 0
        %706 = vmatpush1.bf16.msra.mxu0 0
        %707 = vmatprep.subr.bf16.mxu0 0
        %708 = vmatpush1.bf16.msra.mxu0 0
        %709 = vmatprep.subr.bf16.mxu0 0
        %710 = vmatpush1.bf16.msra.mxu0 0
        %711 = vmatprep.subr.bf16.mxu0 0
        %712 = vmatpush1.bf16.msra.mxu0 0
        %713 = vmatprep.subr.bf16.mxu0 0
        %714 = vmatpush1.bf16.msra.mxu0 0
        %715 = vmatprep.subr.bf16.mxu0 0
        %716 = vmatpush1.bf16.msra.mxu0 0
        %717 = vmatprep.subr.bf16.mxu0 0
        %718 = vmatpush1.bf16.msra.mxu0 0
        %719 = vmatprep.subr.bf16.mxu0 0
        %720 = vmatpush1.bf16.msra.mxu0 0
        %721 = vmatprep.subr.bf16.mxu0 0
        %722 = vmatpush1.bf16.msra.mxu0 0
        %723 = vmatprep.subr.bf16.mxu0 0
        %724 = vmatpush1.bf16.msra.mxu0 0
        %725 = vmatprep.subr.bf16.mxu0 0
        %726 = vmatpush1.bf16.msra.mxu0 0
        %727 = vmatprep.mubr.bf16.mxu0 0
        %728 = vmatmul.mubr.bf16.gmra.mrb[0].mxu0 %v689
        %v729 = vpop.f32.mrb[0].mxu0
        %v730 = vadd.f32 0.0, %v729
        %v731 = vpop.f32.mrb[0].mxu0
        %v732 = vpop.f32.mrb[0].mxu0
        %v733 = vpop.f32.mrb[0].mxu0
        %734 = vdwg.mxu0
        %735 = vrot.lane.b32.xlu0 %v560, 64
        %v736 = vpop.permute.xlu0 %735
        %v738 = vsel %vm564, %v685, 0
        %v741 = vsel %vm691, %v736, 0
        %743 = vmatprep.subr.bf16.mxu0 0
        %744 = vmatpush1.bf16.msra.mxu0 %v741
        %745 = vmatprep.subr.bf16.mxu0 0
        %746 = vmatpush1.bf16.msra.mxu0 0
        %747 = vmatprep.subr.bf16.mxu0 0
        %748 = vmatpush1.bf16.msra.mxu0 0
        %749 = vmatprep.subr.bf16.mxu0 0
        %750 = vmatpush1.bf16.msra.mxu0 0
        %751 = vmatprep.subr.bf16.mxu0 0
        %752 = vmatpush1.bf16.msra.mxu0 0
        %753 = vmatprep.subr.bf16.mxu0 0
        %754 = vmatpush1.bf16.msra.mxu0 0
        %755 = vmatprep.subr.bf16.mxu0 0
        %756 = vmatpush1.bf16.msra.mxu0 0
        %757 = vmatprep.subr.bf16.mxu0 0
        %758 = vmatpush1.bf16.msra.mxu0 0
        %759 = vmatprep.subr.bf16.mxu0 0
        %760 = vmatpush1.bf16.msra.mxu0 0
        %761 = vmatprep.subr.bf16.mxu0 0
        %762 = vmatpush1.bf16.msra.mxu0 0
        %763 = vmatprep.subr.bf16.mxu0 0
        %764 = vmatpush1.bf16.msra.mxu0 0
        %765 = vmatprep.subr.bf16.mxu0 0
        %766 = vmatpush1.bf16.msra.mxu0 0
        %767 = vmatprep.subr.bf16.mxu0 0
        %768 = vmatpush1.bf16.msra.mxu0 0
        %769 = vmatprep.subr.bf16.mxu0 0
        %770 = vmatpush1.bf16.msra.mxu0 0
        %771 = vmatprep.subr.bf16.mxu0 0
        %772 = vmatpush1.bf16.msra.mxu0 0
        %773 = vmatprep.subr.bf16.mxu0 0
        %774 = vmatpush1.bf16.msra.mxu0 0
        %775 = vmatprep.mubr.bf16.mxu0 0
        %776 = vmatmul.mubr.bf16.gmra.mrb[0].mxu0 %v738
        %v777 = vpop.f32.mrb[0].mxu0
        %v778 = vadd.f32 0.0, %v777
        %v779 = vpop.f32.mrb[0].mxu0
        %v780 = vpop.f32.mrb[0].mxu0
        %v781 = vpop.f32.mrb[0].mxu0
        %782 = vdwg.mxu0
        %783 = vst.msk [vmem:[#allocation2] sm:$0xff] %vm564, %v730
        %784 = vst.msk [vmem:[#allocation2 + $0x8] sm:$0xff] %vm564, %v778
        %785 = vrot.lane.b32.xlu0 %v559, 120
        %v786 = vpop.permute.xlu0 %785
        %787 = vrot.lane.b32.xlu0 %v559, 88
        %v788 = vpop.permute.xlu0 %787
        %v790 = vsel %vm564, %v786, 0
        %v793 = vsel %vm564, %v788, 0
        %795 = vmatprep.subr.bf16.mxu0 0
        %796 = vmatpush1.bf16.xpose.msra.mxu0 %v793
        %797 = vmatprep.subr.bf16.mxu0 0
        %798 = vmatpush1.bf16.xpose.msra.mxu0 0
        %799 = vmatprep.subr.bf16.mxu0 0
        %800 = vmatpush1.bf16.xpose.msra.mxu0 0
        %801 = vmatprep.subr.bf16.mxu0 0
        %802 = vmatpush1.bf16.xpose.msra.mxu0 0
        %803 = vmatprep.subr.bf16.mxu0 0
        %804 = vmatpush1.bf16.xpose.msra.mxu0 0
        %805 = vmatprep.subr.bf16.mxu0 0
        %806 = vmatpush1.bf16.xpose.msra.mxu0 0
        %807 = vmatprep.subr.bf16.mxu0 0
        %808 = vmatpush1.bf16.xpose.msra.mxu0 0
        %809 = vmatprep.subr.bf16.mxu0 0
        %810 = vmatpush1.bf16.xpose.msra.mxu0 0
        %811 = vmatprep.subr.bf16.mxu0 0
        %812 = vmatpush1.bf16.xpose.msra.mxu0 0
        %813 = vmatprep.subr.bf16.mxu0 0
        %814 = vmatpush1.bf16.xpose.msra.mxu0 0
        %815 = vmatprep.subr.bf16.mxu0 0
        %816 = vmatpush1.bf16.xpose.msra.mxu0 0
        %817 = vmatprep.subr.bf16.mxu0 0
        %818 = vmatpush1.bf16.xpose.msra.mxu0 0
        %819 = vmatprep.subr.bf16.mxu0 0
        %820 = vmatpush1.bf16.xpose.msra.mxu0 0
        %821 = vmatprep.subr.bf16.mxu0 0
        %822 = vmatpush1.bf16.xpose.msra.mxu0 0
        %823 = vmatprep.subr.bf16.mxu0 0
        %824 = vmatpush1.bf16.xpose.msra.mxu0 0
        %825 = vmatprep.subr.bf16.mxu0 0
        %826 = vmatpush1.bf16.xpose.msra.mxu0 0
        %827 = vmatprep.mubr.bf16.mxu0 0
        %828 = vmatmul.mubr.bf16.gmra.mrb[0].mxu0 %v790
        %v829 = vpop.f32.mrb[0].mxu0
        %v830 = vadd.f32 0.0, %v829
        %v831 = vpop.f32.mrb[0].mxu0
        %v832 = vpop.f32.mrb[0].mxu0
        %v833 = vpop.f32.mrb[0].mxu0
        %834 = vdwg.mxu0
        %835 = vrot.lane.b32.xlu0 %v560, 120
        %v836 = vpop.permute.xlu0 %835
        %837 = vrot.lane.b32.xlu0 %v560, 88
        %v838 = vpop.permute.xlu0 %837
        %v840 = vsel %vm564, %v836, 0
        %v843 = vsel %vm564, %v838, 0
        %845 = vmatprep.subr.bf16.mxu0 0
        %846 = vmatpush1.bf16.xpose.msra.mxu0 %v843
        %847 = vmatprep.subr.bf16.mxu0 0
        %848 = vmatpush1.bf16.xpose.msra.mxu0 0
        %849 = vmatprep.subr.bf16.mxu0 0
        %850 = vmatpush1.bf16.xpose.msra.mxu0 0
        %851 = vmatprep.subr.bf16.mxu0 0
        %852 = vmatpush1.bf16.xpose.msra.mxu0 0
        %853 = vmatprep.subr.bf16.mxu0 0
        %854 = vmatpush1.bf16.xpose.msra.mxu0 0
        %855 = vmatprep.subr.bf16.mxu0 0
        %856 = vmatpush1.bf16.xpose.msra.mxu0 0
        %857 = vmatprep.subr.bf16.mxu0 0
        %858 = vmatpush1.bf16.xpose.msra.mxu0 0
        %859 = vmatprep.subr.bf16.mxu0 0
        %860 = vmatpush1.bf16.xpose.msra.mxu0 0
        %861 = vmatprep.subr.bf16.mxu0 0
        %862 = vmatpush1.bf16.xpose.msra.mxu0 0
        %863 = vmatprep.subr.bf16.mxu0 0
        %864 = vmatpush1.bf16.xpose.msra.mxu0 0
        %865 = vmatprep.subr.bf16.mxu0 0
        %866 = vmatpush1.bf16.xpose.msra.mxu0 0
        %867 = vmatprep.subr.bf16.mxu0 0
        %868 = vmatpush1.bf16.xpose.msra.mxu0 0
        %869 = vmatprep.subr.bf16.mxu0 0
        %870 = vmatpush1.bf16.xpose.msra.mxu0 0
        %871 = vmatprep.subr.bf16.mxu0 0
        %872 = vmatpush1.bf16.xpose.msra.mxu0 0
        %873 = vmatprep.subr.bf16.mxu0 0
        %874 = vmatpush1.bf16.xpose.msra.mxu0 0
        %875 = vmatprep.subr.bf16.mxu0 0
        %876 = vmatpush1.bf16.xpose.msra.mxu0 0
        %877 = vmatprep.mubr.bf16.mxu0 0
        %878 = vmatmul.mubr.bf16.gmra.mrb[0].mxu0 %v840
        %v879 = vpop.f32.mrb[0].mxu0
        %v880 = vadd.f32 0.0, %v879
        %v881 = vpop.f32.mrb[0].mxu0
        %v882 = vpop.f32.mrb[0].mxu0
        %v883 = vpop.f32.mrb[0].mxu0
        %884 = vdwg.mxu0
        %v885 = vmul.f32 %v830, 0.35355338
        %v886 = vmul.f32 %v880, 0.35355338
        %v887 = vsel %vm564, %v885, -inf
        %888 = vmax.xlane.f32.xlu0 %v887
        %v889 = vpop.xlane.xlu0 %888
        %v890 = vsel %vm564, %v886, -inf
        %891 = vmax.xlane.f32.xlu0 %v890
        %v892 = vpop.xlane.xlu0 %891
        %v893 = vsub.f32 %v885, %v889
        %v894 = vsub.f32 %v886, %v892
        %v895 = vmul.f32 %v893, 1.442695
        %v896 = vpow.pop %v895
        %v897 = vmul.f32 %v894, 1.442695
        %v898 = vpow.pop %v897
        %v899 = vsel %vm564, %v896, 0.0
        %900 = vadd.xlane.f32.xlu0 %v899
        %v901 = vpop.xlane.xlu0 %900
        %v902 = vsel %vm564, %v898, 0.0
        %903 = vadd.xlane.f32.xlu0 %v902
        %v904 = vpop.xlane.xlu0 %903
        %v905 = vrcp.pop %v901
        %v906 = vrcp.pop %v904
        %v907 = vmul.f32 %v896, %v905
        %v908 = vmul.f32 %v898, %v906
        %v909 = vpack.c.bf16 %v907, %v907
        %v910 = vpack.c.bf16 %v908, %v908
        %911 = vrot.lane.b32.xlu0 %v559, 56
        %v912 = vpop.permute.xlu0 %911
        %v914 = vsel %vm564, %v909, 0
        %v917 = vsel %vm691, %v912, 0
        %919 = vmatprep.subr.bf16.mxu0 0
        %920 = vmatpush1.bf16.msra.mxu0 %v917
        %921 = vmatprep.subr.bf16.mxu0 0
        %922 = vmatpush1.bf16.msra.mxu0 0
        %923 = vmatprep.subr.bf16.mxu0 0
        %924 = vmatpush1.bf16.msra.mxu0 0
        %925 = vmatprep.subr.bf16.mxu0 0
        %926 = vmatpush1.bf16.msra.mxu0 0
        %927 = vmatprep.subr.bf16.mxu0 0
        %928 = vmatpush1.bf16.msra.mxu0 0
        %929 = vmatprep.subr.bf16.mxu0 0
        %930 = vmatpush1.bf16.msra.mxu0 0
        %931 = vmatprep.subr.bf16.mxu0 0
        %932 = vmatpush1.bf16.msra.mxu0 0
        %933 = vmatprep.subr.bf16.mxu0 0
        %934 = vmatpush1.bf16.msra.mxu0 0
        %935 = vmatprep.subr.bf16.mxu0 0
        %936 = vmatpush1.bf16.msra.mxu0 0
        %937 = vmatprep.subr.bf16.mxu0 0
        %938 = vmatpush1.bf16.msra.mxu0 0
        %939 = vmatprep.subr.bf16.mxu0 0
        %940 = vmatpush1.bf16.msra.mxu0 0
        %941 = vmatprep.subr.bf16.mxu0 0
        %942 = vmatpush1.bf16.msra.mxu0 0
        %943 = vmatprep.subr.bf16.mxu0 0
        %944 = vmatpush1.bf16.msra.mxu0 0
        %945 = vmatprep.subr.bf16.mxu0 0
        %946 = vmatpush1.bf16.msra.mxu0 0
        %947 = vmatprep.subr.bf16.mxu0 0
        %948 = vmatpush1.bf16.msra.mxu0 0
        %949 = vmatprep.subr.bf16.mxu0 0
        %950 = vmatpush1.bf16.msra.mxu0 0
        %951 = vmatprep.mubr.bf16.mxu0 0
        %952 = vmatmul.mubr.bf16.gmra.mrb[0].mxu0 %v914
        %v953 = vpop.f32.mrb[0].mxu0
        %v954 = vadd.f32 0.0, %v953
        %v955 = vpop.f32.mrb[0].mxu0
        %v956 = vpop.f32.mrb[0].mxu0
        %v957 = vpop.f32.mrb[0].mxu0
        %958 = vdwg.mxu0
        %959 = vrot.lane.b32.xlu0 %v560, 56
        %v960 = vpop.permute.xlu0 %959
        %v962 = vsel %vm564, %v910, 0
        %v965 = vsel %vm691, %v960, 0
        %967 = vmatprep.subr.bf16.mxu0 0
        %968 = vmatpush1.bf16.msra.mxu0 %v965
        %969 = vmatprep.subr.bf16.mxu0 0
        %970 = vmatpush1.bf16.msra.mxu0 0
        %971 = vmatprep.subr.bf16.mxu0 0
        %972 = vmatpush1.bf16.msra.mxu0 0
        %973 = vmatprep.subr.bf16.mxu0 0
        %974 = vmatpush1.bf16.msra.mxu0 0
        %975 = vmatprep.subr.bf16.mxu0 0
        %976 = vmatpush1.bf16.msra.mxu0 0
        %977 = vmatprep.subr.bf16.mxu0 0
        %978 = vmatpush1.bf16.msra.mxu0 0
        %979 = vmatprep.subr.bf16.mxu0 0
        %980 = vmatpush1.bf16.msra.mxu0 0
        %981 = vmatprep.subr.bf16.mxu0 0
        %982 = vmatpush1.bf16.msra.mxu0 0
        %983 = vmatprep.subr.bf16.mxu0 0
        %984 = vmatpush1.bf16.msra.mxu0 0
        %985 = vmatprep.subr.bf16.mxu0 0
        %986 = vmatpush1.bf16.msra.mxu0 0
        %987 = vmatprep.subr.bf16.mxu0 0
        %988 = vmatpush1.bf16.msra.mxu0 0
        %989 = vmatprep.subr.bf16.mxu0 0
        %990 = vmatpush1.bf16.msra.mxu0 0
        %991 = vmatprep.subr.bf16.mxu0 0
        %992 = vmatpush1.bf16.msra.mxu0 0
        %993 = vmatprep.subr.bf16.mxu0 0
        %994 = vmatpush1.bf16.msra.mxu0 0
        %995 = vmatprep.subr.bf16.mxu0 0
        %996 = vmatpush1.bf16.msra.mxu0 0
        %997 = vmatprep.subr.bf16.mxu0 0
        %998 = vmatpush1.bf16.msra.mxu0 0
        %999 = vmatprep.mubr.bf16.mxu0 0
        %1000 = vmatmul.mubr.bf16.gmra.mrb[0].mxu0 %v962
        %v1001 = vpop.f32.mrb[0].mxu0
        %v1002 = vadd.f32 0.0, %v1001
        %v1003 = vpop.f32.mrb[0].mxu0
        %v1004 = vpop.f32.mrb[0].mxu0
        %v1005 = vpop.f32.mrb[0].mxu0
        %1006 = vdwg.mxu0
        %1009 = vrot.lane.b32.xlu0 %v954, 8
        %v1010 = vpop.permute.xlu0 %1009
        %1011 = vrot.lane.b32.xlu0 %v1002, 8
        %v1012 = vpop.permute.xlu0 %1011
        %vm1015 = vcmask 130112
        %1016 = vst.msk [vmem:[#allocation2] sm:$0xff] %vm1015, %v1010
        %1017 = vst.msk [vmem:[#allocation2 + $0x8] sm:$0xff] %vm1015, %v1012
        %1018 = vrot.lane.b32.xlu0 %v559, 112
        %v1019 = vpop.permute.xlu0 %1018
        %1020 = vrot.lane.b32.xlu0 %v559, 80
        %v1021 = vpop.permute.xlu0 %1020
        %v1023 = vsel %vm564, %v1019, 0
        %v1026 = vsel %vm564, %v1021, 0
        %1028 = vmatprep.subr.bf16.mxu0 0
        %1029 = vmatpush1.bf16.xpose.msra.mxu0 %v1026
        %1030 = vmatprep.subr.bf16.mxu0 0
        %1031 = vmatpush1.bf16.xpose.msra.mxu0 0
        %1032 = vmatprep.subr.bf16.mxu0 0
        %1033 = vmatpush1.bf16.xpose.msra.mxu0 0
        %1034 = vmatprep.subr.bf16.mxu0 0
        %1035 = vmatpush1.bf16.xpose.msra.mxu0 0
        %1036 = vmatprep.subr.bf16.mxu0 0
        %1037 = vmatpush1.bf16.xpose.msra.mxu0 0
        %1038 = vmatprep.subr.bf16.mxu0 0
        %1039 = vmatpush1.bf16.xpose.msra.mxu0 0
        %1040 = vmatprep.subr.bf16.mxu0 0
        %1041 = vmatpush1.bf16.xpose.msra.mxu0 0
        %1042 = vmatprep.subr.bf16.mxu0 0
        %1043 = vmatpush1.bf16.xpose.msra.mxu0 0
        %1044 = vmatprep.subr.bf16.mxu0 0
        %1045 = vmatpush1.bf16.xpose.msra.mxu0 0
        %1046 = vmatprep.subr.bf16.mxu0 0
        %1047 = vmatpush1.bf16.xpose.msra.mxu0 0
        %1048 = vmatprep.subr.bf16.mxu0 0
        %1049 = vmatpush1.bf16.xpose.msra.mxu0 0
        %1050 = vmatprep.subr.bf16.mxu0 0
        %1051 = vmatpush1.bf16.xpose.msra.mxu0 0
        %1052 = vmatprep.subr.bf16.mxu0 0
        %1053 = vmatpush1.bf16.xpose.msra.mxu0 0
        %1054 = vmatprep.subr.bf16.mxu0 0
        %1055 = vmatpush1.bf16.xpose.msra.mxu0 0
        %1056 = vmatprep.subr.bf16.mxu0 0
        %1057 = vmatpush1.bf16.xpose.msra.mxu0 0
        %1058 = vmatprep.subr.bf16.mxu0 0
        %1059 = vmatpush1.bf16.xpose.msra.mxu0 0
        %1060 = vmatprep.mubr.bf16.mxu0 0
        %1061 = vmatmul.mubr.bf16.gmra.mrb[0].mxu0 %v1023
        %v1062 = vpop.f32.mrb[0].mxu0
        %v1063 = vadd.f32 0.0, %v1062
        %v1064 = vpop.f32.mrb[0].mxu0
        %v1065 = vpop.f32.mrb[0].mxu0
        %v1066 = vpop.f32.mrb[0].mxu0
        %1067 = vdwg.mxu0
        %1068 = vrot.lane.b32.xlu0 %v560, 112
        %v1069 = vpop.permute.xlu0 %1068
        %1070 = vrot.lane.b32.xlu0 %v560, 80
        %v1071 = vpop.permute.xlu0 %1070
        %v1073 = vsel %vm564, %v1069, 0
        %v1076 = vsel %vm564, %v1071, 0
        %1078 = vmatprep.subr.bf16.mxu0 0
        %1079 = vmatpush1.bf16.xpose.msra.mxu0 %v1076
        %1080 = vmatprep.subr.bf16.mxu0 0
        %1081 = vmatpush1.bf16.xpose.msra.mxu0 0
        %1082 = vmatprep.subr.bf16.mxu0 0
        %1083 = vmatpush1.bf16.xpose.msra.mxu0 0
        %1084 = vmatprep.subr.bf16.mxu0 0
        %1085 = vmatpush1.bf16.xpose.msra.mxu0 0
        %1086 = vmatprep.subr.bf16.mxu0 0
        %1087 = vmatpush1.bf16.xpose.msra.mxu0 0
        %1088 = vmatprep.subr.bf16.mxu0 0
        %1089 = vmatpush1.bf16.xpose.msra.mxu0 0
        %1090 = vmatprep.subr.bf16.mxu0 0
        %1091 = vmatpush1.bf16.xpose.msra.mxu0 0
        %1092 = vmatprep.subr.bf16.mxu0 0
        %1093 = vmatpush1.bf16.xpose.msra.mxu0 0
        %1094 = vmatprep.subr.bf16.mxu0 0
        %1095 = vmatpush1.bf16.xpose.msra.mxu0 0
        %1096 = vmatprep.subr.bf16.mxu0 0
        %1097 = vmatpush1.bf16.xpose.msra.mxu0 0
        %1098 = vmatprep.subr.bf16.mxu0 0
        %1099 = vmatpush1.bf16.xpose.msra.mxu0 0
        %1100 = vmatprep.subr.bf16.mxu0 0
        %1101 = vmatpush1.bf16.xpose.msra.mxu0 0
        %1102 = vmatprep.subr.bf16.mxu0 0
        %1103 = vmatpush1.bf16.xpose.msra.mxu0 0
        %1104 = vmatprep.subr.bf16.mxu0 0
        %1105 = vmatpush1.bf16.xpose.msra.mxu0 0
        %1106 = vmatprep.subr.bf16.mxu0 0
        %1107 = vmatpush1.bf16.xpose.msra.mxu0 0
        %1108 = vmatprep.subr.bf16.mxu0 0
        %1109 = vmatpush1.bf16.xpose.msra.mxu0 0
        %1110 = vmatprep.mubr.bf16.mxu0 0
        %1111 = vmatmul.mubr.bf16.gmra.mrb[0].mxu0 %v1073
        %v1112 = vpop.f32.mrb[0].mxu0
        %v1113 = vadd.f32 0.0, %v1112
        %v1114 = vpop.f32.mrb[0].mxu0
        %v1115 = vpop.f32.mrb[0].mxu0
        %v1116 = vpop.f32.mrb[0].mxu0
        %1117 = vdwg.mxu0
        %v1118 = vmul.f32 %v1063, 0.35355338
        %v1119 = vmul.f32 %v1113, 0.35355338
        %v1120 = vsel %vm564, %v1118, -inf
        %1121 = vmax.xlane.f32.xlu0 %v1120
        %v1122 = vpop.xlane.xlu0 %1121
        %v1123 = vsel %vm564, %v1119, -inf
        %1124 = vmax.xlane.f32.xlu0 %v1123
        %v1125 = vpop.xlane.xlu0 %1124
        %v1126 = vsub.f32 %v1118, %v1122
        %v1127 = vsub.f32 %v1119, %v1125
        %v1128 = vmul.f32 %v1126, 1.442695
        %v1129 = vpow.pop %v1128
        %v1130 = vmul.f32 %v1127, 1.442695
        %v1131 = vpow.pop %v1130
        %v1132 = vsel %vm564, %v1129, 0.0
        %1133 = vadd.xlane.f32.xlu0 %v1132
        %v1134 = vpop.xlane.xlu0 %1133
        %v1135 = vsel %vm564, %v1131, 0.0
        %1136 = vadd.xlane.f32.xlu0 %v1135
        %v1137 = vpop.xlane.xlu0 %1136
        %v1138 = vrcp.pop %v1134
        %v1139 = vrcp.pop %v1137
        %v1140 = vmul.f32 %v1129, %v1138
        %v1141 = vmul.f32 %v1131, %v1139
        %v1142 = vpack.c.bf16 %v1140, %v1140
        %v1143 = vpack.c.bf16 %v1141, %v1141
        %1144 = vrot.lane.b32.xlu0 %v559, 48
        %v1145 = vpop.permute.xlu0 %1144
        %v1147 = vsel %vm564, %v1142, 0
        %v1150 = vsel %vm691, %v1145, 0
        %1152 = vmatprep.subr.bf16.mxu0 0
        %1153 = vmatpush1.bf16.msra.mxu0 %v1150
        %1154 = vmatprep.subr.bf16.mxu0 0
        %1155 = vmatpush1.bf16.msra.mxu0 0
        %1156 = vmatprep.subr.bf16.mxu0 0
        %1157 = vmatpush1.bf16.msra.mxu0 0
        %1158 = vmatprep.subr.bf16.mxu0 0
        %1159 = vmatpush1.bf16.msra.mxu0 0
        %1160 = vmatprep.subr.bf16.mxu0 0
        %1161 = vmatpush1.bf16.msra.mxu0 0
        %1162 = vmatprep.subr.bf16.mxu0 0
        %1163 = vmatpush1.bf16.msra.mxu0 0
        %1164 = vmatprep.subr.bf16.mxu0 0
        %1165 = vmatpush1.bf16.msra.mxu0 0
        %1166 = vmatprep.subr.bf16.mxu0 0
        %1167 = vmatpush1.bf16.msra.mxu0 0
        %1168 = vmatprep.subr.bf16.mxu0 0
        %1169 = vmatpush1.bf16.msra.mxu0 0
        %1170 = vmatprep.subr.bf16.mxu0 0
        %1171 = vmatpush1.bf16.msra.mxu0 0
        %1172 = vmatprep.subr.bf16.mxu0 0
        %1173 = vmatpush1.bf16.msra.mxu0 0
        %1174 = vmatprep.subr.bf16.mxu0 0
        %1175 = vmatpush1.bf16.msra.mxu0 0
        %1176 = vmatprep.subr.bf16.mxu0 0
        %1177 = vmatpush1.bf16.msra.mxu0 0
        %1178 = vmatprep.subr.bf16.mxu0 0
        %1179 = vmatpush1.bf16.msra.mxu0 0
        %1180 = vmatprep.subr.bf16.mxu0 0
        %1181 = vmatpush1.bf16.msra.mxu0 0
        %1182 = vmatprep.subr.bf16.mxu0 0
        %1183 = vmatpush1.bf16.msra.mxu0 0
        %1184 = vmatprep.mubr.bf16.mxu0 0
        %1185 = vmatmul.mubr.bf16.gmra.mrb[0].mxu0 %v1147
        %v1186 = vpop.f32.mrb[0].mxu0
        %v1187 = vadd.f32 0.0, %v1186
        %v1188 = vpop.f32.mrb[0].mxu0
        %v1189 = vpop.f32.mrb[0].mxu0
        %v1190 = vpop.f32.mrb[0].mxu0
        %1191 = vdwg.mxu0
        %1192 = vrot.lane.b32.xlu0 %v560, 48
        %v1193 = vpop.permute.xlu0 %1192
        %v1195 = vsel %vm564, %v1143, 0
        %v1198 = vsel %vm691, %v1193, 0
        %1200 = vmatprep.subr.bf16.mxu0 0
        %1201 = vmatpush1.bf16.msra.mxu0 %v1198
        %1202 = vmatprep.subr.bf16.mxu0 0
        %1203 = vmatpush1.bf16.msra.mxu0 0
        %1204 = vmatprep.subr.bf16.mxu0 0
        %1205 = vmatpush1.bf16.msra.mxu0 0
        %1206 = vmatprep.subr.bf16.mxu0 0
        %1207 = vmatpush1.bf16.msra.mxu0 0
        %1208 = vmatprep.subr.bf16.mxu0 0
        %1209 = vmatpush1.bf16.msra.mxu0 0
        %1210 = vmatprep.subr.bf16.mxu0 0
        %1211 = vmatpush1.bf16.msra.mxu0 0
        %1212 = vmatprep.subr.bf16.mxu0 0
        %1213 = vmatpush1.bf16.msra.mxu0 0
        %1214 = vmatprep.subr.bf16.mxu0 0
        %1215 = vmatpush1.bf16.msra.mxu0 0
        %1216 = vmatprep.subr.bf16.mxu0 0
        %1217 = vmatpush1.bf16.msra.mxu0 0
        %1218 = vmatprep.subr.bf16.mxu0 0
        %1219 = vmatpush1.bf16.msra.mxu0 0
        %1220 = vmatprep.subr.bf16.mxu0 0
        %1221 = vmatpush1.bf16.msra.mxu0 0
        %1222 = vmatprep.subr.bf16.mxu0 0
        %1223 = vmatpush1.bf16.msra.mxu0 0
        %1224 = vmatprep.subr.bf16.mxu0 0
        %1225 = vmatpush1.bf16.msra.mxu0 0
        %1226 = vmatprep.subr.bf16.mxu0 0
        %1227 = vmatpush1.bf16.msra.mxu0 0
        %1228 = vmatprep.subr.bf16.mxu0 0
        %1229 = vmatpush1.bf16.msra.mxu0 0
        %1230 = vmatprep.subr.bf16.mxu0 0
        %1231 = vmatpush1.bf16.msra.mxu0 0
        %1232 = vmatprep.mubr.bf16.mxu0 0
        %1233 = vmatmul.mubr.bf16.gmra.mrb[0].mxu0 %v1195
        %v1234 = vpop.f32.mrb[0].mxu0
        %v1235 = vadd.f32 0.0, %v1234
        %v1236 = vpop.f32.mrb[0].mxu0
        %v1237 = vpop.f32.mrb[0].mxu0
        %v1238 = vpop.f32.mrb[0].mxu0
        %1239 = vdwg.mxu0
        %1242 = vrot.lane.b32.xlu0 %v1187, 16
        %v1243 = vpop.permute.xlu0 %1242
        %1244 = vrot.lane.b32.xlu0 %v1235, 16
        %v1245 = vpop.permute.xlu0 %1244
        %vm1248 = vcmask 195712
        %1249 = vst.msk [vmem:[#allocation2] sm:$0xff] %vm1248, %v1243
        %1250 = vst.msk [vmem:[#allocation2 + $0x8] sm:$0xff] %vm1248, %v1245
        %1251 = vrot.lane.b32.xlu0 %v559, 104
        %v1252 = vpop.permute.xlu0 %1251
        %1253 = vrot.lane.b32.xlu0 %v559, 72
        %v1254 = vpop.permute.xlu0 %1253
        %v1256 = vsel %vm564, %v1252, 0
        %v1259 = vsel %vm564, %v1254, 0
        %1261 = vmatprep.subr.bf16.mxu0 0
        %1262 = vmatpush1.bf16.xpose.msra.mxu0 %v1259
        %1263 = vmatprep.subr.bf16.mxu0 0
        %1264 = vmatpush1.bf16.xpose.msra.mxu0 0
        %1265 = vmatprep.subr.bf16.mxu0 0
        %1266 = vmatpush1.bf16.xpose.msra.mxu0 0
        %1267 = vmatprep.subr.bf16.mxu0 0
        %1268 = vmatpush1.bf16.xpose.msra.mxu0 0
        %1269 = vmatprep.subr.bf16.mxu0 0
        %1270 = vmatpush1.bf16.xpose.msra.mxu0 0
        %1271 = vmatprep.subr.bf16.mxu0 0
        %1272 = vmatpush1.bf16.xpose.msra.mxu0 0
        %1273 = vmatprep.subr.bf16.mxu0 0
        %1274 = vmatpush1.bf16.xpose.msra.mxu0 0
        %1275 = vmatprep.subr.bf16.mxu0 0
        %1276 = vmatpush1.bf16.xpose.msra.mxu0 0
        %1277 = vmatprep.subr.bf16.mxu0 0
        %1278 = vmatpush1.bf16.xpose.msra.mxu0 0
        %1279 = vmatprep.subr.bf16.mxu0 0
        %1280 = vmatpush1.bf16.xpose.msra.mxu0 0
        %1281 = vmatprep.subr.bf16.mxu0 0
        %1282 = vmatpush1.bf16.xpose.msra.mxu0 0
        %1283 = vmatprep.subr.bf16.mxu0 0
        %1284 = vmatpush1.bf16.xpose.msra.mxu0 0
        %1285 = vmatprep.subr.bf16.mxu0 0
        %1286 = vmatpush1.bf16.xpose.msra.mxu0 0
        %1287 = vmatprep.subr.bf16.mxu0 0
        %1288 = vmatpush1.bf16.xpose.msra.mxu0 0
        %1289 = vmatprep.subr.bf16.mxu0 0
        %1290 = vmatpush1.bf16.xpose.msra.mxu0 0
        %1291 = vmatprep.subr.bf16.mxu0 0
        %1292 = vmatpush1.bf16.xpose.msra.mxu0 0
        %1293 = vmatprep.mubr.bf16.mxu0 0
        %1294 = vmatmul.mubr.bf16.gmra.mrb[0].mxu0 %v1256
        %v1295 = vpop.f32.mrb[0].mxu0
        %v1296 = vadd.f32 0.0, %v1295
        %v1297 = vpop.f32.mrb[0].mxu0
        %v1298 = vpop.f32.mrb[0].mxu0
        %v1299 = vpop.f32.mrb[0].mxu0
        %1300 = vdwg.mxu0
        %1301 = vrot.lane.b32.xlu0 %v560, 104
        %v1302 = vpop.permute.xlu0 %1301
        %1303 = vrot.lane.b32.xlu0 %v560, 72
        %v1304 = vpop.permute.xlu0 %1303
        %v1306 = vsel %vm564, %v1302, 0
        %v1309 = vsel %vm564, %v1304, 0
        %1311 = vmatprep.subr.bf16.mxu0 0
        %1312 = vmatpush1.bf16.xpose.msra.mxu0 %v1309
        %1313 = vmatprep.subr.bf16.mxu0 0
        %1314 = vmatpush1.bf16.xpose.msra.mxu0 0
        %1315 = vmatprep.subr.bf16.mxu0 0
        %1316 = vmatpush1.bf16.xpose.msra.mxu0 0
        %1317 = vmatprep.subr.bf16.mxu0 0
        %1318 = vmatpush1.bf16.xpose.msra.mxu0 0
        %1319 = vmatprep.subr.bf16.mxu0 0
        %1320 = vmatpush1.bf16.xpose.msra.mxu0 0
        %1321 = vmatprep.subr.bf16.mxu0 0
        %1322 = vmatpush1.bf16.xpose.msra.mxu0 0
        %1323 = vmatprep.subr.bf16.mxu0 0
        %1324 = vmatpush1.bf16.xpose.msra.mxu0 0
        %1325 = vmatprep.subr.bf16.mxu0 0
        %1326 = vmatpush1.bf16.xpose.msra.mxu0 0
        %1327 = vmatprep.subr.bf16.mxu0 0
        %1328 = vmatpush1.bf16.xpose.msra.mxu0 0
        %1329 = vmatprep.subr.bf16.mxu0 0
        %1330 = vmatpush1.bf16.xpose.msra.mxu0 0
        %1331 = vmatprep.subr.bf16.mxu0 0
        %1332 = vmatpush1.bf16.xpose.msra.mxu0 0
        %1333 = vmatprep.subr.bf16.mxu0 0
        %1334 = vmatpush1.bf16.xpose.msra.mxu0 0
        %1335 = vmatprep.subr.bf16.mxu0 0
        %1336 = vmatpush1.bf16.xpose.msra.mxu0 0
        %1337 = vmatprep.subr.bf16.mxu0 0
        %1338 = vmatpush1.bf16.xpose.msra.mxu0 0
        %1339 = vmatprep.subr.bf16.mxu0 0
        %1340 = vmatpush1.bf16.xpose.msra.mxu0 0
        %1341 = vmatprep.subr.bf16.mxu0 0
        %1342 = vmatpush1.bf16.xpose.msra.mxu0 0
        %1343 = vmatprep.mubr.bf16.mxu0 0
        %1344 = vmatmul.mubr.bf16.gmra.mrb[0].mxu0 %v1306
        %v1345 = vpop.f32.mrb[0].mxu0
        %v1346 = vadd.f32 0.0, %v1345
        %v1347 = vpop.f32.mrb[0].mxu0
        %v1348 = vpop.f32.mrb[0].mxu0
        %v1349 = vpop.f32.mrb[0].mxu0
        %1350 = vdwg.mxu0
        %v1351 = vmul.f32 %v1296, 0.35355338
        %v1352 = vmul.f32 %v1346, 0.35355338
        %v1353 = vsel %vm564, %v1351, -inf
        %1354 = vmax.xlane.f32.xlu0 %v1353
        %v1355 = vpop.xlane.xlu0 %1354
        %v1356 = vsel %vm564, %v1352, -inf
        %1357 = vmax.xlane.f32.xlu0 %v1356
        %v1358 = vpop.xlane.xlu0 %1357
        %v1359 = vsub.f32 %v1351, %v1355
        %v1360 = vsub.f32 %v1352, %v1358
        %v1361 = vmul.f32 %v1359, 1.442695
        %v1362 = vpow.pop %v1361
        %v1363 = vmul.f32 %v1360, 1.442695
        %v1364 = vpow.pop %v1363
        %v1365 = vsel %vm564, %v1362, 0.0
        %1366 = vadd.xlane.f32.xlu0 %v1365
        %v1367 = vpop.xlane.xlu0 %1366
        %v1368 = vsel %vm564, %v1364, 0.0
        %1369 = vadd.xlane.f32.xlu0 %v1368
        %v1370 = vpop.xlane.xlu0 %1369
        %v1371 = vrcp.pop %v1367
        %v1372 = vrcp.pop %v1370
        %v1373 = vmul.f32 %v1362, %v1371
        %v1374 = vmul.f32 %v1364, %v1372
        %v1375 = vpack.c.bf16 %v1373, %v1373
        %v1376 = vpack.c.bf16 %v1374, %v1374
        %1377 = vrot.lane.b32.xlu0 %v559, 40
        %v1378 = vpop.permute.xlu0 %1377
        %v1380 = vsel %vm564, %v1375, 0
        %v1383 = vsel %vm691, %v1378, 0
        %1385 = vmatprep.subr.bf16.mxu0 0
        %1386 = vmatpush1.bf16.msra.mxu0 %v1383
        %1387 = vmatprep.subr.bf16.mxu0 0
        %1388 = vmatpush1.bf16.msra.mxu0 0
        %1389 = vmatprep.subr.bf16.mxu0 0
        %1390 = vmatpush1.bf16.msra.mxu0 0
        %1391 = vmatprep.subr.bf16.mxu0 0
        %1392 = vmatpush1.bf16.msra.mxu0 0
        %1393 = vmatprep.subr.bf16.mxu0 0
        %1394 = vmatpush1.bf16.msra.mxu0 0
        %1395 = vmatprep.subr.bf16.mxu0 0
        %1396 = vmatpush1.bf16.msra.mxu0 0
        %1397 = vmatprep.subr.bf16.mxu0 0
        %1398 = vmatpush1.bf16.msra.mxu0 0
        %1399 = vmatprep.subr.bf16.mxu0 0
        %1400 = vmatpush1.bf16.msra.mxu0 0
        %1401 = vmatprep.subr.bf16.mxu0 0
        %1402 = vmatpush1.bf16.msra.mxu0 0
        %1403 = vmatprep.subr.bf16.mxu0 0
        %1404 = vmatpush1.bf16.msra.mxu0 0
        %1405 = vmatprep.subr.bf16.mxu0 0
        %1406 = vmatpush1.bf16.msra.mxu0 0
        %1407 = vmatprep.subr.bf16.mxu0 0
        %1408 = vmatpush1.bf16.msra.mxu0 0
        %1409 = vmatprep.subr.bf16.mxu0 0
        %1410 = vmatpush1.bf16.msra.mxu0 0
        %1411 = vmatprep.subr.bf16.mxu0 0
        %1412 = vmatpush1.bf16.msra.mxu0 0
        %1413 = vmatprep.subr.bf16.mxu0 0
        %1414 = vmatpush1.bf16.msra.mxu0 0
        %1415 = vmatprep.subr.bf16.mxu0 0
        %1416 = vmatpush1.bf16.msra.mxu0 0
        %1417 = vmatprep.mubr.bf16.mxu0 0
        %1418 = vmatmul.mubr.bf16.gmra.mrb[0].mxu0 %v1380
        %v1419 = vpop.f32.mrb[0].mxu0
        %v1420 = vadd.f32 0.0, %v1419
        %v1421 = vpop.f32.mrb[0].mxu0
        %v1422 = vpop.f32.mrb[0].mxu0
        %v1423 = vpop.f32.mrb[0].mxu0
        %1424 = vdwg.mxu0
        %1425 = vrot.lane.b32.xlu0 %v560, 40
        %v1426 = vpop.permute.xlu0 %1425
        %v1428 = vsel %vm564, %v1376, 0
        %v1431 = vsel %vm691, %v1426, 0
        %1433 = vmatprep.subr.bf16.mxu0 0
        %1434 = vmatpush1.bf16.msra.mxu0 %v1431
        %1435 = vmatprep.subr.bf16.mxu0 0
        %1436 = vmatpush1.bf16.msra.mxu0 0
        %1437 = vmatprep.subr.bf16.mxu0 0
        %1438 = vmatpush1.bf16.msra.mxu0 0
        %1439 = vmatprep.subr.bf16.mxu0 0
        %1440 = vmatpush1.bf16.msra.mxu0 0
        %1441 = vmatprep.subr.bf16.mxu0 0
        %1442 = vmatpush1.bf16.msra.mxu0 0
        %1443 = vmatprep.subr.bf16.mxu0 0
        %1444 = vmatpush1.bf16.msra.mxu0 0
        %1445 = vmatprep.subr.bf16.mxu0 0
        %1446 = vmatpush1.bf16.msra.mxu0 0
        %1447 = vmatprep.subr.bf16.mxu0 0
        %1448 = vmatpush1.bf16.msra.mxu0 0
        %1449 = vmatprep.subr.bf16.mxu0 0
        %1450 = vmatpush1.bf16.msra.mxu0 0
        %1451 = vmatprep.subr.bf16.mxu0 0
        %1452 = vmatpush1.bf16.msra.mxu0 0
        %1453 = vmatprep.subr.bf16.mxu0 0
        %1454 = vmatpush1.bf16.msra.mxu0 0
        %1455 = vmatprep.subr.bf16.mxu0 0
        %1456 = vmatpush1.bf16.msra.mxu0 0
        %1457 = vmatprep.subr.bf16.mxu0 0
        %1458 = vmatpush1.bf16.msra.mxu0 0
        %1459 = vmatprep.subr.bf16.mxu0 0
        %1460 = vmatpush1.bf16.msra.mxu0 0
        %1461 = vmatprep.subr.bf16.mxu0 0
        %1462 = vmatpush1.bf16.msra.mxu0 0
        %1463 = vmatprep.subr.bf16.mxu0 0
        %1464 = vmatpush1.bf16.msra.mxu0 0
        %1465 = vmatprep.mubr.bf16.mxu0 0
        %1466 = vmatmul.mubr.bf16.gmra.mrb[0].mxu0 %v1428
        %v1467 = vpop.f32.mrb[0].mxu0
        %v1468 = vadd.f32 0.0, %v1467
        %v1469 = vpop.f32.mrb[0].mxu0
        %v1470 = vpop.f32.mrb[0].mxu0
        %v1471 = vpop.f32.mrb[0].mxu0
        %1472 = vdwg.mxu0
        %1475 = vrot.lane.b32.xlu0 %v1420, 24
        %v1476 = vpop.permute.xlu0 %1475
        %1477 = vrot.lane.b32.xlu0 %v1468, 24
        %v1478 = vpop.permute.xlu0 %1477
        %vm1481 = vcmask 261312
        %1482 = vst.msk [vmem:[#allocation2] sm:$0xff] %vm1481, %v1476
        %1483 = vst.msk [vmem:[#allocation2 + $0x8] sm:$0xff] %vm1481, %v1478
        %v1484 = vld [vmem:[#allocation2] sm:$0xff]
        %v1485 = vld [vmem:[#allocation2 + $0x8] sm:$0xff]
        %v1486 = vpack.c.bf16 %v1484, %v1484
        %v1487 = vpack.c.bf16 %v1485, %v1485
        %v1488 = vld [vmem:[%s5] sm:$0xf]
        %v1489 = vld [vmem:[%s5 + $0x4] sm:$0xf]
        %v1490 = vld [vmem:[%s5 + $0x8] sm:$0xf]
        %v1491 = vld [vmem:[%s5 + $0xc] sm:$0xf]
        %v1492 = vld [vmem:[%s6] sm:$0x1]
        %v1494 = vlaneseq
        %v1495 = vshrl.u32 %v1494, 7
        %v1496 = vsub.s32 0, %v1495
        %v1497 = vrot.slane %v1492, %v1496
        %v1501 = vunpack.c.l.b16 %v1486
        %v1502 = vunpack.c.l.b16 %v1487
        %v1503 = vpack.c.b16 %v1502, %v1501
        %v1508 = vunpack.c.l.b16 %v1488
        %v1509 = vunpack.c.l.b16 %v1489
        %v1510 = vunpack.c.l.b16 %v1490
        %v1511 = vunpack.c.l.b16 %v1491
        %v1512 = vpack.c.b16 %v1509, %v1508
        %v1513 = vpack.c.b16 %v1511, %v1510
        %v1517 = vsel %vm447, %v1503, 0
        %1519 = vmatprep.subr.bf16.mxu0 0
        %1520 = vmatpush1.bf16.msra.mxu0 %v1512
        %1521 = vmatprep.subr.bf16.mxu0 0
        %1522 = vmatpush1.bf16.msra.mxu0 %v1513
        %1523 = vmatprep.subr.bf16.mxu0 0
        %1524 = vmatpush1.bf16.msra.mxu0 0
        %1525 = vmatprep.subr.bf16.mxu0 0
        %1526 = vmatpush1.bf16.msra.mxu0 0
        %1527 = vmatprep.subr.bf16.mxu0 0
        %1528 = vmatpush1.bf16.msra.mxu0 0
        %1529 = vmatprep.subr.bf16.mxu0 0
        %1530 = vmatpush1.bf16.msra.mxu0 0
        %1531 = vmatprep.subr.bf16.mxu0 0
        %1532 = vmatpush1.bf16.msra.mxu0 0
        %1533 = vmatprep.subr.bf16.mxu0 0
        %1534 = vmatpush1.bf16.msra.mxu0 0
        %1535 = vmatprep.subr.bf16.mxu0 0
        %1536 = vmatpush1.bf16.msra.mxu0 0
        %1537 = vmatprep.subr.bf16.mxu0 0
        %1538 = vmatpush1.bf16.msra.mxu0 0
        %1539 = vmatprep.subr.bf16.mxu0 0
        %1540 = vmatpush1.bf16.msra.mxu0 0
        %1541 = vmatprep.subr.bf16.mxu0 0
        %1542 = vmatpush1.bf16.msra.mxu0 0
        %1543 = vmatprep.subr.bf16.mxu0 0
        %1544 = vmatpush1.bf16.msra.mxu0 0
        %1545 = vmatprep.subr.bf16.mxu0 0
        %1546 = vmatpush1.bf16.msra.mxu0 0
        %1547 = vmatprep.subr.bf16.mxu0 0
        %1548 = vmatpush1.bf16.msra.mxu0 0
        %1549 = vmatprep.subr.bf16.mxu0 0
        %1550 = vmatpush1.bf16.msra.mxu0 0
        %1551 = vmatprep.mubr.bf16.mxu0 0
        %1552 = vmatmul.mubr.bf16.gmra.mrb[0].mxu0 %v1517
        %v1553 = vpop.f32.mrb[0].mxu0
        %v1554 = vadd.f32 %v1497, %v1553
        %v1555 = vpop.f32.mrb[0].mxu0
        %v1556 = vpop.f32.mrb[0].mxu0
        %v1557 = vadd.f32 %v1497, %v1556
        %v1558 = vpop.f32.mrb[0].mxu0
        %1559 = vdwg.mxu0
        %v1560 = vadd.f32 %v443, %v1554
        %v1561 = vadd.f32 %v444, %v1557
        %v1562 = vld [vmem:[%s7] sm:$0x1]
        %v1563 = vld [vmem:[%s8] sm:$0x1]
        %v1564 = vsel %vm447, %v1560, 0.0
        %1565 = vadd.xlane.f32.xlu0 %v1564
        %v1566 = vpop.xlane.xlu0 %1565
        %v1567 = vsel %vm447, %v1561, 0.0
        %1568 = vadd.xlane.f32.xlu0 %v1567
        %v1569 = vpop.xlane.xlu0 %1568
        %v1570 = vmul.f32 %v1566, %v454
        %v1571 = vmul.f32 %v1569, %v454
        %v1572 = vsub.f32 %v1560, %v1570
        %v1573 = vsub.f32 %v1561, %v1571
        %v1574 = vmul.f32 %v1572, %v1572
        %v1575 = vmul.f32 %v1573, %v1573
        %v1576 = vsel %vm447, %v1574, 0.0
        %1577 = vadd.xlane.f32.xlu0 %v1576
        %v1578 = vpop.xlane.xlu0 %1577
        %v1579 = vsel %vm447, %v1575, 0.0
        %1580 = vadd.xlane.f32.xlu0 %v1579
        %v1581 = vpop.xlane.xlu0 %1580
        %v1582 = vmul.f32 %v1578, %v454
        %v1583 = vmul.f32 %v1581, %v454
        %v1584 = vadd.f32 %v1582, 1e-05
        %v1585 = vadd.f32 %v1583, 1e-05
        %v1586 = vrsqrt.pop %v1584
        %v1587 = vrsqrt.pop %v1585
        %v1588 = vmul.f32 %v1572, %v1586
        %v1589 = vmul.f32 %v1573, %v1587
        %v1591 = vlaneseq
        %v1592 = vshrl.u32 %v1591, 7
        %v1593 = vsub.s32 0, %v1592
        %v1594 = vrot.slane %v1562, %v1593
        %v1596 = vmul.f32 %v1588, %v1594
        %v1597 = vmul.f32 %v1589, %v1594
        %v1599 = vlaneseq
        %v1600 = vshrl.u32 %v1599, 7
        %v1601 = vsub.s32 0, %v1600
        %v1602 = vrot.slane %v1563, %v1601
        %v1604 = vadd.f32 %v1596, %v1602
        %v1605 = vadd.f32 %v1597, %v1602
        %v1606 = vpack.c.bf16 %v1605, %v1604
        %v1607 = vld [vmem:[%s9] sm:$0xf]
        %v1608 = vld [vmem:[%s9 + $0x4] sm:$0xf]
        %v1609 = vld [vmem:[%s9 + $0x8] sm:$0xf]
        %v1610 = vld [vmem:[%s9 + $0xc] sm:$0xf]
        %v1611 = vld [vmem:[%s10] sm:$0x1]
        %v1613 = vlaneseq
        %v1614 = vshrl.u32 %v1613, 7
        %v1615 = vsub.s32 0, %v1614
        %v1616 = vrot.slane %v1611, %v1615
        %v1622 = vunpack.c.l.b16 %v1607
        %v1623 = vunpack.c.l.b16 %v1608
        %v1624 = vunpack.c.l.b16 %v1609
        %v1625 = vunpack.c.l.b16 %v1610
        %v1626 = vpack.c.b16 %v1623, %v1622
        %v1627 = vpack.c.b16 %v1625, %v1624
        %v1631 = vsel %vm447, %v1606, 0
        %1633 = vmatprep.subr.bf16.mxu0 0
        %1634 = vmatpush1.bf16.msra.mxu0 %v1626
        %1635 = vmatprep.subr.bf16.mxu0 0
        %1636 = vmatpush1.bf16.msra.mxu0 %v1627
        %1637 = vmatprep.subr.bf16.mxu0 0
        %1638 = vmatpush1.bf16.msra.mxu0 0
        %1639 = vmatprep.subr.bf16.mxu0 0
        %1640 = vmatpush1.bf16.msra.mxu0 0
        %1641 = vmatprep.subr.bf16.mxu0 0
        %1642 = vmatpush1.bf16.msra.mxu0 0
        %1643 = vmatprep.subr.bf16.mxu0 0
        %1644 = vmatpush1.bf16.msra.mxu0 0
        %1645 = vmatprep.subr.bf16.mxu0 0
        %1646 = vmatpush1.bf16.msra.mxu0 0
        %1647 = vmatprep.subr.bf16.mxu0 0
        %1648 = vmatpush1.bf16.msra.mxu0 0
        %1649 = vmatprep.subr.bf16.mxu0 0
        %1650 = vmatpush1.bf16.msra.mxu0 0
        %1651 = vmatprep.subr.bf16.mxu0 0
        %1652 = vmatpush1.bf16.msra.mxu0 0
        %1653 = vmatprep.subr.bf16.mxu0 0
        %1654 = vmatpush1.bf16.msra.mxu0 0
        %1655 = vmatprep.subr.bf16.mxu0 0
        %1656 = vmatpush1.bf16.msra.mxu0 0
        %1657 = vmatprep.subr.bf16.mxu0 0
        %1658 = vmatpush1.bf16.msra.mxu0 0
        %1659 = vmatprep.subr.bf16.mxu0 0
        %1660 = vmatpush1.bf16.msra.mxu0 0
        %1661 = vmatprep.subr.bf16.mxu0 0
        %1662 = vmatpush1.bf16.msra.mxu0 0
        %1663 = vmatprep.subr.bf16.mxu0 0
        %1664 = vmatpush1.bf16.msra.mxu0 0
        %1665 = vmatprep.mubr.bf16.mxu0 0
        %1666 = vmatmul.mubr.bf16.gmra.mrb[0].mxu0 %v1631
        %v1667 = vpop.f32.mrb[0].mxu0
        %v1668 = vadd.f32 %v1616, %v1667
        %v1669 = vpop.f32.mrb[0].mxu0
        %v1670 = vpop.f32.mrb[0].mxu0
        %v1671 = vadd.f32 %v1616, %v1670
        %v1672 = vpop.f32.mrb[0].mxu0
        %1673 = vdwg.mxu0
        %v1674 = vmul.f32 %v1668, 0.5
        %v1675 = vmul.f32 %v1671, 0.5
        %v1676 = vmul.f32 %v1668, 0.70710677
        %v1677 = vmul.f32 %v1671, 0.70710677
        %v1678 = verf.f32.pop %v1676
        %v1679 = verf.f32.pop %v1677
        %v1680 = vadd.f32 %v1678, 1.0
        %v1681 = vadd.f32 %v1679, 1.0
        %v1682 = vmul.f32 %v1674, %v1680
        %v1683 = vmul.f32 %v1675, %v1681
        %v1684 = vpack.c.bf16 %v1683, %v1682
        %v1685 = vld [vmem:[%s11] sm:$0xf]
        %v1686 = vld [vmem:[%s11 + $0x4] sm:$0xf]
        %v1687 = vld [vmem:[%s11 + $0x8] sm:$0xf]
        %v1688 = vld [vmem:[%s11 + $0xc] sm:$0xf]
        %v1689 = vld [vmem:[%s11 + $0x10] sm:$0xf]
        %v1690 = vld [vmem:[%s11 + $0x14] sm:$0xf]
        %v1691 = vld [vmem:[%s11 + $0x18] sm:$0xf]
        %v1692 = vld [vmem:[%s11 + $0x1c] sm:$0xf]
        %v1693 = vld [vmem:[%s11 + $0x20] sm:$0xf]
        %v1694 = vld [vmem:[%s11 + $0x24] sm:$0xf]
        %v1695 = vld [vmem:[%s11 + $0x28] sm:$0xf]
        %v1696 = vld [vmem:[%s11 + $0x2c] sm:$0xf]
        %v1697 = vld [vmem:[%s11 + $0x30] sm:$0xf]
        %v1698 = vld [vmem:[%s11 + $0x34] sm:$0xf]
        %v1699 = vld [vmem:[%s11 + $0x38] sm:$0xf]
        %v1700 = vld [vmem:[%s11 + $0x3c] sm:$0xf]
        %v1701 = vld [vmem:[%s12] sm:$0x1]
        %v1703 = vlaneseq
        %v1704 = vshrl.u32 %v1703, 7
        %v1705 = vsub.s32 0, %v1704
        %v1706 = vrot.slane %v1701, %v1705
        %v1724 = vunpack.c.l.b16 %v1685
        %v1725 = vunpack.c.l.b16 %v1686
        %v1726 = vunpack.c.l.b16 %v1687
        %v1727 = vunpack.c.l.b16 %v1688
        %v1728 = vunpack.c.l.b16 %v1689
        %v1729 = vunpack.c.l.b16 %v1690
        %v1730 = vunpack.c.l.b16 %v1691
        %v1731 = vunpack.c.l.b16 %v1692
        %v1732 = vunpack.c.l.b16 %v1693
        %v1733 = vunpack.c.l.b16 %v1694
        %v1734 = vunpack.c.l.b16 %v1695
        %v1735 = vunpack.c.l.b16 %v1696
        %v1736 = vunpack.c.l.b16 %v1697
        %v1737 = vunpack.c.l.b16 %v1698
        %v1738 = vunpack.c.l.b16 %v1699
        %v1739 = vunpack.c.l.b16 %v1700
        %v1740 = vpack.c.b16 %v1725, %v1724
        %v1741 = vpack.c.b16 %v1727, %v1726
        %v1742 = vpack.c.b16 %v1729, %v1728
        %v1743 = vpack.c.b16 %v1731, %v1730
        %v1744 = vpack.c.b16 %v1733, %v1732
        %v1745 = vpack.c.b16 %v1735, %v1734
        %v1746 = vpack.c.b16 %v1737, %v1736
        %v1747 = vpack.c.b16 %v1739, %v1738
        %1756 = vmatprep.subr.bf16.mxu0 0
        %1757 = vmatpush1.bf16.msra.mxu0 %v1740
        %1758 = vmatprep.subr.bf16.mxu0 0
        %1759 = vmatpush1.bf16.msra.mxu0 %v1741
        %1760 = vmatprep.subr.bf16.mxu0 0
        %1761 = vmatpush1.bf16.msra.mxu0 %v1742
        %1762 = vmatprep.subr.bf16.mxu0 0
        %1763 = vmatpush1.bf16.msra.mxu0 %v1743
        %1764 = vmatprep.subr.bf16.mxu0 0
        %1765 = vmatpush1.bf16.msra.mxu0 %v1744
        %1766 = vmatprep.subr.bf16.mxu0 0
        %1767 = vmatpush1.bf16.msra.mxu0 %v1745
        %1768 = vmatprep.subr.bf16.mxu0 0
        %1769 = vmatpush1.bf16.msra.mxu0 %v1746
        %1770 = vmatprep.subr.bf16.mxu0 0
        %1771 = vmatpush1.bf16.msra.mxu0 %v1747
        %1772 = vmatprep.subr.bf16.mxu0 0
        %1773 = vmatpush1.bf16.msra.mxu0 0
        %1774 = vmatprep.subr.bf16.mxu0 0
        %1775 = vmatpush1.bf16.msra.mxu0 0
        %1776 = vmatprep.subr.bf16.mxu0 0
        %1777 = vmatpush1.bf16.msra.mxu0 0
        %1778 = vmatprep.subr.bf16.mxu0 0
        %1779 = vmatpush1.bf16.msra.mxu0 0
        %1780 = vmatprep.subr.bf16.mxu0 0
        %1781 = vmatpush1.bf16.msra.mxu0 0
        %1782 = vmatprep.subr.bf16.mxu0 0
        %1783 = vmatpush1.bf16.msra.mxu0 0
        %1784 = vmatprep.subr.bf16.mxu0 0
        %1785 = vmatpush1.bf16.msra.mxu0 0
        %1786 = vmatprep.subr.bf16.mxu0 0
        %1787 = vmatpush1.bf16.msra.mxu0 0
        %1788 = vmatprep.mubr.bf16.mxu0 0
        %1789 = vmatmul.mubr.bf16.gmra.mrb[0].mxu0 %v1684
        %v1790 = vpop.f32.mrb[0].mxu0
        %v1791 = vadd.f32 %v1706, %v1790
        %v1792 = vpop.f32.mrb[0].mxu0
        %v1793 = vpop.f32.mrb[0].mxu0
        %v1794 = vadd.f32 %v1706, %v1793
        %v1795 = vpop.f32.mrb[0].mxu0
        %1796 = vdwg.mxu0
        %v1797 = vadd.f32 %v1560, %v1791
        %v1798 = vadd.f32 %v1561, %v1794
        %1799 = vst.msk [vmem:[%s434] sm:$0xff] %vm447, %v1797
        %1800 = vst.msk [vmem:[%s434 + $0x8] sm:$0xff] %vm447, %v1798
        %s1801 = sand.u32 %s313, 1
        %s1802 = scalar_lea.sflag [#allocation4], %s1801
        %s1803 = sand.u32 %s313, 1
        %s1804 = smul.addr %s1803, 16
        %s1805 = scalar_lea.vmem [#allocation3], %s1804
        // Predicated region
        $region73: #{tpu_custom_call.1} parent=71 // pred_check
          %p1806 = pneg %p323
        $region74: #{tpu_custom_call.1} parent=71 // pred_check_branch
          %1808 = sbr.rel (%p1806) target = $region76
        $region75: #{tpu_custom_call.1} parent=71 // pred_region
          %s1809 = smul.u32 2, %s27
          %s1811 = ssub.s32 256, 256
          %1812 = vsyncadd %s1802, %s1811
          %s1813 = smul.addr %s1809, 128
          %s1814 = scalar_lea.hbm %s13, %s1813
          %s1815 = sshll.u32 %s1805, 4
          %s1816 = int_to_ptr.vmem [resolvable:$true] %s1815
          %1821 = dma.vmem_to_hbm [thread:$0]  %s1816, 256, %s1814, %s1802, 128, 128, 8
        $region76: #{tpu_custom_call.1} parent=71 // pred_fallthru
          _
      $region72: #{tpu_custom_call.1} parent=5 // pred_fallthru
        _
      %p1822 = scmp.le.s32.totalorder 2, %s22
      // Predicated region
      $region77: #{tpu_custom_call.1} parent=5 // pred_check
        %p1823 = pneg %p1822
      $region78: #{tpu_custom_call.1} parent=5 // pred_check_branch
        %1825 = sbr.rel (%p1823) target = $region80
      $region79: #{tpu_custom_call.1} parent=5 // pred_region
        %s1826 = ssub.s32 %s22, 2
        // Predicated region
        $region81: #{tpu_custom_call.1} parent=79 // pred_check
          %p1827 = pneg %p329
        $region82: #{tpu_custom_call.1} parent=79 // pred_check_branch
          %1829 = sbr.rel (%p1827) target = $region84
        $region83: #{tpu_custom_call.1} parent=79 // pred_region
          %s1830 = sand.u32 %s314, 1
          %s1831 = scalar_lea.sflag [#allocation4], %s1830
          %s1832 = sand.u32 %s314, 1
          %s1833 = smul.addr %s1832, 16
          %s1834 = scalar_lea.vmem [#allocation3], %s1833
          %1835 = dma.done %s1831, 256
        $region84: #{tpu_custom_call.1} parent=79 // pred_fallthru
          _
      $region80: #{tpu_custom_call.1} parent=5 // pred_fallthru
        _
    $region6: #{tpu_custom_call.1} parent=1 // loop_footer
      %s26 = sadd.s32 1, %s22
    $region7: #{tpu_custom_call.1} parent=1 // loop_footer_branch
      %21 = sbr.rel target = $region3
    $region8: #{tpu_custom_call.1} parent=1 // loop_exit
      _
    %1836 = vsyncpa [#allocation4], 1
    %s1837 = scalar_lea.sflag [#allocation4], 1
    %1838 = vsyncpa %s1837, 1

// kernel: tpu_custom_call.1
$region0: #{tpu_custom_call.1}
  #allocation0 [shape = 'u32[]', space=smem, size = 0x4, offset = 0x4, fixed_abs, tag = 'smem constant byte address 0x4 - core index']
  #allocation1 [shape = 'u32[144,128]{1,0:T(1,128)}', space=vmem, size = 0x12000, scoped, tag = 'internal scratch']
  #allocation2 [shape = 'f32[2,8,32]{2,1,0:T(8,128)}', space=vmem, size = 0x2000, scoped, tag = 'scratch operand']
  %s0 = inlined_call_operand.vmem [shape: f32[4,8,32], index: 0, kind: input, shape index: {}]
  %s1 = inlined_call_operand.vmem [shape: f32[1,32], index: 1, kind: input, shape index: {}]
  %s2 = inlined_call_operand.vmem [shape: f32[1,32], index: 2, kind: input, shape index: {}]
  %s3 = inlined_call_operand.vmem [shape: bf16[32,96], index: 3, kind: input, shape index: {}]
  %s4 = inlined_call_operand.vmem [shape: f32[1,96], index: 4, kind: input, shape index: {}]
  %s5 = inlined_call_operand.vmem [shape: bf16[32,32], index: 5, kind: input, shape index: {}]
  %s6 = inlined_call_operand.vmem [shape: f32[1,32], index: 6, kind: input, shape index: {}]
  %s7 = inlined_call_operand.vmem [shape: f32[1,32], index: 7, kind: input, shape index: {}]
  %s8 = inlined_call_operand.vmem [shape: f32[1,32], index: 8, kind: input, shape index: {}]
  %s9 = inlined_call_operand.vmem [shape: bf16[32,128], index: 9, kind: input, shape index: {}]
  %s10 = inlined_call_operand.vmem [shape: f32[1,128], index: 10, kind: input, shape index: {}]
  %s11 = inlined_call_operand.vmem [shape: bf16[128,32], index: 11, kind: input, shape index: {}]
  %s12 = inlined_call_operand.vmem [shape: f32[1,32], index: 12, kind: input, shape index: {}]
  %s13 = inlined_call_operand.hbm [shape: f32[4,8,32], index: 13, kind: output, shape index: {}]
  %s14 = sld [smem:[#allocation0]]
  $region85: #{tpu_custom_call.1} parent=0
    _
  %s16 = ssub.s32 1, %s14
  %s17 = scalar_select 0, %s16, %s14
  $region1: #{tpu_custom_call.1} parent=0
    #allocation3 [shape = 'u8[16384]{0}', space=vmem, size = 0x4000, scoped, tag = 'output window, operand 0']
    #allocation4 [shape = 's32[2]{0}', space=sflag, size = 0x8, scoped, tag = 'scoped memory for tpu_custom_call.1']
    %18 = vsyncpa [#allocation4], 0
    %s19 = scalar_lea.sflag [#allocation4], 1
    %20 = vsyncpa %s19, 0
    loop: start=0, step=1, limit=4
    $region2: #{tpu_custom_call.1} parent=1 // loop_pre_header
      _
    $region3: #{tpu_custom_call.1} parent=1 // loop_header
      %s22 = sphi 0, %s26
      %p23 = scmp.ge.s32.totalorder %s22, 4
      %s32 = sphi 0, %s34
      %s35 = sphi 0, %s32
      %s36 = sphi 0, %s35
      %s52 = sphi 0, %s36
      %s56 = sphi 0, %s56
      %s58 = sphi 0, %s56
      %s59 = sphi 0, %s58
      %s73 = sphi 0, %s59
      %s77 = sphi 0, %s77
      %s79 = sphi 0, %s77
      %s80 = sphi 0, %s79
      %s94 = sphi 0, %s80
      %s98 = sphi 0, %s98
      %s100 = sphi 0, %s98
      %s101 = sphi 0, %s100
      %s115 = sphi 0, %s101
      %s119 = sphi 0, %s119
      %s121 = sphi 0, %s119
      %s122 = sphi 0, %s121
      %s136 = sphi 0, %s122
      %s140 = sphi 0, %s140
      %s142 = sphi 0, %s140
      %s143 = sphi 0, %s142
      %s157 = sphi 0, %s143
      %s161 = sphi 0, %s161
      %s163 = sphi 0, %s161
      %s164 = sphi 0, %s163
      %s178 = sphi 0, %s164
      %s182 = sphi 0, %s182
      %s184 = sphi 0, %s182
      %s185 = sphi 0, %s184
      %s199 = sphi 0, %s185
      %s203 = sphi 0, %s203
      %s205 = sphi 0, %s203
      %s206 = sphi 0, %s205
      %s220 = sphi 0, %s206
      %s224 = sphi 0, %s224
      %s226 = sphi 0, %s224
      %s227 = sphi 0, %s226
      %s241 = sphi 0, %s227
      %s245 = sphi 0, %s245
      %s247 = sphi 0, %s245
      %s248 = sphi 0, %s247
      %s262 = sphi 0, %s248
      %s266 = sphi 0, %s266
      %s268 = sphi 0, %s266
      %s269 = sphi 0, %s268
      %s283 = sphi 0, %s269
      %s287 = sphi 0, %s287
      %s289 = sphi 0, %s287
      %s290 = sphi 0, %s289
      %s304 = sphi 0, %s290
      %s310 = sphi 0, %s312
      %s313 = sphi 0, %s310
      %s314 = sphi 0, %s313
      %s330 = sphi 0, %s314
    $region4: #{tpu_custom_call.1} parent=1 // loop_header_branch
      %25 = sbr.rel (%p23) target = $region8
    $region5: #{tpu_custom_call.1} parent=1 // loop_body
      %s27 = ssub.s32 %s22, 1
      %s28 = ssub.s32 %s22, 2
      %s29 = sadd.s32 %s22, 1
      %s30 = ssub.s32 %s22, %s29
      %p31 = scmp.eq.s32.totalorder %s30, 0
      %s33 = sadd.s32 %s32, 1
      %s34 = scalar_select %p31, %s32, %s33
      %p37 = pneg %p31
      %p38 = scmp.eq.s32.totalorder %s22, 1
      %p39 = por %p37, %p38
      %p40 = scmp.ne.s32.totalorder %s32, %s35
      %p41 = scmp.eq.s32.totalorder %s22, 0
      %p42 = por %p40, %p41
      %p43 = scmp.ne.s32.totalorder %s32, %s35
      %p44 = scmp.eq.s32.totalorder %s27, 1
      %p45 = por %p43, %p44
      %p46 = scmp.ne.s32.totalorder %s35, %s36
      %p47 = scmp.eq.s32.totalorder %s27, 0
      %p48 = por %p46, %p47
      %p49 = scmp.ne.s32.totalorder %s35, %s36
      %p50 = scmp.eq.s32.totalorder %s28, 1
      %p51 = por %p49, %p50
      %p53 = scmp.ne.s32.totalorder %s36, %s52
      %p54 = scmp.eq.s32.totalorder %s28, 0
      %p55 = por %p53, %p54
      %s57 = sadd.s32 %s56, 1
      %p60 = scmp.eq.s32.totalorder %s22, 1
      %p61 = scmp.ne.s32.totalorder %s56, %s58
      %p62 = scmp.eq.s32.totalorder %s22, 0
      %p63 = por %p61, %p62
      %p64 = scmp.ne.s32.totalorder %s56, %s58
      %p65 = scmp.eq.s32.totalorder %s27, 1
      %p66 = por %p64, %p65
      %p67 = scmp.ne.s32.totalorder %s58, %s59
      %p68 = scmp.eq.s32.totalorder %s27, 0
      %p69 = por %p67, %p68
      %p70 = scmp.ne.s32.totalorder %s58, %s59
      %p71 = scmp.eq.s32.totalorder %s28, 1
      %p72 = por %p70, %p71
      %p74 = scmp.ne.s32.totalorder %s59, %s73
      %p75 = scmp.eq.s32.totalorder %s28, 0
      %p76 = por %p74, %p75
      %s78 = sadd.s32 %s77, 1
      %p81 = scmp.eq.s32.totalorder %s22, 1
      %p82 = scmp.ne.s32.totalorder %s77, %s79
      %p83 = scmp.eq.s32.totalorder %s22, 0
      %p84 = por %p82, %p83
      %p85 = scmp.ne.s32.totalorder %s77, %s79
      %p86 = scmp.eq.s32.totalorder %s27, 1
      %p87 = por %p85, %p86
      %p88 = scmp.ne.s32.totalorder %s79, %s80
      %p89 = scmp.eq.s32.totalorder %s27, 0
      %p90 = por %p88, %p89
      %p91 = scmp.ne.s32.totalorder %s79, %s80
      %p92 = scmp.eq.s32.totalorder %s28, 1
      %p93 = por %p91, %p92
      %p95 = scmp.ne.s32.totalorder %s80, %s94
      %p96 = scmp.eq.s32.totalorder %s28, 0
      %p97 = por %p95, %p96
      %s99 = sadd.s32 %s98, 1
      %p102 = scmp.eq.s32.totalorder %s22, 1
      %p103 = scmp.ne.s32.totalorder %s98, %s100
      %p104 = scmp.eq.s32.totalorder %s22, 0
      %p105 = por %p103, %p104
      %p106 = scmp.ne.s32.totalorder %s98, %s100
      %p107 = scmp.eq.s32.totalorder %s27, 1
      %p108 = por %p106, %p107
      %p109 = scmp.ne.s32.totalorder %s100, %s101
      %p110 = scmp.eq.s32.totalorder %s27, 0
      %p111 = por %p109, %p110
      %p112 = scmp.ne.s32.totalorder %s100, %s101
      %p113 = scmp.eq.s32.totalorder %s28, 1
      %p114 = por %p112, %p113
      %p116 = scmp.ne.s32.totalorder %s101, %s115
      %p117 = scmp.eq.s32.totalorder %s28, 0
      %p118 = por %p116, %p117
      %s120 = sadd.s32 %s119, 1
      %p123 = scmp.eq.s32.totalorder %s22, 1
      %p124 = scmp.ne.s32.totalorder %s119, %s121
      %p125 = scmp.eq.s32.totalorder %s22, 0
      %p126 = por %p124, %p125
      %p127 = scmp.ne.s32.totalorder %s119, %s121
      %p128 = scmp.eq.s32.totalorder %s27, 1
      %p129 = por %p127, %p128
      %p130 = scmp.ne.s32.totalorder %s121, %s122
      %p131 = scmp.eq.s32.totalorder %s27, 0
      %p132 = por %p130, %p131
      %p133 = scmp.ne.s32.totalorder %s121, %s122
      %p134 = scmp.eq.s32.totalorder %s28, 1
      %p135 = por %p133, %p134
      %p137 = scmp.ne.s32.totalorder %s122, %s136
      %p138 = scmp.eq.s32.totalorder %s28, 0
      %p139 = por %p137, %p138
      %s141 = sadd.s32 %s140, 1
      %p144 = scmp.eq.s32.totalorder %s22, 1
      %p145 = scmp.ne.s32.totalorder %s140, %s142
      %p146 = scmp.eq.s32.totalorder %s22, 0
      %p147 = por %p145, %p146
      %p148 = scmp.ne.s32.totalorder %s140, %s142
      %p149 = scmp.eq.s32.totalorder %s27, 1
      %p150 = por %p148, %p149
      %p151 = scmp.ne.s32.totalorder %s142, %s143
      %p152 = scmp.eq.s32.totalorder %s27, 0
      %p153 = por %p151, %p152
      %p154 = scmp.ne.s32.totalorder %s142, %s143
      %p155 = scmp.eq.s32.totalorder %s28, 1
      %p156 = por %p154, %p155
      %p158 = scmp.ne.s32.totalorder %s143, %s157
      %p159 = scmp.eq.s32.totalorder %s28, 0
      %p160 = por %p158, %p159
      %s162 = sadd.s32 %s161, 1
      %p165 = scmp.eq.s32.totalorder %s22, 1
      %p166 = scmp.ne.s32.totalorder %s161, %s163
      %p167 = scmp.eq.s32.totalorder %s22, 0
      %p168 = por %p166, %p167
      %p169 = scmp.ne.s32.totalorder %s161, %s163
      %p170 = scmp.eq.s32.totalorder %s27, 1
      %p171 = por %p169, %p170
      %p172 = scmp.ne.s32.totalorder %s163, %s164
      %p173 = scmp.eq.s32.totalorder %s27, 0
      %p174 = por %p172, %p173
      %p175 = scmp.ne.s32.totalorder %s163, %s164
      %p176 = scmp.eq.s32.totalorder %s28, 1
      %p177 = por %p175, %p176
      %p179 = scmp.ne.s32.totalorder %s164, %s178
      %p180 = scmp.eq.s32.totalorder %s28, 0
      %p181 = por %p179, %p180
      %s183 = sadd.s32 %s182, 1
      %p186 = scmp.eq.s32.totalorder %s22, 1
      %p187 = scmp.ne.s32.totalorder %s182, %s184
      %p188 = scmp.eq.s32.totalorder %s22, 0
      %p189 = por %p187, %p188
      %p190 = scmp.ne.s32.totalorder %s182, %s184
      %p191 = scmp.eq.s32.totalorder %s27, 1
      %p192 = por %p190, %p191
      %p193 = scmp.ne.s32.totalorder %s184, %s185
      %p194 = scmp.eq.s32.totalorder %s27, 0
      %p195 = por %p193, %p194
      %p196 = scmp.ne.s32.totalorder %s184, %s185
      %p197 = scmp.eq.s32.totalorder %s28, 1
      %p198 = por %p196, %p197
      %p200 = scmp.ne.s32.totalorder %s185, %s199
      %p201 = scmp.eq.s32.totalorder %s28, 0
      %p202 = por %p200, %p201
      %s204 = sadd.s32 %s203, 1
      %p207 = scmp.eq.s32.totalorder %s22, 1
      %p208 = scmp.ne.s32.totalorder %s203, %s205
      %p209 = scmp.eq.s32.totalorder %s22, 0
      %p210 = por %p208, %p209
      %p211 = scmp.ne.s32.totalorder %s203, %s205
      %p212 = scmp.eq.s32.totalorder %s27, 1
      %p213 = por %p211, %p212
      %p214 = scmp.ne.s32.totalorder %s205, %s206
      %p215 = scmp.eq.s32.totalorder %s27, 0
      %p216 = por %p214, %p215
      %p217 = scmp.ne.s32.totalorder %s205, %s206
      %p218 = scmp.eq.s32.totalorder %s28, 1
      %p219 = por %p217, %p218
      %p221 = scmp.ne.s32.totalorder %s206, %s220
      %p222 = scmp.eq.s32.totalorder %s28, 0
      %p223 = por %p221, %p222
      %s225 = sadd.s32 %s224, 1
      %p228 = scmp.eq.s32.totalorder %s22, 1
      %p229 = scmp.ne.s32.totalorder %s224, %s226
      %p230 = scmp.eq.s32.totalorder %s22, 0
      %p231 = por %p229, %p230
      %p232 = scmp.ne.s32.totalorder %s224, %s226
      %p233 = scmp.eq.s32.totalorder %s27, 1
      %p234 = por %p232, %p233
      %p235 = scmp.ne.s32.totalorder %s226, %s227
      %p236 = scmp.eq.s32.totalorder %s27, 0
      %p237 = por %p235, %p236
      %p238 = scmp.ne.s32.totalorder %s226, %s227
      %p239 = scmp.eq.s32.totalorder %s28, 1
      %p240 = por %p238, %p239
      %p242 = scmp.ne.s32.totalorder %s227, %s241
      %p243 = scmp.eq.s32.totalorder %s28, 0
      %p244 = por %p242, %p243
      %s246 = sadd.s32 %s245, 1
      %p249 = scmp.eq.s32.totalorder %s22, 1
      %p250 = scmp.ne.s32.totalorder %s245, %s247
      %p251 = scmp.eq.s32.totalorder %s22, 0
      %p252 = por %p250, %p251
      %p253 = scmp.ne.s32.totalorder %s245, %s247
      %p254 = scmp.eq.s32.totalorder %s27, 1
      %p255 = por %p253, %p254
      %p256 = scmp.ne.s32.totalorder %s247, %s248
      %p257 = scmp.eq.s32.totalorder %s27, 0
      %p258 = por %p256, %p257
      %p259 = scmp.ne.s32.totalorder %s247, %s248
      %p260 = scmp.eq.s32.totalorder %s28, 1
      %p261 = por %p259, %p260
      %p263 = scmp.ne.s32.totalorder %s248, %s262
      %p264 = scmp.eq.s32.totalorder %s28, 0
      %p265 = por %p263, %p264
      %s267 = sadd.s32 %s266, 1
      %p270 = scmp.eq.s32.totalorder %s22, 1
      %p271 = scmp.ne.s32.totalorder %s266, %s268
      %p272 = scmp.eq.s32.totalorder %s22, 0
      %p273 = por %p271, %p272
      %p274 = scmp.ne.s32.totalorder %s266, %s268
      %p275 = scmp.eq.s32.totalorder %s27, 1
      %p276 = por %p274, %p275
      %p277 = scmp.ne.s32.totalorder %s268, %s269
      %p278 = scmp.eq.s32.totalorder %s27, 0
      %p279 = por %p277, %p278
      %p280 = scmp.ne.s32.totalorder %s268, %s269
      %p281 = scmp.eq.s32.totalorder %s28, 1
      %p282 = por %p280, %p281
      %p284 = scmp.ne.s32.totalorder %s269, %s283
      %p285 = scmp.eq.s32.totalorder %s28, 0
      %p286 = por %p284, %p285
      %s288 = sadd.s32 %s287, 1
      %p291 = scmp.eq.s32.totalorder %s22, 1
      %p292 = scmp.ne.s32.totalorder %s287, %s289
      %p293 = scmp.eq.s32.totalorder %s22, 0
      %p294 = por %p292, %p293
      %p295 = scmp.ne.s32.totalorder %s287, %s289
      %p296 = scmp.eq.s32.totalorder %s27, 1
      %p297 = por %p295, %p296
      %p298 = scmp.ne.s32.totalorder %s289, %s290
      %p299 = scmp.eq.s32.totalorder %s27, 0
      %p300 = por %p298, %p299
      %p301 = scmp.ne.s32.totalorder %s289, %s290
      %p302 = scmp.eq.s32.totalorder %s28, 1
      %p303 = por %p301, %p302
      %p305 = scmp.ne.s32.totalorder %s290, %s304
      %p306 = scmp.eq.s32.totalorder %s28, 0
      %p307 = por %p305, %p306
      %s308 = ssub.s32 %s22, %s29
      %p309 = scmp.eq.s32.totalorder %s308, 0
      %s311 = sadd.s32 %s310, 1
      %s312 = scalar_select %p309, %s310, %s311
      %p315 = pneg %p309
      %p316 = scmp.eq.s32.totalorder %s22, 1
      %p317 = por %p315, %p316
      %p318 = scmp.ne.s32.totalorder %s310, %s313
      %p319 = scmp.eq.s32.totalorder %s22, 0
      %p320 = por %p318, %p319
      %p321 = scmp.ne.s32.totalorder %s310, %s313
      %p322 = scmp.eq.s32.totalorder %s27, 1
      %p323 = por %p321, %p322
      %p324 = scmp.ne.s32.totalorder %s313, %s314
      %p325 = scmp.eq.s32.totalorder %s27, 0
      %p326 = por %p324, %p325
      %p327 = scmp.ne.s32.totalorder %s313, %s314
      %p328 = scmp.eq.s32.totalorder %s28, 1
      %p329 = por %p327, %p328
      %p331 = scmp.ne.s32.totalorder %s314, %s330
      %p332 = scmp.eq.s32.totalorder %s28, 0
      %p333 = por %p331, %p332
      %p334 = scmp.le.s32.totalorder 1, %s22
      %p335 = scmp.lt.s32.totalorder %s22, 3
      %p336 = pnand %p334, %p335
      %p337 = pneg %p336
      // Predicated region
      $region9: #{tpu_custom_call.1} parent=5 // pred_check
        _
      $region10: #{tpu_custom_call.1} parent=5 // pred_check_branch
        %339 = sbr.rel (%p336) target = $region12
      $region11: #{tpu_custom_call.1} parent=5 // pred_region
        %s340 = ssub.s32 %s22, 1
        // Predicated region
        $region13: #{tpu_custom_call.1} parent=11 // pred_check
          %p341 = pneg %p69
        $region14: #{tpu_custom_call.1} parent=11 // pred_check_branch
          %343 = sbr.rel (%p341) target = $region16
        $region15: #{tpu_custom_call.1} parent=11 // pred_region
          _
        $region16: #{tpu_custom_call.1} parent=11 // pred_fallthru
          _
        // Predicated region
        $region17: #{tpu_custom_call.1} parent=11 // pred_check
          %p344 = pneg %p90
        $region18: #{tpu_custom_call.1} parent=11 // pred_check_branch
          %346 = sbr.rel (%p344) target = $region20
        $region19: #{tpu_custom_call.1} parent=11 // pred_region
          _
        $region20: #{tpu_custom_call.1} parent=11 // pred_fallthru
          _
        // Predicated region
        $region21: #{tpu_custom_call.1} parent=11 // pred_check
          %p347 = pneg %p111
        $region22: #{tpu_custom_call.1} parent=11 // pred_check_branch
          %349 = sbr.rel (%p347) target = $region24
        $region23: #{tpu_custom_call.1} parent=11 // pred_region
          _
        $region24: #{tpu_custom_call.1} parent=11 // pred_fallthru
          _
        // Predicated region
        $region25: #{tpu_custom_call.1} parent=11 // pred_check
          %p350 = pneg %p132
        $region26: #{tpu_custom_call.1} parent=11 // pred_check_branch
          %352 = sbr.rel (%p350) target = $region28
        $region27: #{tpu_custom_call.1} parent=11 // pred_region
          _
        $region28: #{tpu_custom_call.1} parent=11 // pred_fallthru
          _
        // Predicated region
        $region29: #{tpu_custom_call.1} parent=11 // pred_check
          %p353 = pneg %p153
        $region30: #{tpu_custom_call.1} parent=11 // pred_check_branch
          %355 = sbr.rel (%p353) target = $region32
        $region31: #{tpu_custom_call.1} parent=11 // pred_region
          _
        $region32: #{tpu_custom_call.1} parent=11 // pred_fallthru
          _
        // Predicated region
        $region33: #{tpu_custom_call.1} parent=11 // pred_check
          %p356 = pneg %p174
        $region34: #{tpu_custom_call.1} parent=11 // pred_check_branch
          %358 = sbr.rel (%p356) target = $region36
        $region35: #{tpu_custom_call.1} parent=11 // pred_region
          _
        $region36: #{tpu_custom_call.1} parent=11 // pred_fallthru
          _
        // Predicated region
        $region37: #{tpu_custom_call.1} parent=11 // pred_check
          %p359 = pneg %p195
        $region38: #{tpu_custom_call.1} parent=11 // pred_check_branch
          %361 = sbr.rel (%p359) target = $region40
        $region39: #{tpu_custom_call.1} parent=11 // pred_region
          _
        $region40: #{tpu_custom_call.1} parent=11 // pred_fallthru
          _
        // Predicated region
        $region41: #{tpu_custom_call.1} parent=11 // pred_check
          %p362 = pneg %p216
        $region42: #{tpu_custom_call.1} parent=11 // pred_check_branch
          %364 = sbr.rel (%p362) target = $region44
        $region43: #{tpu_custom_call.1} parent=11 // pred_region
          _
        $region44: #{tpu_custom_call.1} parent=11 // pred_fallthru
          _
        // Predicated region
        $region45: #{tpu_custom_call.1} parent=11 // pred_check
          %p365 = pneg %p237
        $region46: #{tpu_custom_call.1} parent=11 // pred_check_branch
          %367 = sbr.rel (%p365) target = $region48
        $region47: #{tpu_custom_call.1} parent=11 // pred_region
          _
        $region48: #{tpu_custom_call.1} parent=11 // pred_fallthru
          _
        // Predicated region
        $region49: #{tpu_custom_call.1} parent=11 // pred_check
          %p368 = pneg %p258
        $region50: #{tpu_custom_call.1} parent=11 // pred_check_branch
          %370 = sbr.rel (%p368) target = $region52
        $region51: #{tpu_custom_call.1} parent=11 // pred_region
          _
        $region52: #{tpu_custom_call.1} parent=11 // pred_fallthru
          _
        // Predicated region
        $region53: #{tpu_custom_call.1} parent=11 // pred_check
          %p371 = pneg %p279
        $region54: #{tpu_custom_call.1} parent=11 // pred_check_branch
          %373 = sbr.rel (%p371) target = $region56
        $region55: #{tpu_custom_call.1} parent=11 // pred_region
          _
        $region56: #{tpu_custom_call.1} parent=11 // pred_fallthru
          _
        // Predicated region
        $region57: #{tpu_custom_call.1} parent=11 // pred_check
          %p374 = pneg %p300
        $region58: #{tpu_custom_call.1} parent=11 // pred_check_branch
          %376 = sbr.rel (%p374) target = $region60
        $region59: #{tpu_custom_call.1} parent=11 // pred_region
          _
        $region60: #{tpu_custom_call.1} parent=11 // pred_fallthru
          _
      $region12: #{tpu_custom_call.1} parent=5 // pred_fallthru
        _
      %p377 = scmp.lt.s32.totalorder %s22, 2
      // Predicated region
      $region61: #{tpu_custom_call.1} parent=5 // pred_check
        %p378 = pneg %p377
      $region62: #{tpu_custom_call.1} parent=5 // pred_check_branch
        %380 = sbr.rel (%p378) target = $region64
      $region63: #{tpu_custom_call.1} parent=5 // pred_region
        // Predicated region
        $region65: #{tpu_custom_call.1} parent=63 // pred_check
          %p381 = pneg %p42
        $region66: #{tpu_custom_call.1} parent=63 // pred_check_branch
          %383 = sbr.rel (%p381) target = $region68
        $region67: #{tpu_custom_call.1} parent=63 // pred_region
          %s384 = smul.u32 2, %s22
          %p385 = scmp.lt.s32.totalorder %s384, 3
          %s386 = scalar_select %p385, %s384, 3
          %s387 = smul.addr %s386, 8
          %s388 = scalar_lea.vmem %s0, %s387
          %s389 = smul.u32 2, %s22
        $region68: #{tpu_custom_call.1} parent=63 // pred_fallthru
          _
      $region64: #{tpu_custom_call.1} parent=5 // pred_fallthru
        _
      %p390 = scmp.le.s32.totalorder 1, %s22
      %p391 = scmp.lt.s32.totalorder %s22, 3
      %p392 = pnand %p390, %p391
      %p393 = pneg %p392
      // Predicated region
      $region69: #{tpu_custom_call.1} parent=5 // pred_check
        _
      $region70: #{tpu_custom_call.1} parent=5 // pred_check_branch
        %395 = sbr.rel (%p392) target = $region72
      $region71: #{tpu_custom_call.1} parent=5 // pred_region
        %s396 = ssub.s32 %s22, 1
        %s397 = smul.u32 2, %s27
        %p398 = scmp.lt.s32.totalorder %s397, 3
        %s399 = scalar_select %p398, %s397, 3
        %s400 = smul.addr %s399, 8
        %s401 = scalar_lea.vmem %s0, %s400
        %p402 = pneg %p48
        %p403 = pneg %p45
        %p404 = pneg %p69
        %p405 = pneg %p66
        %p406 = pneg %p90
        %p407 = pneg %p87
        %p408 = pneg %p111
        %p409 = pneg %p108
        %p410 = pneg %p132
        %p411 = pneg %p129
        %p412 = pneg %p153
        %p413 = pneg %p150
        %p414 = pneg %p174
        %p415 = pneg %p171
        %p416 = pneg %p195
        %p417 = pneg %p192
        %p418 = pneg %p216
        %p419 = pneg %p213
        %p420 = pneg %p237
        %p421 = pneg %p234
        %p422 = pneg %p258
        %p423 = pneg %p255
        %p424 = pneg %p279
        %p425 = pneg %p276
        %p426 = pneg %p300
        %p427 = pneg %p297
        %p428 = pneg %p326
        %p429 = pneg %p323
        %s430 = sand.u32 %s313, 1
        %s431 = scalar_lea.sflag [#allocation4], %s430
        %s432 = sand.u32 %s313, 1
        %s433 = smul.addr %s432, 16
        %s434 = scalar_lea.vmem [#allocation3], %s433
        %s435 = smul.u32 2, %s27
        %p436 = scmp.lt.s32.totalorder %s435, 3
        %s437 = scalar_select %p436, %s435, 3
        %s438 = smul.addr %s437, 8
        %s439 = scalar_lea.vmem %s0, %s438
        %s440 = smul.u32 2, %s27
        %s441 = smul.u32 2, %s27
        %v443 = vld [vmem:[%s439] sm:$0xff]
        %v444 = vld [vmem:[%s439 + $0x8] sm:$0xff]
        %v445 = vld [vmem:[%s1] sm:$0x1]
        %v446 = vld [vmem:[%s2] sm:$0x1]
        %vm447 = vcmask 261120
        %v448 = vsel %vm447, %v443, 0.0
        %449 = vadd.xlane.f32.xlu0 %v448
        %v450 = vpop.xlane.xlu0 %449
        %v451 = vsel %vm447, %v444, 0.0
        %452 = vadd.xlane.f32.xlu0 %v451
        %v453 = vpop.xlane.xlu0 %452
        %v454 = vrcp.pop 32.0
        %v455 = vmul.f32 %v450, %v454
        %v456 = vmul.f32 %v453, %v454
        %v457 = vsub.f32 %v443, %v455
        %v458 = vsub.f32 %v444, %v456
        %v459 = vmul.f32 %v457, %v457
        %v460 = vmul.f32 %v458, %v458
        %v461 = vsel %vm447, %v459, 0.0
        %462 = vadd.xlane.f32.xlu0 %v461
        %v463 = vpop.xlane.xlu0 %462
        %v464 = vsel %vm447, %v460, 0.0
        %465 = vadd.xlane.f32.xlu0 %v464
        %v466 = vpop.xlane.xlu0 %465
        %v467 = vmul.f32 %v463, %v454
        %v468 = vmul.f32 %v466, %v454
        %v469 = vadd.f32 %v467, 1e-05
        %v470 = vadd.f32 %v468, 1e-05
        %v471 = vrsqrt.pop %v469
        %v472 = vrsqrt.pop %v470
        %v473 = vmul.f32 %v457, %v471
        %v474 = vmul.f32 %v458, %v472
        %v476 = vlaneseq
        %v477 = vshrl.u32 %v476, 7
        %v478 = vsub.s32 0, %v477
        %v479 = vrot.slane %v445, %v478
        %v481 = vmul.f32 %v473, %v479
        %v482 = vmul.f32 %v474, %v479
        %v484 = vlaneseq
        %v485 = vshrl.u32 %v484, 7
        %v486 = vsub.s32 0, %v485
        %v487 = vrot.slane %v446, %v486
        %v489 = vadd.f32 %v481, %v487
        %v490 = vadd.f32 %v482, %v487
        %v491 = vpack.c.bf16 %v490, %v489
        %v492 = vld [vmem:[%s3] sm:$0xf]
        %v493 = vld [vmem:[%s3 + $0x4] sm:$0xf]
        %v494 = vld [vmem:[%s3 + $0x8] sm:$0xf]
        %v495 = vld [vmem:[%s3 + $0xc] sm:$0xf]
        %v496 = vld [vmem:[%s4] sm:$0x1]
        %v498 = vlaneseq
        %v499 = vshrl.u32 %v498, 7
        %v500 = vsub.s32 0, %v499
        %v501 = vrot.slane %v496, %v500
        %v507 = vunpack.c.l.b16 %v492
        %v508 = vunpack.c.l.b16 %v493
        %v509 = vunpack.c.l.b16 %v494
        %v510 = vunpack.c.l.b16 %v495
        %v511 = vpack.c.b16 %v508, %v507
        %v512 = vpack.c.b16 %v510, %v509
        %v516 = vsel %vm447, %v491, 0
        %518 = vmatprep.subr.bf16.mxu0 0
        %519 = vmatpush1.bf16.msra.mxu0 %v511
        %520 = vmatprep.subr.bf16.mxu0 0
        %521 = vmatpush1.bf16.msra.mxu0 %v512
        %522 = vmatprep.subr.bf16.mxu0 0
        %523 = vmatpush1.bf16.msra.mxu0 0
        %524 = vmatprep.subr.bf16.mxu0 0
        %525 = vmatpush1.bf16.msra.mxu0 0
        %526 = vmatprep.subr.bf16.mxu0 0
        %527 = vmatpush1.bf16.msra.mxu0 0
        %528 = vmatprep.subr.bf16.mxu0 0
        %529 = vmatpush1.bf16.msra.mxu0 0
        %530 = vmatprep.subr.bf16.mxu0 0
        %531 = vmatpush1.bf16.msra.mxu0 0
        %532 = vmatprep.subr.bf16.mxu0 0
        %533 = vmatpush1.bf16.msra.mxu0 0
        %534 = vmatprep.subr.bf16.mxu0 0
        %535 = vmatpush1.bf16.msra.mxu0 0
        %536 = vmatprep.subr.bf16.mxu0 0
        %537 = vmatpush1.bf16.msra.mxu0 0
        %538 = vmatprep.subr.bf16.mxu0 0
        %539 = vmatpush1.bf16.msra.mxu0 0
        %540 = vmatprep.subr.bf16.mxu0 0
        %541 = vmatpush1.bf16.msra.mxu0 0
        %542 = vmatprep.subr.bf16.mxu0 0
        %543 = vmatpush1.bf16.msra.mxu0 0
        %544 = vmatprep.subr.bf16.mxu0 0
        %545 = vmatpush1.bf16.msra.mxu0 0
        %546 = vmatprep.subr.bf16.mxu0 0
        %547 = vmatpush1.bf16.msra.mxu0 0
        %548 = vmatprep.subr.bf16.mxu0 0
        %549 = vmatpush1.bf16.msra.mxu0 0
        %550 = vmatprep.mubr.bf16.mxu0 0
        %551 = vmatmul.mubr.bf16.gmra.mrb[0].mxu0 %v516
        %v552 = vpop.f32.mrb[0].mxu0
        %v553 = vadd.f32 %v501, %v552
        %v554 = vpop.f32.mrb[0].mxu0
        %v555 = vpop.f32.mrb[0].mxu0
        %v556 = vadd.f32 %v501, %v555
        %v557 = vpop.f32.mrb[0].mxu0
        %558 = vdwg.mxu0
        %v559 = vpack.c.bf16 %v553, %v553
        %v560 = vpack.c.bf16 %v556, %v556
        %562 = vrot.lane.b32.xlu0 %v559, 96
        %v563 = vpop.permute.xlu0 %562
        %vm564 = vcmask 64512
        %v566 = vsel %vm564, %v559, 0
        %v569 = vsel %vm564, %v563, 0
        %571 = vmatprep.subr.bf16.mxu0 0
        %572 = vmatpush1.bf16.xpose.msra.mxu0 %v569
        %573 = vmatprep.subr.bf16.mxu0 0
        %574 = vmatpush1.bf16.xpose.msra.mxu0 0
        %575 = vmatprep.subr.bf16.mxu0 0
        %576 = vmatpush1.bf16.xpose.msra.mxu0 0
        %577 = vmatprep.subr.bf16.mxu0 0
        %578 = vmatpush1.bf16.xpose.msra.mxu0 0
        %579 = vmatprep.subr.bf16.mxu0 0
        %580 = vmatpush1.bf16.xpose.msra.mxu0 0
        %581 = vmatprep.subr.bf16.mxu0 0
        %582 = vmatpush1.bf16.xpose.msra.mxu0 0
        %583 = vmatprep.subr.bf16.mxu0 0
        %584 = vmatpush1.bf16.xpose.msra.mxu0 0
        %585 = vmatprep.subr.bf16.mxu0 0
        %586 = vmatpush1.bf16.xpose.msra.mxu0 0
        %587 = vmatprep.subr.bf16.mxu0 0
        %588 = vmatpush1.bf16.xpose.msra.mxu0 0
        %589 = vmatprep.subr.bf16.mxu0 0
        %590 = vmatpush1.bf16.xpose.msra.mxu0 0
        %591 = vmatprep.subr.bf16.mxu0 0
        %592 = vmatpush1.bf16.xpose.msra.mxu0 0
        %593 = vmatprep.subr.bf16.mxu0 0
        %594 = vmatpush1.bf16.xpose.msra.mxu0 0
        %595 = vmatprep.subr.bf16.mxu0 0
        %596 = vmatpush1.bf16.xpose.msra.mxu0 0
        %597 = vmatprep.subr.bf16.mxu0 0
        %598 = vmatpush1.bf16.xpose.msra.mxu0 0
        %599 = vmatprep.subr.bf16.mxu0 0
        %600 = vmatpush1.bf16.xpose.msra.mxu0 0
        %601 = vmatprep.subr.bf16.mxu0 0
        %602 = vmatpush1.bf16.xpose.msra.mxu0 0
        %603 = vmatprep.mubr.bf16.mxu0 0
        %604 = vmatmul.mubr.bf16.gmra.mrb[0].mxu0 %v566
        %v605 = vpop.f32.mrb[0].mxu0
        %v606 = vadd.f32 0.0, %v605
        %v607 = vpop.f32.mrb[0].mxu0
        %v608 = vpop.f32.mrb[0].mxu0
        %v609 = vpop.f32.mrb[0].mxu0
        %610 = vdwg.mxu0
        %612 = vrot.lane.b32.xlu0 %v560, 96
        %v613 = vpop.permute.xlu0 %612
        %v615 = vsel %vm564, %v560, 0
        %v618 = vsel %vm564, %v613, 0
        %620 = vmatprep.subr.bf16.mxu0 0
        %621 = vmatpush1.bf16.xpose.msra.mxu0 %v618
        %622 = vmatprep.subr.bf16.mxu0 0
        %623 = vmatpush1.bf16.xpose.msra.mxu0 0
        %624 = vmatprep.subr.bf16.mxu0 0
        %625 = vmatpush1.bf16.xpose.msra.mxu0 0
        %626 = vmatprep.subr.bf16.mxu0 0
        %627 = vmatpush1.bf16.xpose.msra.mxu0 0
        %628 = vmatprep.subr.bf16.mxu0 0
        %629 = vmatpush1.bf16.xpose.msra.mxu0 0
        %630 = vmatprep.subr.bf16.mxu0 0
        %631 = vmatpush1.bf16.xpose.msra.mxu0 0
        %632 = vmatprep.subr.bf16.mxu0 0
        %633 = vmatpush1.bf16.xpose.msra.mxu0 0
        %634 = vmatprep.subr.bf16.mxu0 0
        %635 = vmatpush1.bf16.xpose.msra.mxu0 0
        %636 = vmatprep.subr.bf16.mxu0 0
        %637 = vmatpush1.bf16.xpose.msra.mxu0 0
        %638 = vmatprep.subr.bf16.mxu0 0
        %639 = vmatpush1.bf16.xpose.msra.mxu0 0
        %640 = vmatprep.subr.bf16.mxu0 0
        %641 = vmatpush1.bf16.xpose.msra.mxu0 0
        %642 = vmatprep.subr.bf16.mxu0 0
        %643 = vmatpush1.bf16.xpose.msra.mxu0 0
        %644 = vmatprep.subr.bf16.mxu0 0
        %645 = vmatpush1.bf16.xpose.msra.mxu0 0
        %646 = vmatprep.subr.bf16.mxu0 0
        %647 = vmatpush1.bf16.xpose.msra.mxu0 0
        %648 = vmatprep.subr.bf16.mxu0 0
        %649 = vmatpush1.bf16.xpose.msra.mxu0 0
        %650 = vmatprep.subr.bf16.mxu0 0
        %651 = vmatpush1.bf16.xpose.msra.mxu0 0
        %652 = vmatprep.mubr.bf16.mxu0 0
        %653 = vmatmul.mubr.bf16.gmra.mrb[0].mxu0 %v615
        %v654 = vpop.f32.mrb[0].mxu0
        %v655 = vadd.f32 0.0, %v654
        %v656 = vpop.f32.mrb[0].mxu0
        %v657 = vpop.f32.mrb[0].mxu0
        %v658 = vpop.f32.mrb[0].mxu0
        %659 = vdwg.mxu0
        %v660 = vmul.f32 %v606, 0.35355338
        %v661 = vmul.f32 %v655, 0.35355338
        %v662 = vsel %vm564, %v660, -inf
        %663 = vmax.xlane.f32.xlu0 %v662
        %v664 = vpop.xlane.xlu0 %663
        %v665 = vsel %vm564, %v661, -inf
        %666 = vmax.xlane.f32.xlu0 %v665
        %v667 = vpop.xlane.xlu0 %666
        %v668 = vsub.f32 %v660, %v664
        %v669 = vsub.f32 %v661, %v667
        %v670 = vmul.f32 %v668, 1.442695
        %v671 = vpow.pop %v670
        %v672 = vmul.f32 %v669, 1.442695
        %v673 = vpow.pop %v672
        %v674 = vsel %vm564, %v671, 0.0
        %675 = vadd.xlane.f32.xlu0 %v674
        %v676 = vpop.xlane.xlu0 %675
        %v677 = vsel %vm564, %v673, 0.0
        %678 = vadd.xlane.f32.xlu0 %v677
        %v679 = vpop.xlane.xlu0 %678
        %v680 = vrcp.pop %v676
        %v681 = vrcp.pop %v679
        %v682 = vmul.f32 %v671, %v680
        %v683 = vmul.f32 %v673, %v681
        %v684 = vpack.c.bf16 %v682, %v682
        %v685 = vpack.c.bf16 %v683, %v683
        %686 = vrot.lane.b32.xlu0 %v559, 64
        %v687 = vpop.permute.xlu0 %686
        %v689 = vsel %vm564, %v684, 0
        %vm691 = vcmask 1043456
        %v693 = vsel %vm691, %v687, 0
        %695 = vmatprep.subr.bf16.mxu0 0
        %696 = vmatpush1.bf16.msra.mxu0 %v693
        %697 = vmatprep.subr.bf16.mxu0 0
        %698 = vmatpush1.bf16.msra.mxu0 0
        %699 = vmatprep.subr.bf16.mxu0 0
        %700 = vmatpush1.bf16.msra.mxu0 0
        %701 = vmatprep.subr.bf16.mxu0 0
        %702 = vmatpush1.bf16.msra.mxu0 0
        %703 = vmatprep.subr.bf16.mxu0 0
        %704 = vmatpush1.bf16.msra.mxu0 0
        %705 = vmatprep.subr.bf16.mxu0 0
        %706 = vmatpush1.bf16.msra.mxu0 0
        %707 = vmatprep.subr.bf16.mxu0 0
        %708 = vmatpush1.bf16.msra.mxu0 0
        %709 = vmatprep.subr.bf16.mxu0 0
        %710 = vmatpush1.bf16.msra.mxu0 0
        %711 = vmatprep.subr.bf16.mxu0 0
        %712 = vmatpush1.bf16.msra.mxu0 0
        %713 = vmatprep.subr.bf16.mxu0 0
        %714 = vmatpush1.bf16.msra.mxu0 0
        %715 = vmatprep.subr.bf16.mxu0 0
        %716 = vmatpush1.bf16.msra.mxu0 0
        %717 = vmatprep.subr.bf16.mxu0 0
        %718 = vmatpush1.bf16.msra.mxu0 0
        %719 = vmatprep.subr.bf16.mxu0 0
        %720 = vmatpush1.bf16.msra.mxu0 0
        %721 = vmatprep.subr.bf16.mxu0 0
        %722 = vmatpush1.bf16.msra.mxu0 0
        %723 = vmatprep.subr.bf16.mxu0 0
        %724 = vmatpush1.bf16.msra.mxu0 0
        %725 = vmatprep.subr.bf16.mxu0 0
        %726 = vmatpush1.bf16.msra.mxu0 0
        %727 = vmatprep.mubr.bf16.mxu0 0
        %728 = vmatmul.mubr.bf16.gmra.mrb[0].mxu0 %v689
        %v729 = vpop.f32.mrb[0].mxu0
        %v730 = vadd.f32 0.0, %v729
        %v731 = vpop.f32.mrb[0].mxu0
        %v732 = vpop.f32.mrb[0].mxu0
        %v733 = vpop.f32.mrb[0].mxu0
        %734 = vdwg.mxu0
        %735 = vrot.lane.b32.xlu0 %v560, 64
        %v736 = vpop.permute.xlu0 %735
        %v738 = vsel %vm564, %v685, 0
        %v741 = vsel %vm691, %v736, 0
        %743 = vmatprep.subr.bf16.mxu0 0
        %744 = vmatpush1.bf16.msra.mxu0 %v741
        %745 = vmatprep.subr.bf16.mxu0 0
        %746 = vmatpush1.bf16.msra.mxu0 0
        %747 = vmatprep.subr.bf16.mxu0 0
        %748 = vmatpush1.bf16.msra.mxu0 0
        %749 = vmatprep.subr.bf16.mxu0 0
        %750 = vmatpush1.bf16.msra.mxu0 0
        %751 = vmatprep.subr.bf16.mxu0 0
        %752 = vmatpush1.bf16.msra.mxu0 0
        %753 = vmatprep.subr.bf16.mxu0 0
        %754 = vmatpush1.bf16.msra.mxu0 0
        %755 = vmatprep.subr.bf16.mxu0 0
        %756 = vmatpush1.bf16.msra.mxu0 0
        %757 = vmatprep.subr.bf16.mxu0 0
        %758 = vmatpush1.bf16.msra.mxu0 0
        %759 = vmatprep.subr.bf16.mxu0 0
        %760 = vmatpush1.bf16.msra.mxu0 0
        %761 = vmatprep.subr.bf16.mxu0 0
        %762 = vmatpush1.bf16.msra.mxu0 0
        %763 = vmatprep.subr.bf16.mxu0 0
        %764 = vmatpush1.bf16.msra.mxu0 0
        %765 = vmatprep.subr.bf16.mxu0 0
        %766 = vmatpush1.bf16.msra.mxu0 0
        %767 = vmatprep.subr.bf16.mxu0 0
        %768 = vmatpush1.bf16.msra.mxu0 0
        %769 = vmatprep.subr.bf16.mxu0 0
        %770 = vmatpush1.bf16.msra.mxu0 0
        %771 = vmatprep.subr.bf16.mxu0 0
        %772 = vmatpush1.bf16.msra.mxu0 0
        %773 = vmatprep.subr.bf16.mxu0 0
        %774 = vmatpush1.bf16.msra.mxu0 0
        %775 = vmatprep.mubr.bf16.mxu0 0
        %776 = vmatmul.mubr.bf16.gmra.mrb[0].mxu0 %v738
        %v777 = vpop.f32.mrb[0].mxu0
        %v778 = vadd.f32 0.0, %v777
        %v779 = vpop.f32.mrb[0].mxu0
        %v780 = vpop.f32.mrb[0].mxu0
        %v781 = vpop.f32.mrb[0].mxu0
        %782 = vdwg.mxu0
        %783 = vst.msk [vmem:[#allocation2] sm:$0xff] %vm564, %v730
        %784 = vst.msk [vmem:[#allocation2 + $0x8] sm:$0xff] %vm564, %v778
        %785 = vrot.lane.b32.xlu0 %v559, 120
        %v786 = vpop.permute.xlu0 %785
        %787 = vrot.lane.b32.xlu0 %v559, 88
        %v788 = vpop.permute.xlu0 %787
        %v790 = vsel %vm564, %v786, 0
        %v793 = vsel %vm564, %v788, 0
        %795 = vmatprep.subr.bf16.mxu0 0
        %796 = vmatpush1.bf16.xpose.msra.mxu0 %v793
        %797 = vmatprep.subr.bf16.mxu0 0
        %798 = vmatpush1.bf16.xpose.msra.mxu0 0
        %799 = vmatprep.subr.bf16.mxu0 0
        %800 = vmatpush1.bf16.xpose.msra.mxu0 0
        %801 = vmatprep.subr.bf16.mxu0 0
        %802 = vmatpush1.bf16.xpose.msra.mxu0 0
        %803 = vmatprep.subr.bf16.mxu0 0
        %804 = vmatpush1.bf16.xpose.msra.mxu0 0
        %805 = vmatprep.subr.bf16.mxu0 0
        %806 = vmatpush1.bf16.xpose.msra.mxu0 0
        %807 = vmatprep.subr.bf16.mxu0 0
        %808 = vmatpush1.bf16.xpose.msra.mxu0 0
        %809 = vmatprep.subr.bf16.mxu0 0
        %810 = vmatpush1.bf16.xpose.msra.mxu0 0
        %811 = vmatprep.subr.bf16.mxu0 0
        %812 = vmatpush1.bf16.xpose.msra.mxu0 0
        %813 = vmatprep.subr.bf16.mxu0 0
        %814 = vmatpush1.bf16.xpose.msra.mxu0 0
        %815 = vmatprep.subr.bf16.mxu0 0
        %816 = vmatpush1.bf16.xpose.msra.mxu0 0
        %817 = vmatprep.subr.bf16.mxu0 0
        %818 = vmatpush1.bf16.xpose.msra.mxu0 0
        %819 = vmatprep.subr.bf16.mxu0 0
        %820 = vmatpush1.bf16.xpose.msra.mxu0 0
        %821 = vmatprep.subr.bf16.mxu0 0
        %822 = vmatpush1.bf16.xpose.msra.mxu0 0
        %823 = vmatprep.subr.bf16.mxu0 0
        %824 = vmatpush1.bf16.xpose.msra.mxu0 0
        %825 = vmatprep.subr.bf16.mxu0 0
        %826 = vmatpush1.bf16.xpose.msra.mxu0 0
        %827 = vmatprep.mubr.bf16.mxu0 0
        %828 = vmatmul.mubr.bf16.gmra.mrb[0].mxu0 %v790
        %v829 = vpop.f32.mrb[0].mxu0
        %v830 = vadd.f32 0.0, %v829
        %v831 = vpop.f32.mrb[0].mxu0
        %v832 = vpop.f32.mrb[0].mxu0
        %v833 = vpop.f32.mrb[0].mxu0
        %834 = vdwg.mxu0
        %835 = vrot.lane.b32.xlu0 %v560, 120
        %v836 = vpop.permute.xlu0 %835
        %837 = vrot.lane.b32.xlu0 %v560, 88
        %v838 = vpop.permute.xlu0 %837
        %v840 = vsel %vm564, %v836, 0
        %v843 = vsel %vm564, %v838, 0
        %845 = vmatprep.subr.bf16.mxu0 0
        %846 = vmatpush1.bf16.xpose.msra.mxu0 %v843
        %847 = vmatprep.subr.bf16.mxu0 0
        %848 = vmatpush1.bf16.xpose.msra.mxu0 0
        %849 = vmatprep.subr.bf16.mxu0 0
        %850 = vmatpush1.bf16.xpose.msra.mxu0 0
        %851 = vmatprep.subr.bf16.mxu0 0
        %852 = vmatpush1.bf16.xpose.msra.mxu0 0
        %853 = vmatprep.subr.bf16.mxu0 0
        %854 = vmatpush1.bf16.xpose.msra.mxu0 0
        %855 = vmatprep.subr.bf16.mxu0 0
        %856 = vmatpush1.bf16.xpose.msra.mxu0 0
        %857 = vmatprep.subr.bf16.mxu0 0
        %858 = vmatpush1.bf16.xpose.msra.mxu0 0
        %859 = vmatprep.subr.bf16.mxu0 0
        %860 = vmatpush1.bf16.xpose.msra.mxu0 0
        %861 = vmatprep.subr.bf16.mxu0 0
        %862 = vmatpush1.bf16.xpose.msra.mxu0 0
        %863 = vmatprep.subr.bf16.mxu0 0
        %864 = vmatpush1.bf16.xpose.msra.mxu0 0
        %865 = vmatprep.subr.bf16.mxu0 0
        %866 = vmatpush1.bf16.xpose.msra.mxu0 0
        %867 = vmatprep.subr.bf16.mxu0 0
        %868 = vmatpush1.bf16.xpose.msra.mxu0 0
        %869 = vmatprep.subr.bf16.mxu0 0
        %870 = vmatpush1.bf16.xpose.msra.mxu0 0
        %871 = vmatprep.subr.bf16.mxu0 0
        %872 = vmatpush1.bf16.xpose.msra.mxu0 0
        %873 = vmatprep.subr.bf16.mxu0 0
        %874 = vmatpush1.bf16.xpose.msra.mxu0 0
        %875 = vmatprep.subr.bf16.mxu0 0
        %876 = vmatpush1.bf16.xpose.msra.mxu0 0
        %877 = vmatprep.mubr.bf16.mxu0 0
        %878 = vmatmul.mubr.bf16.gmra.mrb[0].mxu0 %v840
        %v879 = vpop.f32.mrb[0].mxu0
        %v880 = vadd.f32 0.0, %v879
        %v881 = vpop.f32.mrb[0].mxu0
        %v882 = vpop.f32.mrb[0].mxu0
        %v883 = vpop.f32.mrb[0].mxu0
        %884 = vdwg.mxu0
        %v885 = vmul.f32 %v830, 0.35355338
        %v886 = vmul.f32 %v880, 0.35355338
        %v887 = vsel %vm564, %v885, -inf
        %888 = vmax.xlane.f32.xlu0 %v887
        %v889 = vpop.xlane.xlu0 %888
        %v890 = vsel %vm564, %v886, -inf
        %891 = vmax.xlane.f32.xlu0 %v890
        %v892 = vpop.xlane.xlu0 %891
        %v893 = vsub.f32 %v885, %v889
        %v894 = vsub.f32 %v886, %v892
        %v895 = vmul.f32 %v893, 1.442695
        %v896 = vpow.pop %v895
        %v897 = vmul.f32 %v894, 1.442695
        %v898 = vpow.pop %v897
        %v899 = vsel %vm564, %v896, 0.0
        %900 = vadd.xlane.f32.xlu0 %v899
        %v901 = vpop.xlane.xlu0 %900
        %v902 = vsel %vm564, %v898, 0.0
        %903 = vadd.xlane.f32.xlu0 %v902
        %v904 = vpop.xlane.xlu0 %903
        %v905 = vrcp.pop %v901
        %v906 = vrcp.pop %v904
        %v907 = vmul.f32 %v896, %v905
        %v908 = vmul.f32 %v898, %v906
        %v909 = vpack.c.bf16 %v907, %v907
        %v910 = vpack.c.bf16 %v908, %v908
        %911 = vrot.lane.b32.xlu0 %v559, 56
        %v912 = vpop.permute.xlu0 %911
        %v914 = vsel %vm564, %v909, 0
        %v917 = vsel %vm691, %v912, 0
        %919 = vmatprep.subr.bf16.mxu0 0
        %920 = vmatpush1.bf16.msra.mxu0 %v917
        %921 = vmatprep.subr.bf16.mxu0 0
        %922 = vmatpush1.bf16.msra.mxu0 0
        %923 = vmatprep.subr.bf16.mxu0 0
        %924 = vmatpush1.bf16.msra.mxu0 0
        %925 = vmatprep.subr.bf16.mxu0 0
        %926 = vmatpush1.bf16.msra.mxu0 0
        %927 = vmatprep.subr.bf16.mxu0 0
        %928 = vmatpush1.bf16.msra.mxu0 0
        %929 = vmatprep.subr.bf16.mxu0 0
        %930 = vmatpush1.bf16.msra.mxu0 0
        %931 = vmatprep.subr.bf16.mxu0 0
        %932 = vmatpush1.bf16.msra.mxu0 0
        %933 = vmatprep.subr.bf16.mxu0 0
        %934 = vmatpush1.bf16.msra.mxu0 0
        %935 = vmatprep.subr.bf16.mxu0 0
        %936 = vmatpush1.bf16.msra.mxu0 0
        %937 = vmatprep.subr.bf16.mxu0 0
        %938 = vmatpush1.bf16.msra.mxu0 0
        %939 = vmatprep.subr.bf16.mxu0 0
        %940 = vmatpush1.bf16.msra.mxu0 0
        %941 = vmatprep.subr.bf16.mxu0 0
        %942 = vmatpush1.bf16.msra.mxu0 0
        %943 = vmatprep.subr.bf16.mxu0 0
        %944 = vmatpush1.bf16.msra.mxu0 0
        %945 = vmatprep.subr.bf16.mxu0 0
        %946 = vmatpush1.bf16.msra.mxu0 0
        %947 = vmatprep.subr.bf16.mxu0 0
        %948 = vmatpush1.bf16.msra.mxu0 0
        %949 = vmatprep.subr.bf16.mxu0 0
        %950 = vmatpush1.bf16.msra.mxu0 0
        %951 = vmatprep.mubr.bf16.mxu0 0
        %952 = vmatmul.mubr.bf16.gmra.mrb[0].mxu0 %v914
        %v953 = vpop.f32.mrb[0].mxu0
        %v954 = vadd.f32 0.0, %v953
        %v955 = vpop.f32.mrb[0].mxu0
        %v956 = vpop.f32.mrb[0].mxu0
        %v957 = vpop.f32.mrb[0].mxu0
        %958 = vdwg.mxu0
        %959 = vrot.lane.b32.xlu0 %v560, 56
        %v960 = vpop.permute.xlu0 %959
        %v962 = vsel %vm564, %v910, 0
        %v965 = vsel %vm691, %v960, 0
        %967 = vmatprep.subr.bf16.mxu0 0
        %968 = vmatpush1.bf16.msra.mxu0 %v965
        %969 = vmatprep.subr.bf16.mxu0 0
        %970 = vmatpush1.bf16.msra.mxu0 0
        %971 = vmatprep.subr.bf16.mxu0 0
        %972 = vmatpush1.bf16.msra.mxu0 0
        %973 = vmatprep.subr.bf16.mxu0 0
        %974 = vmatpush1.bf16.msra.mxu0 0
        %975 = vmatprep.subr.bf16.mxu0 0
        %976 = vmatpush1.bf16.msra.mxu0 0
        %977 = vmatprep.subr.bf16.mxu0 0
        %978 = vmatpush1.bf16.msra.mxu0 0
        %979 = vmatprep.subr.bf16.mxu0 0
        %980 = vmatpush1.bf16.msra.mxu0 0
        %981 = vmatprep.subr.bf16.mxu0 0
        %982 = vmatpush1.bf16.msra.mxu0 0
        %983 = vmatprep.subr.bf16.mxu0 0
        %984 = vmatpush1.bf16.msra.mxu0 0
        %985 = vmatprep.subr.bf16.mxu0 0
        %986 = vmatpush1.bf16.msra.mxu0 0
        %987 = vmatprep.subr.bf16.mxu0 0
        %988 = vmatpush1.bf16.msra.mxu0 0
        %989 = vmatprep.subr.bf16.mxu0 0
        %990 = vmatpush1.bf16.msra.mxu0 0
        %991 = vmatprep.subr.bf16.mxu0 0
        %992 = vmatpush1.bf16.msra.mxu0 0
        %993 = vmatprep.subr.bf16.mxu0 0
        %994 = vmatpush1.bf16.msra.mxu0 0
        %995 = vmatprep.subr.bf16.mxu0 0
        %996 = vmatpush1.bf16.msra.mxu0 0
        %997 = vmatprep.subr.bf16.mxu0 0
        %998 = vmatpush1.bf16.msra.mxu0 0
        %999 = vmatprep.mubr.bf16.mxu0 0
        %1000 = vmatmul.mubr.bf16.gmra.mrb[0].mxu0 %v962
        %v1001 = vpop.f32.mrb[0].mxu0
        %v1002 = vadd.f32 0.0, %v1001
        %v1003 = vpop.f32.mrb[0].mxu0
        %v1004 = vpop.f32.mrb[0].mxu0
        %v1005 = vpop.f32.mrb[0].mxu0
        %1006 = vdwg.mxu0
        %1009 = vrot.lane.b32.xlu0 %v954, 8
        %v1010 = vpop.permute.xlu0 %1009
        %1011 = vrot.lane.b32.xlu0 %v1002, 8
        %v1012 = vpop.permute.xlu0 %1011
        %vm1015 = vcmask 130112
        %1016 = vst.msk [vmem:[#allocation2] sm:$0xff] %vm1015, %v1010
        %1017 = vst.msk [vmem:[#allocation2 + $0x8] sm:$0xff] %vm1015, %v1012
        %1018 = vrot.lane.b32.xlu0 %v559, 112
        %v1019 = vpop.permute.xlu0 %1018
        %1020 = vrot.lane.b32.xlu0 %v559, 80
        %v1021 = vpop.permute.xlu0 %1020
        %v1023 = vsel %vm564, %v1019, 0
        %v1026 = vsel %vm564, %v1021, 0
        %1028 = vmatprep.subr.bf16.mxu0 0
        %1029 = vmatpush1.bf16.xpose.msra.mxu0 %v1026
        %1030 = vmatprep.subr.bf16.mxu0 0
        %1031 = vmatpush1.bf16.xpose.msra.mxu0 0
        %1032 = vmatprep.subr.bf16.mxu0 0
        %1033 = vmatpush1.bf16.xpose.msra.mxu0 0
        %1034 = vmatprep.subr.bf16.mxu0 0
        %1035 = vmatpush1.bf16.xpose.msra.mxu0 0
        %1036 = vmatprep.subr.bf16.mxu0 0
        %1037 = vmatpush1.bf16.xpose.msra.mxu0 0
        %1038 = vmatprep.subr.bf16.mxu0 0
        %1039 = vmatpush1.bf16.xpose.msra.mxu0 0
        %1040 = vmatprep.subr.bf16.mxu0 0
        %1041 = vmatpush1.bf16.xpose.msra.mxu0 0
        %1042 = vmatprep.subr.bf16.mxu0 0
        %1043 = vmatpush1.bf16.xpose.msra.mxu0 0
        %1044 = vmatprep.subr.bf16.mxu0 0
        %1045 = vmatpush1.bf16.xpose.msra.mxu0 0
        %1046 = vmatprep.subr.bf16.mxu0 0
        %1047 = vmatpush1.bf16.xpose.msra.mxu0 0
        %1048 = vmatprep.subr.bf16.mxu0 0
        %1049 = vmatpush1.bf16.xpose.msra.mxu0 0
        %1050 = vmatprep.subr.bf16.mxu0 0
        %1051 = vmatpush1.bf16.xpose.msra.mxu0 0
        %1052 = vmatprep.subr.bf16.mxu0 0
        %1053 = vmatpush1.bf16.xpose.msra.mxu0 0
        %1054 = vmatprep.subr.bf16.mxu0 0
        %1055 = vmatpush1.bf16.xpose.msra.mxu0 0
        %1056 = vmatprep.subr.bf16.mxu0 0
        %1057 = vmatpush1.bf16.xpose.msra.mxu0 0
        %1058 = vmatprep.subr.bf16.mxu0 0
        %1059 = vmatpush1.bf16.xpose.msra.mxu0 0
        %1060 = vmatprep.mubr.bf16.mxu0 0
        %1061 = vmatmul.mubr.bf16.gmra.mrb[0].mxu0 %v1023
        %v1062 = vpop.f32.mrb[0].mxu0
        %v1063 = vadd.f32 0.0, %v1062
        %v1064 = vpop.f32.mrb[0].mxu0
        %v1065 = vpop.f32.mrb[0].mxu0
        %v1066 = vpop.f32.mrb[0].mxu0
        %1067 = vdwg.mxu0
        %1068 = vrot.lane.b32.xlu0 %v560, 112
        %v1069 = vpop.permute.xlu0 %1068
        %1070 = vrot.lane.b32.xlu0 %v560, 80
        %v1071 = vpop.permute.xlu0 %1070
        %v1073 = vsel %vm564, %v1069, 0
        %v1076 = vsel %vm564, %v1071, 0
        %1078 = vmatprep.subr.bf16.mxu0 0
        %1079 = vmatpush1.bf16.xpose.msra.mxu0 %v1076
        %1080 = vmatprep.subr.bf16.mxu0 0
        %1081 = vmatpush1.bf16.xpose.msra.mxu0 0
        %1082 = vmatprep.subr.bf16.mxu0 0
        %1083 = vmatpush1.bf16.xpose.msra.mxu0 0
        %1084 = vmatprep.subr.bf16.mxu0 0
        %1085 = vmatpush1.bf16.xpose.msra.mxu0 0
        %1086 = vmatprep.subr.bf16.mxu0 0
        %1087 = vmatpush1.bf16.xpose.msra.mxu0 0
        %1088 = vmatprep.subr.bf16.mxu0 0
        %1089 = vmatpush1.bf16.xpose.msra.mxu0 0
        %1090 = vmatprep.subr.bf16.mxu0 0
        %1091 = vmatpush1.bf16.xpose.msra.mxu0 0
        %1092 = vmatprep.subr.bf16.mxu0 0
        %1093 = vmatpush1.bf16.xpose.msra.mxu0 0
        %1094 = vmatprep.subr.bf16.mxu0 0
        %1095 = vmatpush1.bf16.xpose.msra.mxu0 0
        %1096 = vmatprep.subr.bf16.mxu0 0
        %1097 = vmatpush1.bf16.xpose.msra.mxu0 0
        %1098 = vmatprep.subr.bf16.mxu0 0
        %1099 = vmatpush1.bf16.xpose.msra.mxu0 0
        %1100 = vmatprep.subr.bf16.mxu0 0
        %1101 = vmatpush1.bf16.xpose.msra.mxu0 0
        %1102 = vmatprep.subr.bf16.mxu0 0
        %1103 = vmatpush1.bf16.xpose.msra.mxu0 0
        %1104 = vmatprep.subr.bf16.mxu0 0
        %1105 = vmatpush1.bf16.xpose.msra.mxu0 0
        %1106 = vmatprep.subr.bf16.mxu0 0
        %1107 = vmatpush1.bf16.xpose.msra.mxu0 0
        %1108 = vmatprep.subr.bf16.mxu0 0
        %1109 = vmatpush1.bf16.xpose.msra.mxu0 0
        %1110 = vmatprep.mubr.bf16.mxu0 0
        %1111 = vmatmul.mubr.bf16.gmra.mrb[0].mxu0 %v1073
        %v1112 = vpop.f32.mrb[0].mxu0
        %v1113 = vadd.f32 0.0, %v1112
        %v1114 = vpop.f32.mrb[0].mxu0
        %v1115 = vpop.f32.mrb[0].mxu0
        %v1116 = vpop.f32.mrb[0].mxu0
        %1117 = vdwg.mxu0
        %v1118 = vmul.f32 %v1063, 0.35355338
        %v1119 = vmul.f32 %v1113, 0.35355338
        %v1120 = vsel %vm564, %v1118, -inf
        %1121 = vmax.xlane.f32.xlu0 %v1120
        %v1122 = vpop.xlane.xlu0 %1121
        %v1123 = vsel %vm564, %v1119, -inf
        %1124 = vmax.xlane.f32.xlu0 %v1123
        %v1125 = vpop.xlane.xlu0 %1124
        %v1126 = vsub.f32 %v1118, %v1122
        %v1127 = vsub.f32 %v1119, %v1125
        %v1128 = vmul.f32 %v1126, 1.442695
        %v1129 = vpow.pop %v1128
        %v1130 = vmul.f32 %v1127, 1.442695
        %v1131 = vpow.pop %v1130
        %v1132 = vsel %vm564, %v1129, 0.0
        %1133 = vadd.xlane.f32.xlu0 %v1132
        %v1134 = vpop.xlane.xlu0 %1133
        %v1135 = vsel %vm564, %v1131, 0.0
        %1136 = vadd.xlane.f32.xlu0 %v1135
        %v1137 = vpop.xlane.xlu0 %1136
        %v1138 = vrcp.pop %v1134
        %v1139 = vrcp.pop %v1137
        %v1140 = vmul.f32 %v1129, %v1138
        %v1141 = vmul.f32 %v1131, %v1139
        %v1142 = vpack.c.bf16 %v1140, %v1140
        %v1143 = vpack.c.bf16 %v1141, %v1141
        %1144 = vrot.lane.b32.xlu0 %v559, 48
        %v1145 = vpop.permute.xlu0 %1144
        %v1147 = vsel %vm564, %v1142, 0
        %v1150 = vsel %vm691, %v1145, 0
        %1152 = vmatprep.subr.bf16.mxu0 0
        %1153 = vmatpush1.bf16.msra.mxu0 %v1150
        %1154 = vmatprep.subr.bf16.mxu0 0
        %1155 = vmatpush1.bf16.msra.mxu0 0
        %1156 = vmatprep.subr.bf16.mxu0 0
        %1157 = vmatpush1.bf16.msra.mxu0 0
        %1158 = vmatprep.subr.bf16.mxu0 0
        %1159 = vmatpush1.bf16.msra.mxu0 0
        %1160 = vmatprep.subr.bf16.mxu0 0
        %1161 = vmatpush1.bf16.msra.mxu0 0
        %1162 = vmatprep.subr.bf16.mxu0 0
        %1163 = vmatpush1.bf16.msra.mxu0 0
        %1164 = vmatprep.subr.bf16.mxu0 0
        %1165 = vmatpush1.bf16.msra.mxu0 0
        %1166 = vmatprep.subr.bf16.mxu0 0
        %1167 = vmatpush1.bf16.msra.mxu0 0
        %1168 = vmatprep.subr.bf16.mxu0 0
        %1169 = vmatpush1.bf16.msra.mxu0 0
        %1170 = vmatprep.subr.bf16.mxu0 0
        %1171 = vmatpush1.bf16.msra.mxu0 0
        %1172 = vmatprep.subr.bf16.mxu0 0
        %1173 = vmatpush1.bf16.msra.mxu0 0
        %1174 = vmatprep.subr.bf16.mxu0 0
        %1175 = vmatpush1.bf16.msra.mxu0 0
        %1176 = vmatprep.subr.bf16.mxu0 0
        %1177 = vmatpush1.bf16.msra.mxu0 0
        %1178 = vmatprep.subr.bf16.mxu0 0
        %1179 = vmatpush1.bf16.msra.mxu0 0
        %1180 = vmatprep.subr.bf16.mxu0 0
        %1181 = vmatpush1.bf16.msra.mxu0 0
        %1182 = vmatprep.subr.bf16.mxu0 0
        %1183 = vmatpush1.bf16.msra.mxu0 0
        %1184 = vmatprep.mubr.bf16.mxu0 0
        %1185 = vmatmul.mubr.bf16.gmra.mrb[0].mxu0 %v1147
        %v1186 = vpop.f32.mrb[0].mxu0
        %v1187 = vadd.f32 0.0, %v1186
        %v1188 = vpop.f32.mrb[0].mxu0
        %v1189 = vpop.f32.mrb[0].mxu0
        %v1190 = vpop.f32.mrb[0].mxu0
        %1191 = vdwg.mxu0
        %1192 = vrot.lane.b32.xlu0 %v560, 48
        %v1193 = vpop.permute.xlu0 %1192
        %v1195 = vsel %vm564, %v1143, 0
        %v1198 = vsel %vm691, %v1193, 0
        %1200 = vmatprep.subr.bf16.mxu0 0
        %1201 = vmatpush1.bf16.msra.mxu0 %v1198
        %1202 = vmatprep.subr.bf16.mxu0 0
        %1203 = vmatpush1.bf16.msra.mxu0 0
        %1204 = vmatprep.subr.bf16.mxu0 0
        %1205 = vmatpush1.bf16.msra.mxu0 0
        %1206 = vmatprep.subr.bf16.mxu0 0
        %1207 = vmatpush1.bf16.msra.mxu0 0
        %1208 = vmatprep.subr.bf16.mxu0 0
        %1209 = vmatpush1.bf16.msra.mxu0 0
        %1210 = vmatprep.subr.bf16.mxu0 0
        %1211 = vmatpush1.bf16.msra.mxu0 0
        %1212 = vmatprep.subr.bf16.mxu0 0
        %1213 = vmatpush1.bf16.msra.mxu0 0
        %1214 = vmatprep.subr.bf16.mxu0 0
        %1215 = vmatpush1.bf16.msra.mxu0 0
        %1216 = vmatprep.subr.bf16.mxu0 0
        %1217 = vmatpush1.bf16.msra.mxu0 0
        %1218 = vmatprep.subr.bf16.mxu0 0
        %1219 = vmatpush1.bf16.msra.mxu0 0
        %1220 = vmatprep.subr.bf16.mxu0 0
        %1221 = vmatpush1.bf16.msra.mxu0 0
        %1222 = vmatprep.subr.bf16.mxu0 0
        %1223 = vmatpush1.bf16.msra.mxu0 0
        %1224 = vmatprep.subr.bf16.mxu0 0
        %1225 = vmatpush1.bf16.msra.mxu0 0
        %1226 = vmatprep.subr.bf16.mxu0 0
        %1227 = vmatpush1.bf16.msra.mxu0 0
        %1228 = vmatprep.subr.bf16.mxu0 0
        %1229 = vmatpush1.bf16.msra.mxu0 0
        %1230 = vmatprep.subr.bf16.mxu0 0
        %1231 = vmatpush1.bf16.msra.mxu0 0
        %1232 = vmatprep.mubr.bf16.mxu0 0
        %1233 = vmatmul.mubr.bf16.gmra.mrb[0].mxu0 %v1195
        %v1234 = vpop.f32.mrb[0].mxu0
        %v1235 = vadd.f32 0.0, %v1234
        %v1236 = vpop.f32.mrb[0].mxu0
        %v1237 = vpop.f32.mrb[0].mxu0
        %v1238 = vpop.f32.mrb[0].mxu0
        %1239 = vdwg.mxu0
        %1242 = vrot.lane.b32.xlu0 %v1187, 16
        %v1243 = vpop.permute.xlu0 %1242
        %1244 = vrot.lane.b32.xlu0 %v1235, 16
        %v1245 = vpop.permute.xlu0 %1244
        %vm1248 = vcmask 195712
        %1249 = vst.msk [vmem:[#allocation2] sm:$0xff] %vm1248, %v1243
        %1250 = vst.msk [vmem:[#allocation2 + $0x8] sm:$0xff] %vm1248, %v1245
        %1251 = vrot.lane.b32.xlu0 %v559, 104
        %v1252 = vpop.permute.xlu0 %1251
        %1253 = vrot.lane.b32.xlu0 %v559, 72
        %v1254 = vpop.permute.xlu0 %1253
        %v1256 = vsel %vm564, %v1252, 0
        %v1259 = vsel %vm564, %v1254, 0
        %1261 = vmatprep.subr.bf16.mxu0 0
        %1262 = vmatpush1.bf16.xpose.msra.mxu0 %v1259
        %1263 = vmatprep.subr.bf16.mxu0 0
        %1264 = vmatpush1.bf16.xpose.msra.mxu0 0
        %1265 = vmatprep.subr.bf16.mxu0 0
        %1266 = vmatpush1.bf16.xpose.msra.mxu0 0
        %1267 = vmatprep.subr.bf16.mxu0 0
        %1268 = vmatpush1.bf16.xpose.msra.mxu0 0
        %1269 = vmatprep.subr.bf16.mxu0 0
        %1270 = vmatpush1.bf16.xpose.msra.mxu0 0
        %1271 = vmatprep.subr.bf16.mxu0 0
        %1272 = vmatpush1.bf16.xpose.msra.mxu0 0
        %1273 = vmatprep.subr.bf16.mxu0 0
        %1274 = vmatpush1.bf16.xpose.msra.mxu0 0
        %1275 = vmatprep.subr.bf16.mxu0 0
        %1276 = vmatpush1.bf16.xpose.msra.mxu0 0
        %1277 = vmatprep.subr.bf16.mxu0 0
        %1278 = vmatpush1.bf16.xpose.msra.mxu0 0
        %1279 = vmatprep.subr.bf16.mxu0 0
        %1280 = vmatpush1.bf16.xpose.msra.mxu0 0
        %1281 = vmatprep.subr.bf16.mxu0 0
        %1282 = vmatpush1.bf16.xpose.msra.mxu0 0
        %1283 = vmatprep.subr.bf16.mxu0 0
        %1284 = vmatpush1.bf16.xpose.msra.mxu0 0
        %1285 = vmatprep.subr.bf16.mxu0 0
        %1286 = vmatpush1.bf16.xpose.msra.mxu0 0
        %1287 = vmatprep.subr.bf16.mxu0 0
        %1288 = vmatpush1.bf16.xpose.msra.mxu0 0
        %1289 = vmatprep.subr.bf16.mxu0 0
        %1290 = vmatpush1.bf16.xpose.msra.mxu0 0
        %1291 = vmatprep.subr.bf16.mxu0 0
        %1292 = vmatpush1.bf16.xpose.msra.mxu0 0
        %1293 = vmatprep.mubr.bf16.mxu0 0
        %1294 = vmatmul.mubr.bf16.gmra.mrb[0].mxu0 %v1256
        %v1295 = vpop.f32.mrb[0].mxu0
        %v1296 = vadd.f32 0.0, %v1295
        %v1297 = vpop.f32.mrb[0].mxu0
        %v1298 = vpop.f32.mrb[0].mxu0
        %v1299 = vpop.f32.mrb[0].mxu0
        %1300 = vdwg.mxu0
        %1301 = vrot.lane.b32.xlu0 %v560, 104
        %v1302 = vpop.permute.xlu0 %1301
        %1303 = vrot.lane.b32.xlu0 %v560, 72
        %v1304 = vpop.permute.xlu0 %1303
        %v1306 = vsel %vm564, %v1302, 0
        %v1309 = vsel %vm564, %v1304, 0
        %1311 = vmatprep.subr.bf16.mxu0 0
        %1312 = vmatpush1.bf16.xpose.msra.mxu0 %v1309
        %1313 = vmatprep.subr.bf16.mxu0 0
        %1314 = vmatpush1.bf16.xpose.msra.mxu0 0
        %1315 = vmatprep.subr.bf16.mxu0 0
        %1316 = vmatpush1.bf16.xpose.msra.mxu0 0
        %1317 = vmatprep.subr.bf16.mxu0 0
        %1318 = vmatpush1.bf16.xpose.msra.mxu0 0
        %1319 = vmatprep.subr.bf16.mxu0 0
        %1320 = vmatpush1.bf16.xpose.msra.mxu0 0
        %1321 = vmatprep.subr.bf16.mxu0 0
        %1322 = vmatpush1.bf16.xpose.msra.mxu0 0
        %1323 = vmatprep.subr.bf16.mxu0 0
        %1324 = vmatpush1.bf16.xpose.msra.mxu0 0
        %1325 = vmatprep.subr.bf16.mxu0 0
        %1326 = vmatpush1.bf16.xpose.msra.mxu0 0
        %1327 = vmatprep.subr.bf16.mxu0 0
        %1328 = vmatpush1.bf16.xpose.msra.mxu0 0
        %1329 = vmatprep.subr.bf16.mxu0 0
        %1330 = vmatpush1.bf16.xpose.msra.mxu0 0
        %1331 = vmatprep.subr.bf16.mxu0 0
        %1332 = vmatpush1.bf16.xpose.msra.mxu0 0
        %1333 = vmatprep.subr.bf16.mxu0 0
        %1334 = vmatpush1.bf16.xpose.msra.mxu0 0
        %1335 = vmatprep.subr.bf16.mxu0 0
        %1336 = vmatpush1.bf16.xpose.msra.mxu0 0
        %1337 = vmatprep.subr.bf16.mxu0 0
        %1338 = vmatpush1.bf16.xpose.msra.mxu0 0
        %1339 = vmatprep.subr.bf16.mxu0 0
        %1340 = vmatpush1.bf16.xpose.msra.mxu0 0
        %1341 = vmatprep.subr.bf16.mxu0 0
        %1342 = vmatpush1.bf16.xpose.msra.mxu0 0
        %1343 = vmatprep.mubr.bf16.mxu0 0
        %1344 = vmatmul.mubr.bf16.gmra.mrb[0].mxu0 %v1306
        %v1345 = vpop.f32.mrb[0].mxu0
        %v1346 = vadd.f32 0.0, %v1345
        %v1347 = vpop.f32.mrb[0].mxu0
        %v1348 = vpop.f32.mrb[0].mxu0
        %v1349 = vpop.f32.mrb[0].mxu0
        %1350 = vdwg.mxu0
        %v1351 = vmul.f32 %v1296, 0.35355338
        %v1352 = vmul.f32 %v1346, 0.35355338
        %v1353 = vsel %vm564, %v1351, -inf
        %1354 = vmax.xlane.f32.xlu0 %v1353
        %v1355 = vpop.xlane.xlu0 %1354
        %v1356 = vsel %vm564, %v1352, -inf
        %1357 = vmax.xlane.f32.xlu0 %v1356
        %v1358 = vpop.xlane.xlu0 %1357
        %v1359 = vsub.f32 %v1351, %v1355
        %v1360 = vsub.f32 %v1352, %v1358
        %v1361 = vmul.f32 %v1359, 1.442695
        %v1362 = vpow.pop %v1361
        %v1363 = vmul.f32 %v1360, 1.442695
        %v1364 = vpow.pop %v1363
        %v1365 = vsel %vm564, %v1362, 0.0
        %1366 = vadd.xlane.f32.xlu0 %v1365
        %v1367 = vpop.xlane.xlu0 %1366
        %v1368 = vsel %vm564, %v1364, 0.0
        %1369 = vadd.xlane.f32.xlu0 %v1368
        %v1370 = vpop.xlane.xlu0 %1369
        %v1371 = vrcp.pop %v1367
        %v1372 = vrcp.pop %v1370
        %v1373 = vmul.f32 %v1362, %v1371
        %v1374 = vmul.f32 %v1364, %v1372
        %v1375 = vpack.c.bf16 %v1373, %v1373
        %v1376 = vpack.c.bf16 %v1374, %v1374
        %1377 = vrot.lane.b32.xlu0 %v559, 40
        %v1378 = vpop.permute.xlu0 %1377
        %v1380 = vsel %vm564, %v1375, 0
        %v1383 = vsel %vm691, %v1378, 0
        %1385 = vmatprep.subr.bf16.mxu0 0
        %1386 = vmatpush1.bf16.msra.mxu0 %v1383
        %1387 = vmatprep.subr.bf16.mxu0 0
        %1388 = vmatpush1.bf16.msra.mxu0 0
        %1389 = vmatprep.subr.bf16.mxu0 0
        %1390 = vmatpush1.bf16.msra.mxu0 0
        %1391 = vmatprep.subr.bf16.mxu0 0
        %1392 = vmatpush1.bf16.msra.mxu0 0
        %1393 = vmatprep.subr.bf16.mxu0 0
        %1394 = vmatpush1.bf16.msra.mxu0 0
        %1395 = vmatprep.subr.bf16.mxu0 0
        %1396 = vmatpush1.bf16.msra.mxu0 0
        %1397 = vmatprep.subr.bf16.mxu0 0
        %1398 = vmatpush1.bf16.msra.mxu0 0
        %1399 = vmatprep.subr.bf16.mxu0 0
        %1400 = vmatpush1.bf16.msra.mxu0 0
        %1401 = vmatprep.subr.bf16.mxu0 0
        %1402 = vmatpush1.bf16.msra.mxu0 0
        %1403 = vmatprep.subr.bf16.mxu0 0
        %1404 = vmatpush1.bf16.msra.mxu0 0
        %1405 = vmatprep.subr.bf16.mxu0 0
        %1406 = vmatpush1.bf16.msra.mxu0 0
        %1407 = vmatprep.subr.bf16.mxu0 0
        %1408 = vmatpush1.bf16.msra.mxu0 0
        %1409 = vmatprep.subr.bf16.mxu0 0
        %1410 = vmatpush1.bf16.msra.mxu0 0
        %1411 = vmatprep.subr.bf16.mxu0 0
        %1412 = vmatpush1.bf16.msra.mxu0 0
        %1413 = vmatprep.subr.bf16.mxu0 0
        %1414 = vmatpush1.bf16.msra.mxu0 0
        %1415 = vmatprep.subr.bf16.mxu0 0
        %1416 = vmatpush1.bf16.msra.mxu0 0
        %1417 = vmatprep.mubr.bf16.mxu0 0
        %1418 = vmatmul.mubr.bf16.gmra.mrb[0].mxu0 %v1380
        %v1419 = vpop.f32.mrb[0].mxu0
        %v1420 = vadd.f32 0.0, %v1419
        %v1421 = vpop.f32.mrb[0].mxu0
        %v1422 = vpop.f32.mrb[0].mxu0
        %v1423 = vpop.f32.mrb[0].mxu0
        %1424 = vdwg.mxu0
        %1425 = vrot.lane.b32.xlu0 %v560, 40
        %v1426 = vpop.permute.xlu0 %1425
        %v1428 = vsel %vm564, %v1376, 0
        %v1431 = vsel %vm691, %v1426, 0
        %1433 = vmatprep.subr.bf16.mxu0 0
        %1434 = vmatpush1.bf16.msra.mxu0 %v1431
        %1435 = vmatprep.subr.bf16.mxu0 0
        %1436 = vmatpush1.bf16.msra.mxu0 0
        %1437 = vmatprep.subr.bf16.mxu0 0
        %1438 = vmatpush1.bf16.msra.mxu0 0
        %1439 = vmatprep.subr.bf16.mxu0 0
        %1440 = vmatpush1.bf16.msra.mxu0 0
        %1441 = vmatprep.subr.bf16.mxu0 0
        %1442 = vmatpush1.bf16.msra.mxu0 0
        %1443 = vmatprep.subr.bf16.mxu0 0
        %1444 = vmatpush1.bf16.msra.mxu0 0
        %1445 = vmatprep.subr.bf16.mxu0 0
        %1446 = vmatpush1.bf16.msra.mxu0 0
        %1447 = vmatprep.subr.bf16.mxu0 0
        %1448 = vmatpush1.bf16.msra.mxu0 0
        %1449 = vmatprep.subr.bf16.mxu0 0
        %1450 = vmatpush1.bf16.msra.mxu0 0
        %1451 = vmatprep.subr.bf16.mxu0 0
        %1452 = vmatpush1.bf16.msra.mxu0 0
        %1453 = vmatprep.subr.bf16.mxu0 0
        %1454 = vmatpush1.bf16.msra.mxu0 0
        %1455 = vmatprep.subr.bf16.mxu0 0
        %1456 = vmatpush1.bf16.msra.mxu0 0
        %1457 = vmatprep.subr.bf16.mxu0 0
        %1458 = vmatpush1.bf16.msra.mxu0 0
        %1459 = vmatprep.subr.bf16.mxu0 0
        %1460 = vmatpush1.bf16.msra.mxu0 0
        %1461 = vmatprep.subr.bf16.mxu0 0
        %1462 = vmatpush1.bf16.msra.mxu0 0
        %1463 = vmatprep.subr.bf16.mxu0 0
        %1464 = vmatpush1.bf16.msra.mxu0 0
        %1465 = vmatprep.mubr.bf16.mxu0 0
        %1466 = vmatmul.mubr.bf16.gmra.mrb[0].mxu0 %v1428
        %v1467 = vpop.f32.mrb[0].mxu0
        %v1468 = vadd.f32 0.0, %v1467
        %v1469 = vpop.f32.mrb[0].mxu0
        %v1470 = vpop.f32.mrb[0].mxu0
        %v1471 = vpop.f32.mrb[0].mxu0
        %1472 = vdwg.mxu0
        %1475 = vrot.lane.b32.xlu0 %v1420, 24
        %v1476 = vpop.permute.xlu0 %1475
        %1477 = vrot.lane.b32.xlu0 %v1468, 24
        %v1478 = vpop.permute.xlu0 %1477
        %vm1481 = vcmask 261312
        %1482 = vst.msk [vmem:[#allocation2] sm:$0xff] %vm1481, %v1476
        %1483 = vst.msk [vmem:[#allocation2 + $0x8] sm:$0xff] %vm1481, %v1478
        %v1484 = vld [vmem:[#allocation2] sm:$0xff]
        %v1485 = vld [vmem:[#allocation2 + $0x8] sm:$0xff]
        %v1486 = vpack.c.bf16 %v1484, %v1484
        %v1487 = vpack.c.bf16 %v1485, %v1485
        %v1488 = vld [vmem:[%s5] sm:$0xf]
        %v1489 = vld [vmem:[%s5 + $0x4] sm:$0xf]
        %v1490 = vld [vmem:[%s5 + $0x8] sm:$0xf]
        %v1491 = vld [vmem:[%s5 + $0xc] sm:$0xf]
        %v1492 = vld [vmem:[%s6] sm:$0x1]
        %v1494 = vlaneseq
        %v1495 = vshrl.u32 %v1494, 7
        %v1496 = vsub.s32 0, %v1495
        %v1497 = vrot.slane %v1492, %v1496
        %v1501 = vunpack.c.l.b16 %v1486
        %v1502 = vunpack.c.l.b16 %v1487
        %v1503 = vpack.c.b16 %v1502, %v1501
        %v1508 = vunpack.c.l.b16 %v1488
        %v1509 = vunpack.c.l.b16 %v1489
        %v1510 = vunpack.c.l.b16 %v1490
        %v1511 = vunpack.c.l.b16 %v1491
        %v1512 = vpack.c.b16 %v1509, %v1508
        %v1513 = vpack.c.b16 %v1511, %v1510
        %v1517 = vsel %vm447, %v1503, 0
        %1519 = vmatprep.subr.bf16.mxu0 0
        %1520 = vmatpush1.bf16.msra.mxu0 %v1512
        %1521 = vmatprep.subr.bf16.mxu0 0
        %1522 = vmatpush1.bf16.msra.mxu0 %v1513
        %1523 = vmatprep.subr.bf16.mxu0 0
        %1524 = vmatpush1.bf16.msra.mxu0 0
        %1525 = vmatprep.subr.bf16.mxu0 0
        %1526 = vmatpush1.bf16.msra.mxu0 0
        %1527 = vmatprep.subr.bf16.mxu0 0
        %1528 = vmatpush1.bf16.msra.mxu0 0
        %1529 = vmatprep.subr.bf16.mxu0 0
        %1530 = vmatpush1.bf16.msra.mxu0 0
        %1531 = vmatprep.subr.bf16.mxu0 0
        %1532 = vmatpush1.bf16.msra.mxu0 0
        %1533 = vmatprep.subr.bf16.mxu0 0
        %1534 = vmatpush1.bf16.msra.mxu0 0
        %1535 = vmatprep.subr.bf16.mxu0 0
        %1536 = vmatpush1.bf16.msra.mxu0 0
        %1537 = vmatprep.subr.bf16.mxu0 0
        %1538 = vmatpush1.bf16.msra.mxu0 0
        %1539 = vmatprep.subr.bf16.mxu0 0
        %1540 = vmatpush1.bf16.msra.mxu0 0
        %1541 = vmatprep.subr.bf16.mxu0 0
        %1542 = vmatpush1.bf16.msra.mxu0 0
        %1543 = vmatprep.subr.bf16.mxu0 0
        %1544 = vmatpush1.bf16.msra.mxu0 0
        %1545 = vmatprep.subr.bf16.mxu0 0
        %1546 = vmatpush1.bf16.msra.mxu0 0
        %1547 = vmatprep.subr.bf16.mxu0 0
        %1548 = vmatpush1.bf16.msra.mxu0 0
        %1549 = vmatprep.subr.bf16.mxu0 0
        %1550 = vmatpush1.bf16.msra.mxu0 0
        %1551 = vmatprep.mubr.bf16.mxu0 0
        %1552 = vmatmul.mubr.bf16.gmra.mrb[0].mxu0 %v1517
        %v1553 = vpop.f32.mrb[0].mxu0
        %v1554 = vadd.f32 %v1497, %v1553
        %v1555 = vpop.f32.mrb[0].mxu0
        %v1556 = vpop.f32.mrb[0].mxu0
        %v1557 = vadd.f32 %v1497, %v1556
        %v1558 = vpop.f32.mrb[0].mxu0
        %1559 = vdwg.mxu0
        %v1560 = vadd.f32 %v443, %v1554
        %v1561 = vadd.f32 %v444, %v1557
        %v1562 = vld [vmem:[%s7] sm:$0x1]
        %v1563 = vld [vmem:[%s8] sm:$0x1]
        %v1564 = vsel %vm447, %v1560, 0.0
        %1565 = vadd.xlane.f32.xlu0 %v1564
        %v1566 = vpop.xlane.xlu0 %1565
        %v1567 = vsel %vm447, %v1561, 0.0
        %1568 = vadd.xlane.f32.xlu0 %v1567
        %v1569 = vpop.xlane.xlu0 %1568
        %v1570 = vmul.f32 %v1566, %v454
        %v1571 = vmul.f32 %v1569, %v454
        %v1572 = vsub.f32 %v1560, %v1570
        %v1573 = vsub.f32 %v1561, %v1571
        %v1574 = vmul.f32 %v1572, %v1572
        %v1575 = vmul.f32 %v1573, %v1573
        %v1576 = vsel %vm447, %v1574, 0.0
        %1577 = vadd.xlane.f32.xlu0 %v1576
        %v1578 = vpop.xlane.xlu0 %1577
        %v1579 = vsel %vm447, %v1575, 0.0
        %1580 = vadd.xlane.f32.xlu0 %v1579
        %v1581 = vpop.xlane.xlu0 %1580
        %v1582 = vmul.f32 %v1578, %v454
        %v1583 = vmul.f32 %v1581, %v454
        %v1584 = vadd.f32 %v1582, 1e-05
        %v1585 = vadd.f32 %v1583, 1e-05
        %v1586 = vrsqrt.pop %v1584
        %v1587 = vrsqrt.pop %v1585
        %v1588 = vmul.f32 %v1572, %v1586
        %v1589 = vmul.f32 %v1573, %v1587
        %v1591 = vlaneseq
        %v1592 = vshrl.u32 %v1591, 7
        %v1593 = vsub.s32 0, %v1592
        %v1594 = vrot.slane %v1562, %v1593
        %v1596 = vmul.f32 %v1588, %v1594
        %v1597 = vmul.f32 %v1589, %v1594
        %v1599 = vlaneseq
        %v1600 = vshrl.u32 %v1599, 7
        %v1601 = vsub.s32 0, %v1600
        %v1602 = vrot.slane %v1563, %v1601
        %v1604 = vadd.f32 %v1596, %v1602
        %v1605 = vadd.f32 %v1597, %v1602
        %v1606 = vpack.c.bf16 %v1605, %v1604
        %v1607 = vld [vmem:[%s9] sm:$0xf]
        %v1608 = vld [vmem:[%s9 + $0x4] sm:$0xf]
        %v1609 = vld [vmem:[%s9 + $0x8] sm:$0xf]
        %v1610 = vld [vmem:[%s9 + $0xc] sm:$0xf]
        %v1611 = vld [vmem:[%s10] sm:$0x1]
        %v1613 = vlaneseq
        %v1614 = vshrl.u32 %v1613, 7
        %v1615 = vsub.s32 0, %v1614
        %v1616 = vrot.slane %v1611, %v1615
        %v1622 = vunpack.c.l.b16 %v1607
        %v1623 = vunpack.c.l.b16 %v1608
        %v1624 = vunpack.c.l.b16 %v1609
        %v1625 = vunpack.c.l.b16 %v1610
        %v1626 = vpack.c.b16 %v1623, %v1622
        %v1627 = vpack.c.b16 %v1625, %v1624
        %v1631 = vsel %vm447, %v1606, 0
        %1633 = vmatprep.subr.bf16.mxu0 0
        %1634 = vmatpush1.bf16.msra.mxu0 %v1626
        %1635 = vmatprep.subr.bf16.mxu0 0
        %1636 = vmatpush1.bf16.msra.mxu0 %v1627
        %1637 = vmatprep.subr.bf16.mxu0 0
        %1638 = vmatpush1.bf16.msra.mxu0 0
        %1639 = vmatprep.subr.bf16.mxu0 0
        %1640 = vmatpush1.bf16.msra.mxu0 0
        %1641 = vmatprep.subr.bf16.mxu0 0
        %1642 = vmatpush1.bf16.msra.mxu0 0
        %1643 = vmatprep.subr.bf16.mxu0 0
        %1644 = vmatpush1.bf16.msra.mxu0 0
        %1645 = vmatprep.subr.bf16.mxu0 0
        %1646 = vmatpush1.bf16.msra.mxu0 0
        %1647 = vmatprep.subr.bf16.mxu0 0
        %1648 = vmatpush1.bf16.msra.mxu0 0
        %1649 = vmatprep.subr.bf16.mxu0 0
        %1650 = vmatpush1.bf16.msra.mxu0 0
        %1651 = vmatprep.subr.bf16.mxu0 0
        %1652 = vmatpush1.bf16.msra.mxu0 0
        %1653 = vmatprep.subr.bf16.mxu0 0
        %1654 = vmatpush1.bf16.msra.mxu0 0
        %1655 = vmatprep.subr.bf16.mxu0 0
        %1656 = vmatpush1.bf16.msra.mxu0 0
        %1657 = vmatprep.subr.bf16.mxu0 0
        %1658 = vmatpush1.bf16.msra.mxu0 0
        %1659 = vmatprep.subr.bf16.mxu0 0
        %1660 = vmatpush1.bf16.msra.mxu0 0
        %1661 = vmatprep.subr.bf16.mxu0 0
        %1662 = vmatpush1.bf16.msra.mxu0 0
        %1663 = vmatprep.subr.bf16.mxu0 0
        %1664 = vmatpush1.bf16.msra.mxu0 0
        %1665 = vmatprep.mubr.bf16.mxu0 0
        %1666 = vmatmul.mubr.bf16.gmra.mrb[0].mxu0 %v1631
        %v1667 = vpop.f32.mrb[0].mxu0
        %v1668 = vadd.f32 %v1616, %v1667
        %v1669 = vpop.f32.mrb[0].mxu0
        %v1670 = vpop.f32.mrb[0].mxu0
        %v1671 = vadd.f32 %v1616, %v1670
        %v1672 = vpop.f32.mrb[0].mxu0
        %1673 = vdwg.mxu0
        %v1674 = vmul.f32 %v1668, 0.5
        %v1675 = vmul.f32 %v1671, 0.5
        %v1676 = vmul.f32 %v1668, 0.70710677
        %v1677 = vmul.f32 %v1671, 0.70710677
        %v1678 = verf.f32.pop %v1676
        %v1679 = verf.f32.pop %v1677
        %v1680 = vadd.f32 %v1678, 1.0
        %v1681 = vadd.f32 %v1679, 1.0
        %v1682 = vmul.f32 %v1674, %v1680
        %v1683 = vmul.f32 %v1675, %v1681
        %v1684 = vpack.c.bf16 %v1683, %v1682
        %v1685 = vld [vmem:[%s11] sm:$0xf]
        %v1686 = vld [vmem:[%s11 + $0x4] sm:$0xf]
        %v1687 = vld [vmem:[%s11 + $0x8] sm:$0xf]
        %v1688 = vld [vmem:[%s11 + $0xc] sm:$0xf]
        %v1689 = vld [vmem:[%s11 + $0x10] sm:$0xf]
        %v1690 = vld [vmem:[%s11 + $0x14] sm:$0xf]
        %v1691 = vld [vmem:[%s11 + $0x18] sm:$0xf]
        %v1692 = vld [vmem:[%s11 + $0x1c] sm:$0xf]
        %v1693 = vld [vmem:[%s11 + $0x20] sm:$0xf]
        %v1694 = vld [vmem:[%s11 + $0x24] sm:$0xf]
        %v1695 = vld [vmem:[%s11 + $0x28] sm:$0xf]
        %v1696 = vld [vmem:[%s11 + $0x2c] sm:$0xf]
        %v1697 = vld [vmem:[%s11 + $0x30] sm:$0xf]
        %v1698 = vld [vmem:[%s11 + $0x34] sm:$0xf]
        %v1699 = vld [vmem:[%s11 + $0x38] sm:$0xf]
        %v1700 = vld [vmem:[%s11 + $0x3c] sm:$0xf]
        %v1701 = vld [vmem:[%s12] sm:$0x1]
        %v1703 = vlaneseq
        %v1704 = vshrl.u32 %v1703, 7
        %v1705 = vsub.s32 0, %v1704
        %v1706 = vrot.slane %v1701, %v1705
        %v1724 = vunpack.c.l.b16 %v1685
        %v1725 = vunpack.c.l.b16 %v1686
        %v1726 = vunpack.c.l.b16 %v1687
        %v1727 = vunpack.c.l.b16 %v1688
        %v1728 = vunpack.c.l.b16 %v1689
        %v1729 = vunpack.c.l.b16 %v1690
        %v1730 = vunpack.c.l.b16 %v1691
        %v1731 = vunpack.c.l.b16 %v1692
        %v1732 = vunpack.c.l.b16 %v1693
        %v1733 = vunpack.c.l.b16 %v1694
        %v1734 = vunpack.c.l.b16 %v1695
        %v1735 = vunpack.c.l.b16 %v1696
        %v1736 = vunpack.c.l.b16 %v1697
        %v1737 = vunpack.c.l.b16 %v1698
        %v1738 = vunpack.c.l.b16 %v1699
        %v1739 = vunpack.c.l.b16 %v1700
        %v1740 = vpack.c.b16 %v1725, %v1724
        %v1741 = vpack.c.b16 %v1727, %v1726
        %v1742 = vpack.c.b16 %v1729, %v1728
        %v1743 = vpack.c.b16 %v1731, %v1730
        %v1744 = vpack.c.b16 %v1733, %v1732
        %v1745 = vpack.c.b16 %v1735, %v1734
        %v1746 = vpack.c.b16 %v1737, %v1736
        %v1747 = vpack.c.b16 %v1739, %v1738
        %1756 = vmatprep.subr.bf16.mxu0 0
        %1757 = vmatpush1.bf16.msra.mxu0 %v1740
        %1758 = vmatprep.subr.bf16.mxu0 0
        %1759 = vmatpush1.bf16.msra.mxu0 %v1741
        %1760 = vmatprep.subr.bf16.mxu0 0
        %1761 = vmatpush1.bf16.msra.mxu0 %v1742
        %1762 = vmatprep.subr.bf16.mxu0 0
        %1763 = vmatpush1.bf16.msra.mxu0 %v1743
        %1764 = vmatprep.subr.bf16.mxu0 0
        %1765 = vmatpush1.bf16.msra.mxu0 %v1744
        %1766 = vmatprep.subr.bf16.mxu0 0
        %1767 = vmatpush1.bf16.msra.mxu0 %v1745
        %1768 = vmatprep.subr.bf16.mxu0 0
        %1769 = vmatpush1.bf16.msra.mxu0 %v1746
        %1770 = vmatprep.subr.bf16.mxu0 0
        %1771 = vmatpush1.bf16.msra.mxu0 %v1747
        %1772 = vmatprep.subr.bf16.mxu0 0
        %1773 = vmatpush1.bf16.msra.mxu0 0
        %1774 = vmatprep.subr.bf16.mxu0 0
        %1775 = vmatpush1.bf16.msra.mxu0 0
        %1776 = vmatprep.subr.bf16.mxu0 0
        %1777 = vmatpush1.bf16.msra.mxu0 0
        %1778 = vmatprep.subr.bf16.mxu0 0
        %1779 = vmatpush1.bf16.msra.mxu0 0
        %1780 = vmatprep.subr.bf16.mxu0 0
        %1781 = vmatpush1.bf16.msra.mxu0 0
        %1782 = vmatprep.subr.bf16.mxu0 0
        %1783 = vmatpush1.bf16.msra.mxu0 0
        %1784 = vmatprep.subr.bf16.mxu0 0
        %1785 = vmatpush1.bf16.msra.mxu0 0
        %1786 = vmatprep.subr.bf16.mxu0 0
        %1787 = vmatpush1.bf16.msra.mxu0 0
        %1788 = vmatprep.mubr.bf16.mxu0 0
        %1789 = vmatmul.mubr.bf16.gmra.mrb[0].mxu0 %v1684
        %v1790 = vpop.f32.mrb[0].mxu0
        %v1791 = vadd.f32 %v1706, %v1790
        %v1792 = vpop.f32.mrb[0].mxu0
        %v1793 = vpop.f32.mrb[0].mxu0
        %v1794 = vadd.f32 %v1706, %v1793
        %v1795 = vpop.f32.mrb[0].mxu0
        %1796 = vdwg.mxu0
        %v1797 = vadd.f32 %v1560, %v1791
        %v1798 = vadd.f32 %v1561, %v1794
        %1799 = vst.msk [vmem:[%s434] sm:$0xff] %vm447, %v1797
        %1800 = vst.msk [vmem:[%s434 + $0x8] sm:$0xff] %vm447, %v1798
        %s1801 = sand.u32 %s313, 1
        %s1802 = scalar_lea.sflag [#allocation4], %s1801
        %s1803 = sand.u32 %s313, 1
        %s1804 = smul.addr %s1803, 16
        %s1805 = scalar_lea.vmem [#allocation3], %s1804
        // Predicated region
        $region73: #{tpu_custom_call.1} parent=71 // pred_check
          %p1806 = pneg %p323
        $region74: #{tpu_custom_call.1} parent=71 // pred_check_branch
          %1808 = sbr.rel (%p1806) target = $region76
        $region75: #{tpu_custom_call.1} parent=71 // pred_region
          %s1809 = smul.u32 2, %s27
          %s1811 = ssub.s32 256, 256
          %1812 = vsyncadd %s1802, %s1811
          %s1813 = smul.addr %s1809, 128
          %s1814 = scalar_lea.hbm %s13, %s1813
          %s1815 = sshll.u32 %s1805, 4
          %s1816 = int_to_ptr.vmem [resolvable:$true] %s1815
          %1821 = dma.vmem_to_hbm [thread:$0]  %s1816, 256, %s1814, %s1802, 128, 128, 8
        $region76: #{tpu_custom_call.1} parent=71 // pred_fallthru
          _
      $region72: #{tpu_custom_call.1} parent=5 // pred_fallthru
        _
      %p1822 = scmp.le.s32.totalorder 2, %s22
      // Predicated region
      $region77: #{tpu_custom_call.1} parent=5 // pred_check
        %p1823 = pneg %p1822
      $region78: #{tpu_custom_call.1} parent=5 // pred_check_branch
        %1825 = sbr.rel (%p1823) target = $region80
      $region79: #{tpu_custom_call.1} parent=5 // pred_region
        %s1826 = ssub.s32 %s22, 2
        // Predicated region
        $region81: #{tpu_custom_call.1} parent=79 // pred_check
          %p1827 = pneg %p329
        $region82: #{tpu_custom_call.1} parent=79 // pred_check_branch
          %1829 = sbr.rel (%p1827) target = $region84
        $region83: #{tpu_custom_call.1} parent=79 // pred_region
          %s1830 = sand.u32 %s314, 1
          %s1831 = scalar_lea.sflag [#allocation4], %s1830
          %s1832 = sand.u32 %s314, 1
          %s1833 = smul.addr %s1832, 16
          %s1834 = scalar_lea.vmem [#allocation3], %s1833
          %1835 = dma.done %s1831, 256
        $region84: #{tpu_custom_call.1} parent=79 // pred_fallthru
          _
      $region80: #{tpu_custom_call.1} parent=5 // pred_fallthru
        _
    $region6: #{tpu_custom_call.1} parent=1 // loop_footer
      %s26 = sadd.s32 1, %s22
    $region7: #{tpu_custom_call.1} parent=1 // loop_footer_branch
      %21 = sbr.rel target = $region3
    $region8: #{tpu_custom_call.1} parent=1 // loop_exit
      _
    %1836 = vsyncpa [#allocation4], 1
    %s1837 = scalar_lea.sflag [#allocation4], 1
    %1838 = vsyncpa %s1837, 1

</llo_original>
